<compile_context>
chip_gen: v7x
topology: tpu7x:2x2x1
jax: 0.10.0
libtpu: 0.0.40
codegen_flags: <defaults>
</compile_context>

<pallas_src>
import functools
import math

import jax
import jax.numpy as jnp
from jax import lax
from jax.experimental import pallas as pl
from jax.experimental.pallas import tpu as pltpu

LN_EPS = 1e-5  # torch.nn.LayerNorm default


# --------------------------------------------------------------------------- #
# helpers
# --------------------------------------------------------------------------- #
def _layer_norm_f32(x_f32, gamma_f32, beta_f32, eps):
    mu = jnp.mean(x_f32, axis=-1, keepdims=True)
    xc = x_f32 - mu
    var = jnp.mean(xc * xc, axis=-1, keepdims=True)
    inv = lax.rsqrt(var + eps)
    return xc * inv * gamma_f32 + beta_f32


def _gelu_exact_f32(h_f32):
    # Exact (erf-based) GELU, matches nn.GELU() default.
    # NOTE(perf): on v6e/v7x this erf polynomial becomes the VALU hot spot once
    # the matmuls are bf16; a tanh-approx / bf16 GELU would be faster but would
    # change numerics vs nn.GELU(), so exact f32 erf is kept.
    return 0.5 * h_f32 * (1.0 + lax.erf(h_f32 * (1.0 / math.sqrt(2.0))))


def _vmem_cap_bytes():
    try:
        return int(pltpu.get_tpu_info().vmem_capacity_bytes)
    except Exception:
        return 64 << 20  # conservative: v7x per-TensorCore VMEM


def _vmem_limit(total_block_bytes):
    # double-buffering + headroom, capped below physical VMEM (0.75x:
    # ~48 MiB on v7x, ~96 MiB on v5e/v6e).
    cap = int(_vmem_cap_bytes() * 0.75)
    need = int(total_block_bytes * 2.5) + (2 << 20)
    return min(max(need, 32 << 20), cap)


def _pick_reduce_tile(h, preferred):
    """Tile for the MLP hidden (reduction) dim; must divide h exactly."""
    if h <= preferred:
        return h
    t = (preferred // 128) * 128
    while t >= 128:
        if h % t == 0:
            return t
        t -= 128
    return h


# --------------------------------------------------------------------------- #
# kernel 1: LayerNorm + Linear   (ln1 -> fused qkv projection)
# --------------------------------------------------------------------------- #
def ln_linear_kernel(x_ref, g_ref, b_ref, w_ref, bias_ref, o_ref, xn_ref, *, eps):
    # LN(x) computed once per row tile (n == 0), cached in matmul input dtype;
    # the output-column tiles (n axis, last, "arbitrary") reuse it.
    @pl.when(pl.program_id(1) == 0)
    def _():
        xn = _layer_norm_f32(
            x_ref[...].astype(jnp.float32),
            g_ref[...].astype(jnp.float32),
            b_ref[...].astype(jnp.float32),
            eps,
        )
        xn_ref[...] = xn.astype(xn_ref.dtype)

    y = jnp.dot(xn_ref[...], w_ref[...], preferred_element_type=jnp.float32)
    o_ref[...] = (y + bias_ref[...].astype(jnp.float32)).astype(o_ref.dtype)


def ln_linear(x2, gamma, beta, w, bias, *, eps=LN_EPS, tm=256, tn=512):
    M, E = x2.shape
    N = w.shape[1]
    tm = min(tm, M)
    tn = min(tn, N)
    grid = (pl.cdiv(M, tm), pl.cdiv(N, tn))
    bs = x2.dtype.itemsize
    block_bytes = (tm * E + 2 * E + E * tn + tn + tm * tn) * bs + tm * E * bs
    cost = pl.CostEstimate(
        flops=2 * M * E * N + 8 * M * E,
        transcendentals=M,
        bytes_accessed=(M * E + E * N + N + 2 * E + M * N) * bs,
    )
    return pl.pallas_call(
        functools.partial(ln_linear_kernel, eps=eps),
        out_shape=jax.ShapeDtypeStruct((M, N), x2.dtype),
        grid_spec=pltpu.PrefetchScalarGridSpec(
            num_scalar_prefetch=0,
            grid=grid,
            in_specs=[
                pl.BlockSpec((tm, E), lambda i, n: (i, 0)),   # x rows
                pl.BlockSpec((1, E), lambda i, n: (0, 0)),    # ln gamma
                pl.BlockSpec((1, E), lambda i, n: (0, 0)),    # ln beta
                pl.BlockSpec((E, tn), lambda i, n: (0, n)),   # W column tile
                pl.BlockSpec((1, tn), lambda i, n: (0, n)),   # bias tile
            ],
            out_specs=pl.BlockSpec((tm, tn), lambda i, n: (i, n)),
            scratch_shapes=[pltpu.VMEM((tm, E), x2.dtype)],   # LN(x) cache
        ),
        compiler_params=pltpu.CompilerParams(
            dimension_semantics=("parallel", "arbitrary"),
            vmem_limit_bytes=_vmem_limit(block_bytes),
        ),
        cost_estimate=cost,
    )(x2, gamma.reshape(1, E), beta.reshape(1, E), w, bias.reshape(1, N))


# --------------------------------------------------------------------------- #
# kernel 2: attention over the fused qkv slab, grid=(B,), lane-dense output
# --------------------------------------------------------------------------- #
def attention_kernel(qkv_ref, o_ref, *, num_heads, scale, approx_recip):
    qkv = qkv_ref[0]                           # (S, 3E) fused q|k|v layout
    E = qkv.shape[1] // 3
    Dh = E // num_heads
    outs = []
    for h in range(num_heads):                 # static unroll over heads
        # 1/sqrt(Dh) folded into q (S*Dh elements, not the SxS scores)
        q = qkv[:, h * Dh:(h + 1) * Dh] * scale
        k = qkv[:, E + h * Dh:E + (h + 1) * Dh]
        v = qkv[:, 2 * E + h * Dh:2 * E + (h + 1) * Dh]
        s = lax.dot_general(q, k, (((1,), (1,)), ((), ())),
                            preferred_element_type=jnp.float32)
        m = jnp.max(s, axis=-1, keepdims=True)
        e = jnp.exp(s - m)
        inv = pl.reciprocal(jnp.sum(e, axis=-1, keepdims=True),
                            approx=approx_recip)
        p = e * inv
        # TODO(synk): attention-weight dropout skipped (identity in eval mode).
        outs.append(jnp.dot(p.astype(v.dtype), v,
                            preferred_element_type=jnp.float32))
    # heads concatenated -> single lane-dense (S, E) store (E multiple of 128)
    o_ref[0] = jnp.concatenate(outs, axis=-1).astype(o_ref.dtype)


def attention(qkv_bse3, num_heads):
    B, S, E3 = qkv_bse3.shape
    E = E3 // 3
    Dh = E // num_heads
    bs = qkv_bse3.dtype.itemsize
    block_bytes = (S * E3 + S * E) * bs + num_heads * S * S * 4
    cost = pl.CostEstimate(
        flops=4 * B * S * S * E,
        transcendentals=B * num_heads * S * S,
        bytes_accessed=B * (S * E3 + S * E) * bs,
    )
    # TODO(synk): add a KV-tiled (flash / online-softmax) variant for long
    # sequences; this kernel keeps the full SxS score matrix per head in VMEM.
    return pl.pallas_call(
        functools.partial(attention_kernel, num_heads=num_heads,
                          scale=Dh ** -0.5,
                          approx_recip=bool(qkv_bse3.dtype == jnp.bfloat16)),
        out_shape=jax.ShapeDtypeStruct((B, S, E), qkv_bse3.dtype),
        grid_spec=pltpu.PrefetchScalarGridSpec(
            num_scalar_prefetch=0,
            grid=(B,),
            in_specs=[pl.BlockSpec((1, S, E3), lambda b: (b, 0, 0))],
            out_specs=pl.BlockSpec((1, S, E), lambda b: (b, 0, 0)),
        ),
        compiler_params=pltpu.CompilerParams(
            dimension_semantics=("parallel",),
            vmem_limit_bytes=_vmem_limit(block_bytes),
        ),
        cost_estimate=cost,
    )(qkv_bse3)


# --------------------------------------------------------------------------- #
# kernel 3: Linear + residual add   (attention out-projection)
# --------------------------------------------------------------------------- #
def linear_residual_kernel(x_ref, w_ref, bias_ref, res_ref, o_ref):
    y = jnp.dot(x_ref[...], w_ref[...], preferred_element_type=jnp.float32)
    y = y + bias_ref[...].astype(jnp.float32) + res_ref[...].astype(jnp.float32)
    o_ref[...] = y.astype(o_ref.dtype)


def linear_residual(x2, w, bias, res, *, tm=256, tn=512):
    M, E = x2.shape
    N = w.shape[1]
    tm = min(tm, M)
    tn = min(tn, N)
    grid = (pl.cdiv(M, tm), pl.cdiv(N, tn))
    bs = x2.dtype.itemsize
    block_bytes = (tm * E + E * tn + tn + 2 * tm * tn) * bs
    cost = pl.CostEstimate(
        flops=2 * M * E * N + 2 * M * N,
        transcendentals=0,
        bytes_accessed=(M * E + E * N + N + 2 * M * N) * bs,
    )
    return pl.pallas_call(
        linear_residual_kernel,
        out_shape=jax.ShapeDtypeStruct((M, N), x2.dtype),
        grid_spec=pltpu.PrefetchScalarGridSpec(
            num_scalar_prefetch=0,
            grid=grid,
            in_specs=[
                pl.BlockSpec((tm, E), lambda i, n: (i, 0)),   # attn output rows
                pl.BlockSpec((E, tn), lambda i, n: (0, n)),   # proj W column tile
                pl.BlockSpec((1, tn), lambda i, n: (0, n)),   # proj bias tile
                pl.BlockSpec((tm, tn), lambda i, n: (i, n)),  # residual (x)
            ],
            out_specs=pl.BlockSpec((tm, tn), lambda i, n: (i, n)),
        ),
        compiler_params=pltpu.CompilerParams(
            dimension_semantics=("parallel", "parallel"),
            vmem_limit_bytes=_vmem_limit(block_bytes),
        ),
        cost_estimate=cost,
    )(x2, w, bias.reshape(1, N), res)


# --------------------------------------------------------------------------- #
# kernel 4: LayerNorm + MLP (fc1 -> GELU -> fc2) + residual, H-tiled reduction
# --------------------------------------------------------------------------- #
def ln_mlp_residual_kernel(x_ref, g_ref, b_ref, w1_ref, b1_ref, w2_ref, b2_ref,
                           o_ref, xn_ref, acc_ref, *, eps):
    j = pl.program_id(1)

    @pl.when(j == 0)
    def _():
        xn = _layer_norm_f32(
            x_ref[...].astype(jnp.float32),
            g_ref[...].astype(jnp.float32),
            b_ref[...].astype(jnp.float32),
            eps,
        )
        xn_ref[...] = xn.astype(xn_ref.dtype)
        acc_ref[...] = jnp.zeros_like(acc_ref)

    h = jnp.dot(xn_ref[...], w1_ref[...], preferred_element_type=jnp.float32)
    h = _gelu_exact_f32(h + b1_ref[...].astype(jnp.float32))
    acc_ref[...] += jnp.dot(h.astype(w2_ref.dtype), w2_ref[...],
                            preferred_element_type=jnp.float32)

    @pl.when(j == pl.num_programs(1) - 1)
    def _():
        y = acc_ref[...] + b2_ref[...].astype(jnp.float32) \
            + x_ref[...].astype(jnp.float32)
        o_ref[...] = y.astype(o_ref.dtype)


def ln_mlp_residual(x2, gamma, beta, w1, b1, w2, b2, *, eps=LN_EPS, tm=256, th=512):
    M, E = x2.shape
    Hm = w1.shape[1]
    tm = min(tm, M)
    th = _pick_reduce_tile(Hm, th)     # must divide Hm exactly (reduction axis)
    grid = (pl.cdiv(M, tm), Hm // th)
    bs = x2.dtype.itemsize
    block_bytes = (2 * tm * E + 4 * E + E * th + th + th * E) * bs \
                  + tm * E * bs + tm * E * 4   # LN cache + f32 accumulator
    cost = pl.CostEstimate(
        flops=4 * M * E * Hm + 10 * M * E,
        transcendentals=M * Hm + M,
        bytes_accessed=(2 * M * E + 2 * E * Hm + Hm + 5 * E) * bs,
    )
    # NOTE(perf): if the W1/W2 tile DMA is exposed on v5e/v6e after the bf16
    # switch, add pipeline_mode=pl.Buffered(3) to the w1/w2 BlockSpecs.
    return pl.pallas_call(
        functools.partial(ln_mlp_residual_kernel, eps=eps),
        out_shape=jax.ShapeDtypeStruct((M, E), x2.dtype),
        grid_spec=pltpu.PrefetchScalarGridSpec(
            num_scalar_prefetch=0,
            grid=grid,
            in_specs=[
                pl.BlockSpec((tm, E), lambda i, j: (i, 0)),   # residual stream
                pl.BlockSpec((1, E), lambda i, j: (0, 0)),    # ln2 gamma
                pl.BlockSpec((1, E), lambda i, j: (0, 0)),    # ln2 beta
                pl.BlockSpec((E, th), lambda i, j: (0, j)),   # W1 hidden tile
                pl.BlockSpec((1, th), lambda i, j: (0, j)),   # b1 hidden tile
                pl.BlockSpec((th, E), lambda i, j: (j, 0)),   # W2 hidden tile
                pl.BlockSpec((1, E), lambda i, j: (0, 0)),    # b2
            ],
            out_specs=pl.BlockSpec((tm, E), lambda i, j: (i, 0)),
            scratch_shapes=[
                pltpu.VMEM((tm, E), x2.dtype),      # LN(x) cache (matmul dtype)
                pltpu.VMEM((tm, E), jnp.float32),   # fc2 accumulator
            ],
        ),
        compiler_params=pltpu.CompilerParams(
            dimension_semantics=("parallel", "arbitrary"),
            vmem_limit_bytes=_vmem_limit(block_bytes),
        ),
        cost_estimate=cost,
    )(x2, gamma.reshape(1, E), beta.reshape(1, E),
      w1, b1.reshape(1, Hm), w2, b2.reshape(1, E))


# --------------------------------------------------------------------------- #
# full Transformer block forward
# --------------------------------------------------------------------------- #
@functools.partial(jax.jit, static_argnames=("num_heads", "tm", "tn", "th"))
def transformer_forward(x, params, *, num_heads, tm=256, tn=512, th=512):
    """x: (B, S, E). Weights stored as (in_features, out_features).

    Matmuls run in x.dtype (pass bf16 on v6e/v7x for the native MXU path) with
    f32 accumulation; params are cast to x.dtype once here.
    """
    B, S, E = x.shape
    M = B * S
    dt = x.dtype
    p = {k: v.astype(dt) for k, v in params.items()}
    x2 = x.reshape(M, E)

    # --- attention sub-block: x + proj(attn(LN1(x))) ---
    qkv = ln_linear(x2, p["ln1_g"], p["ln1_b"], p["w_qkv"], p["b_qkv"],
                    tm=tm, tn=tn)                       # (M, 3E)
    # Fused qkv slab fed directly to the attention kernel; reshapes below are
    # contiguous (free) -- no XLA transpose glue between pallas_calls.
    attn_out = attention(qkv.reshape(B, S, 3 * E), num_heads)   # (B, S, E)
    h = linear_residual(attn_out.reshape(M, E), p["w_proj"], p["b_proj"], x2,
                        tm=tm, tn=tn)

    # --- MLP sub-block: h + fc2(GELU(fc1(LN2(h)))) ---
    out = ln_mlp_residual(h, p["ln2_g"], p["ln2_b"],
                          p["w1"], p["b1"], p["w2"], p["b2"],
                          tm=tm, th=th)
    return out.reshape(B, S, E)


# --------------------------------------------------------------------------- #
# pure-JAX reference
# --------------------------------------------------------------------------- #
def reference_transformer(x, params, num_heads):
    B, S, E = x.shape
    Dh = E // num_heads

    def ln(t, g, b):
        mu = jnp.mean(t, axis=-1, keepdims=True)
        var = jnp.mean((t - mu) ** 2, axis=-1, keepdims=True)
        return (t - mu) / jnp.sqrt(var + LN_EPS) * g + b

    xn = ln(x, params["ln1_g"], params["ln1_b"])
    qkv = xn @ params["w_qkv"] + params["b_qkv"]
    q, k, v = jnp.split(qkv, 3, axis=-1)

    def heads(t):
        return jnp.transpose(t.reshape(B, S, num_heads, Dh), (0, 2, 1, 3))

    q, k, v = heads(q), heads(k), heads(v)
    attn = jnp.einsum("bhqd,bhkd->bhqk", q, k) * (Dh ** -0.5)
    attn = jax.nn.softmax(attn, axis=-1)
    o = jnp.einsum("bhqk,bhkd->bhqd", attn, v)
    o = jnp.transpose(o, (0, 2, 1, 3)).reshape(B, S, E)
    x = x + o @ params["w_proj"] + params["b_proj"]
    xn2 = ln(x, params["ln2_g"], params["ln2_b"])
    hdn = jax.nn.gelu(xn2 @ params["w1"] + params["b1"], approximate=False)
    return x + hdn @ params["w2"] + params["b2"]


# --------------------------------------------------------------------------- #
if __name__ == "__main__":
    # Small ViT-ish config: batch=2, seq=16, embed_dim=128 (lane-dense),
    # num_heads=4 (head_dim=32), mlp_size=512, dropout=0.0 (inference).
    B, S, E, NH, Hm = 2, 16, 128, 4, 512
    f32 = jnp.float32

    key = jax.random.PRNGKey(0)
    ks = jax.random.split(key, 12)

    x = jax.random.normal(ks[0], (B, S, E), dtype=f32)
    params = {
        "ln1_g": 1.0 + 0.1 * jax.random.normal(ks[1], (E,), dtype=f32),
        "ln1_b": 0.1 * jax.random.normal(ks[2], (E,), dtype=f32),
        "w_qkv": jax.random.normal(ks[3], (E, 3 * E), dtype=f32) / math.sqrt(E),
        "b_qkv": 0.01 * jax.random.normal(ks[4], (3 * E,), dtype=f32),
        "w_proj": jax.random.normal(ks[5], (E, E), dtype=f32) / math.sqrt(E),
        "b_proj": 0.01 * jax.random.normal(ks[6], (E,), dtype=f32),
        "ln2_g": 1.0 + 0.1 * jax.random.normal(ks[7], (E,), dtype=f32),
        "ln2_b": 0.1 * jax.random.normal(ks[8], (E,), dtype=f32),
        "w1": jax.random.normal(ks[9], (E, Hm), dtype=f32) / math.sqrt(E),
        "b1": 0.01 * jax.random.normal(ks[10], (Hm,), dtype=f32),
        "w2": jax.random.normal(ks[11], (Hm, E), dtype=f32) / math.sqrt(Hm),
        "b2": jnp.zeros((E,), dtype=f32),
    }

    # th=256: multiple of 256 (full MXU feed on v6e/v7x) and still exercises
    # two accumulation steps on the MLP reduction axis with Hm=512.
    out = transformer_forward(x, params, num_heads=NH, th=256)
    out = jax.block_until_ready(out)

    ref = reference_transformer(x, params, NH)
    assert out.shape == (B, S, E)
    max_err = float(jnp.max(jnp.abs(out - ref)))
    assert jnp.allclose(out, ref, atol=1e-3, rtol=1e-3), \
        f"f32 mismatch vs reference (max abs err {max_err})"

    # bf16 path: MXU-native matmuls (params cast to bf16 inside the wrapper).
    out_bf = transformer_forward(x.astype(jnp.bfloat16), params,
                                 num_heads=NH, th=256)
    out_bf = jax.block_until_ready(out_bf)
    max_err_bf = float(jnp.max(jnp.abs(out_bf.astype(f32) - ref)))
    assert max_err_bf < 0.35, f"bf16 mismatch vs reference (max abs err {max_err_bf})"

    print("KERNEL_OK")
</pallas_src>

<mosaic_0001>
module attributes {stable_mosaic.version = 11 : i64} {
  func.func @linear_residual_kernel(%arg0: i32, %arg1: i32, %arg2: memref<32x128xf32, #tpu.memory_space<vmem>>, %arg3: memref<128x128xf32, #tpu.memory_space<vmem>>, %arg4: memref<1x128xf32, #tpu.memory_space<vmem>>, %arg5: memref<32x128xf32, #tpu.memory_space<vmem>>, %arg6: memref<32x128xf32, #tpu.memory_space<vmem>>) attributes {dimension_semantics = [#tpu.dimension_semantics<parallel>, #tpu.dimension_semantics<parallel>], iteration_bounds = array<i64: 1, 1>, scalar_prefetch = 0 : i64, scratch_operands = 0 : i64, tpu.core_type = #tpu.core_type<tc>, window_params = [{transform_indices = @transform_0, window_bounds = array<i64: 32, 128>}, {transform_indices = @transform_1, window_bounds = array<i64: 128, 128>}, {transform_indices = @transform_2, window_bounds = array<i64: 1, 128>}, {transform_indices = @transform_3, window_bounds = array<i64: 32, 128>}, {transform_indices = @transform_4, window_bounds = array<i64: 32, 128>}]} {
    %c0 = arith.constant 0 : index
    %c0_0 = arith.constant 0 : index
    %0 = vector.load %arg2[%c0, %c0_0] : memref<32x128xf32, #tpu.memory_space<vmem>>, vector<32x128xf32>
    %c0_1 = arith.constant 0 : index
    %c0_2 = arith.constant 0 : index
    %1 = vector.load %arg3[%c0_1, %c0_2] : memref<128x128xf32, #tpu.memory_space<vmem>>, vector<128x128xf32>
    %cst = arith.constant dense<0.000000e+00> : vector<32x128xf32>
    %2 = tpu.matmul %0, %1, %cst {dimension_numbers = #tpu.dot_dimension_numbers<[1], [0], [0], [1], [0, 0, 1, 1], [], []>} : vector<32x128xf32>, vector<128x128xf32>, vector<32x128xf32> -> vector<32x128xf32>
    %c0_3 = arith.constant 0 : index
    %c0_4 = arith.constant 0 : index
    %3 = vector.load %arg4[%c0_3, %c0_4] : memref<1x128xf32, #tpu.memory_space<vmem>>, vector<1x128xf32>
    %4 = vector.broadcast %3 : vector<1x128xf32> to vector<32x128xf32>
    %5 = arith.addf %2, %4 : vector<32x128xf32>
    %c0_5 = arith.constant 0 : index
    %c0_6 = arith.constant 0 : index
    %6 = vector.load %arg5[%c0_5, %c0_6] : memref<32x128xf32, #tpu.memory_space<vmem>>, vector<32x128xf32>
    %7 = arith.addf %5, %6 : vector<32x128xf32>
    %c0_7 = arith.constant 0 : index
    %c0_8 = arith.constant 0 : index
    %8 = vector.load %arg6[%c0_7, %c0_8] : memref<32x128xf32, #tpu.memory_space<vmem>>, vector<32x128xf32>
    tpu.vector_store %arg6[%c0_7, %c0_8], %7 {strides = array<i32>} : memref<32x128xf32, #tpu.memory_space<vmem>>, vector<32x128xf32>,
    return
  }
  func.func @transform_0(%arg0: i32, %arg1: i32) -> (i32, i32) {
    %c0_i32 = arith.constant 0 : i32
    %c0_i32_0 = arith.constant 0 : i32
    return %arg0, %c0_i32 : i32, i32
  }
  func.func @transform_1(%arg0: i32, %arg1: i32) -> (i32, i32) {
    %c0_i32 = arith.constant 0 : i32
    %c0_i32_0 = arith.constant 0 : i32
    return %c0_i32, %arg1 : i32, i32
  }
  func.func @transform_2(%arg0: i32, %arg1: i32) -> (i32, i32) {
    %c0_i32 = arith.constant 0 : i32
    %c0_i32_0 = arith.constant 0 : i32
    return %c0_i32, %arg1 : i32, i32
  }
  func.func @transform_3(%arg0: i32, %arg1: i32) -> (i32, i32) {
    %c0_i32 = arith.constant 0 : i32
    return %arg0, %arg1 : i32, i32
  }
  func.func @transform_4(%arg0: i32, %arg1: i32) -> (i32, i32) {
    %c0_i32 = arith.constant 0 : i32
    return %arg0, %arg1 : i32, i32
  }
}

module attributes {stable_mosaic.version = 11 : i64} {
  func.func @ln_linear_kernel(%arg0: i32, %arg1: i32, %arg2: memref<32x128xf32, #tpu.memory_space<vmem>>, %arg3: memref<1x128xf32, #tpu.memory_space<vmem>>, %arg4: memref<1x128xf32, #tpu.memory_space<vmem>>, %arg5: memref<128x384xf32, #tpu.memory_space<vmem>>, %arg6: memref<1x384xf32, #tpu.memory_space<vmem>>, %arg7: memref<32x384xf32, #tpu.memory_space<vmem>>, %arg8: memref<32x128xf32, #tpu.memory_space<vmem>>) attributes {dimension_semantics = [#tpu.dimension_semantics<parallel>, #tpu.dimension_semantics<arbitrary>], iteration_bounds = array<i64: 1, 1>, scalar_prefetch = 0 : i64, scratch_operands = 1 : i64, tpu.core_type = #tpu.core_type<tc>, window_params = [{transform_indices = @transform_0, window_bounds = array<i64: 32, 128>}, {pipeline_mode = #tpu.pipeline_mode<synchronous>, transform_indices = @transform_1, window_bounds = array<i64: 1, 128>}, {pipeline_mode = #tpu.pipeline_mode<synchronous>, transform_indices = @transform_2, window_bounds = array<i64: 1, 128>}, {transform_indices = @transform_3, window_bounds = array<i64: 128, 384>}, {transform_indices = @transform_4, window_bounds = array<i64: 1, 384>}, {transform_indices = @transform_5, window_bounds = array<i64: 32, 384>}]} {
    %c0_i32 = arith.constant 0 : i32
    %0 = arith.cmpi eq, %arg1, %c0_i32 : i32
    %1 = arith.extui %0 : i1 to i32
    %c0_i32_0 = arith.constant 0 : i32
    %2 = arith.cmpi ne, %1, %c0_i32_0 : i32
    scf.if %2 {
      %c0_8 = arith.constant 0 : index
      %c0_9 = arith.constant 0 : index
      %10 = vector.load %arg2[%c0_8, %c0_9] : memref<32x128xf32, #tpu.memory_space<vmem>>, vector<32x128xf32>
      %c0_10 = arith.constant 0 : index
      %c0_11 = arith.constant 0 : index
      %11 = vector.load %arg3[%c0_10, %c0_11] : memref<1x128xf32, #tpu.memory_space<vmem>>, vector<1x128xf32>
      %c0_12 = arith.constant 0 : index
      %c0_13 = arith.constant 0 : index
      %12 = vector.load %arg4[%c0_12, %c0_13] : memref<1x128xf32, #tpu.memory_space<vmem>>, vector<1x128xf32>
      %cst_14 = arith.constant dense<0.000000e+00> : vector<32xf32>
      %13 = vector.multi_reduction <add>, %10, %cst_14 [1] : vector<32x128xf32> to vector<32xf32>
      %14 = vector.shape_cast %13 : vector<32xf32> to vector<32x1xf32>
      %cst_15 = arith.constant 1.280000e+02 : f32
      %15 = vector.broadcast %cst_15 : f32 to vector<32x1xf32>
      %16 = arith.divf %14, %15 : vector<32x1xf32>
      %17 = vector.broadcast %16 : vector<32x1xf32> to vector<32x128xf32>
      %18 = arith.subf %10, %17 : vector<32x128xf32>
      %19 = arith.mulf %18, %18 : vector<32x128xf32>
      %cst_16 = arith.constant dense<0.000000e+00> : vector<32xf32>
      %20 = vector.multi_reduction <add>, %19, %cst_16 [1] : vector<32x128xf32> to vector<32xf32>
      %21 = vector.shape_cast %20 : vector<32xf32> to vector<32x1xf32>
      %cst_17 = arith.constant 1.280000e+02 : f32
      %22 = vector.broadcast %cst_17 : f32 to vector<32x1xf32>
      %23 = arith.divf %21, %22 : vector<32x1xf32>
      %cst_18 = arith.constant 9.99999974E-6 : f32
      %24 = vector.broadcast %cst_18 : f32 to vector<32x1xf32>
      %25 = arith.addf %23, %24 : vector<32x1xf32>
      %26 = math.rsqrt %25 : vector<32x1xf32>
      %27 = vector.broadcast %26 : vector<32x1xf32> to vector<32x128xf32>
      %28 = arith.mulf %18, %27 : vector<32x128xf32>
      %29 = vector.broadcast %11 : vector<1x128xf32> to vector<32x128xf32>
      %30 = arith.mulf %28, %29 : vector<32x128xf32>
      %31 = vector.broadcast %12 : vector<1x128xf32> to vector<32x128xf32>
      %32 = arith.addf %30, %31 : vector<32x128xf32>
      %c0_19 = arith.constant 0 : index
      %c0_20 = arith.constant 0 : index
      %33 = vector.load %arg8[%c0_19, %c0_20] : memref<32x128xf32, #tpu.memory_space<vmem>>, vector<32x128xf32>
      tpu.vector_store %arg8[%c0_19, %c0_20], %32 {strides = array<i32>} : memref<32x128xf32, #tpu.memory_space<vmem>>, vector<32x128xf32>,
    } else {
    }
    %c0 = arith.constant 0 : index
    %c0_1 = arith.constant 0 : index
    %3 = vector.load %arg8[%c0, %c0_1] : memref<32x128xf32, #tpu.memory_space<vmem>>, vector<32x128xf32>
    %c0_2 = arith.constant 0 : index
    %c0_3 = arith.constant 0 : index
    %4 = vector.load %arg5[%c0_2, %c0_3] : memref<128x384xf32, #tpu.memory_space<vmem>>, vector<128x384xf32>
    %cst = arith.constant dense<0.000000e+00> : vector<32x384xf32>
    %5 = tpu.matmul %3, %4, %cst {dimension_numbers = #tpu.dot_dimension_numbers<[1], [0], [0], [1], [0, 0, 1, 1], [], []>} : vector<32x128xf32>, vector<128x384xf32>, vector<32x384xf32> -> vector<32x384xf32>
    %c0_4 = arith.constant 0 : index
    %c0_5 = arith.constant 0 : index
    %6 = vector.load %arg6[%c0_4, %c0_5] : memref<1x384xf32, #tpu.memory_space<vmem>>, vector<1x384xf32>
    %7 = vector.broadcast %6 : vector<1x384xf32> to vector<32x384xf32>
    %8 = arith.addf %5, %7 : vector<32x384xf32>
    %c0_6 = arith.constant 0 : index
    %c0_7 = arith.constant 0 : index
    %9 = vector.load %arg7[%c0_6, %c0_7] : memref<32x384xf32, #tpu.memory_space<vmem>>, vector<32x384xf32>
    tpu.vector_store %arg7[%c0_6, %c0_7], %8 {strides = array<i32>} : memref<32x384xf32, #tpu.memory_space<vmem>>, vector<32x384xf32>,
    return
  }
  func.func @transform_0(%arg0: i32, %arg1: i32) -> (i32, i32) {
    %c0_i32 = arith.constant 0 : i32
    %c0_i32_0 = arith.constant 0 : i32
    return %arg0, %c0_i32 : i32, i32
  }
  func.func @transform_1(%arg0: i32, %arg1: i32) -> (i32, i32) {
    %c0_i32 = arith.constant 0 : i32
    %c0_i32_0 = arith.constant 0 : i32
    %c0_i32_1 = arith.constant 0 : i32
    return %c0_i32, %c0_i32_0 : i32, i32
  }
  func.func @transform_2(%arg0: i32, %arg1: i32) -> (i32, i32) {
    %c0_i32 = arith.constant 0 : i32
    %c0_i32_0 = arith.constant 0 : i32
    %c0_i32_1 = arith.constant 0 : i32
    return %c0_i32, %c0_i32_0 : i32, i32
  }
  func.func @transform_3(%arg0: i32, %arg1: i32) -> (i32, i32) {
    %c0_i32 = arith.constant 0 : i32
    %c0_i32_0 = arith.constant 0 : i32
    return %c0_i32, %arg1 : i32, i32
  }
  func.func @transform_4(%arg0: i32, %arg1: i32) -> (i32, i32) {
    %c0_i32 = arith.constant 0 : i32
    %c0_i32_0 = arith.constant 0 : i32
    return %c0_i32, %arg1 : i32, i32
  }
  func.func @transform_5(%arg0: i32, %arg1: i32) -> (i32, i32) {
    %c0_i32 = arith.constant 0 : i32
    return %arg0, %arg1 : i32, i32
  }
}

module attributes {stable_mosaic.version = 11 : i64} {
  func.func @attention_kernel(%arg0: i32, %arg1: memref<1x16x384xf32, #tpu.memory_space<vmem>>, %arg2: memref<1x16x128xf32, #tpu.memory_space<vmem>>) attributes {dimension_semantics = [#tpu.dimension_semantics<parallel>], iteration_bounds = array<i64: 2>, scalar_prefetch = 0 : i64, scratch_operands = 0 : i64, tpu.core_type = #tpu.core_type<tc>, window_params = [{transform_indices = @transform_0, window_bounds = array<i64: 1, 16, 384>}, {transform_indices = @transform_1, window_bounds = array<i64: 1, 16, 128>}]} {
    %c0 = arith.constant 0 : index
    %c0_0 = arith.constant 0 : index
    %c0_1 = arith.constant 0 : index
    %0 = vector.load %arg1[%c0, %c0_0, %c0_1] : memref<1x16x384xf32, #tpu.memory_space<vmem>>, vector<1x16x384xf32>
    %1 = vector.shape_cast %0 : vector<1x16x384xf32> to vector<16x384xf32>
    %2 = vector.extract_strided_slice %1 {offsets = [0, 0], sizes = [16, 32], strides = [1, 1]} : vector<16x384xf32> to vector<16x32xf32>
    %cst = arith.constant 0.176776692 : f32
    %3 = vector.broadcast %cst : f32 to vector<16x32xf32>
    %4 = arith.mulf %2, %3 : vector<16x32xf32>
    %5 = vector.extract_strided_slice %1 {offsets = [0, 128], sizes = [16, 32], strides = [1, 1]} : vector<16x384xf32> to vector<16x32xf32>
    %6 = vector.extract_strided_slice %1 {offsets = [0, 256], sizes = [16, 32], strides = [1, 1]} : vector<16x384xf32> to vector<16x32xf32>
    %cst_2 = arith.constant dense<0.000000e+00> : vector<16x16xf32>
    %7 = tpu.matmul %4, %5, %cst_2 {dimension_numbers = #tpu.dot_dimension_numbers<[1], [1], [0], [0], [0, 0, 1, 0], [], []>} : vector<16x32xf32>, vector<16x32xf32>, vector<16x16xf32> -> vector<16x16xf32>
    %cst_3 = arith.constant dense<0xFF800000> : vector<16xf32>
    %8 = vector.multi_reduction <maximumf>, %7, %cst_3 [1] : vector<16x16xf32> to vector<16xf32>
    %9 = vector.shape_cast %8 : vector<16xf32> to vector<16x1xf32>
    %10 = vector.broadcast %9 : vector<16x1xf32> to vector<16x16xf32>
    %11 = arith.subf %7, %10 : vector<16x16xf32>
    %12 = math.exp %11 : vector<16x16xf32>
    %cst_4 = arith.constant dense<0.000000e+00> : vector<16xf32>
    %13 = vector.multi_reduction <add>, %12, %cst_4 [1] : vector<16x16xf32> to vector<16xf32>
    %14 = vector.shape_cast %13 : vector<16xf32> to vector<16x1xf32>
    %15 = tpu.reciprocal %14 : vector<16x1xf32> -> vector<16x1xf32>
    %16 = vector.broadcast %15 : vector<16x1xf32> to vector<16x16xf32>
    %17 = arith.mulf %12, %16 : vector<16x16xf32>
    %cst_5 = arith.constant dense<0.000000e+00> : vector<16x32xf32>
    %18 = tpu.matmul %17, %6, %cst_5 {dimension_numbers = #tpu.dot_dimension_numbers<[1], [0], [0], [1], [0, 0, 1, 1], [], []>} : vector<16x16xf32>, vector<16x32xf32>, vector<16x32xf32> -> vector<16x32xf32>
    %19 = vector.extract_strided_slice %1 {offsets = [0, 32], sizes = [16, 32], strides = [1, 1]} : vector<16x384xf32> to vector<16x32xf32>
    %cst_6 = arith.constant 0.176776692 : f32
    %20 = vector.broadcast %cst_6 : f32 to vector<16x32xf32>
    %21 = arith.mulf %19, %20 : vector<16x32xf32>
    %22 = vector.extract_strided_slice %1 {offsets = [0, 160], sizes = [16, 32], strides = [1, 1]} : vector<16x384xf32> to vector<16x32xf32>
    %23 = vector.extract_strided_slice %1 {offsets = [0, 288], sizes = [16, 32], strides = [1, 1]} : vector<16x384xf32> to vector<16x32xf32>
    %cst_7 = arith.constant dense<0.000000e+00> : vector<16x16xf32>
    %24 = tpu.matmul %21, %22, %cst_7 {dimension_numbers = #tpu.dot_dimension_numbers<[1], [1], [0], [0], [0, 0, 1, 0], [], []>} : vector<16x32xf32>, vector<16x32xf32>, vector<16x16xf32> -> vector<16x16xf32>
    %cst_8 = arith.constant dense<0xFF800000> : vector<16xf32>
    %25 = vector.multi_reduction <maximumf>, %24, %cst_8 [1] : vector<16x16xf32> to vector<16xf32>
    %26 = vector.shape_cast %25 : vector<16xf32> to vector<16x1xf32>
    %27 = vector.broadcast %26 : vector<16x1xf32> to vector<16x16xf32>
    %28 = arith.subf %24, %27 : vector<16x16xf32>
    %29 = math.exp %28 : vector<16x16xf32>
    %cst_9 = arith.constant dense<0.000000e+00> : vector<16xf32>
    %30 = vector.multi_reduction <add>, %29, %cst_9 [1] : vector<16x16xf32> to vector<16xf32>
    %31 = vector.shape_cast %30 : vector<16xf32> to vector<16x1xf32>
    %32 = tpu.reciprocal %31 : vector<16x1xf32> -> vector<16x1xf32>
    %33 = vector.broadcast %32 : vector<16x1xf32> to vector<16x16xf32>
    %34 = arith.mulf %29, %33 : vector<16x16xf32>
    %cst_10 = arith.constant dense<0.000000e+00> : vector<16x32xf32>
    %35 = tpu.matmul %34, %23, %cst_10 {dimension_numbers = #tpu.dot_dimension_numbers<[1], [0], [0], [1], [0, 0, 1, 1], [], []>} : vector<16x16xf32>, vector<16x32xf32>, vector<16x32xf32> -> vector<16x32xf32>
    %36 = vector.extract_strided_slice %1 {offsets = [0, 64], sizes = [16, 32], strides = [1, 1]} : vector<16x384xf32> to vector<16x32xf32>
    %cst_11 = arith.constant 0.176776692 : f32
    %37 = vector.broadcast %cst_11 : f32 to vector<16x32xf32>
    %38 = arith.mulf %36, %37 : vector<16x32xf32>
    %39 = vector.extract_strided_slice %1 {offsets = [0, 192], sizes = [16, 32], strides = [1, 1]} : vector<16x384xf32> to vector<16x32xf32>
    %40 = vector.extract_strided_slice %1 {offsets = [0, 320], sizes = [16, 32], strides = [1, 1]} : vector<16x384xf32> to vector<16x32xf32>
    %cst_12 = arith.constant dense<0.000000e+00> : vector<16x16xf32>
    %41 = tpu.matmul %38, %39, %cst_12 {dimension_numbers = #tpu.dot_dimension_numbers<[1], [1], [0], [0], [0, 0, 1, 0], [], []>} : vector<16x32xf32>, vector<16x32xf32>, vector<16x16xf32> -> vector<16x16xf32>
    %cst_13 = arith.constant dense<0xFF800000> : vector<16xf32>
    %42 = vector.multi_reduction <maximumf>, %41, %cst_13 [1] : vector<16x16xf32> to vector<16xf32>
    %43 = vector.shape_cast %42 : vector<16xf32> to vector<16x1xf32>
    %44 = vector.broadcast %43 : vector<16x1xf32> to vector<16x16xf32>
    %45 = arith.subf %41, %44 : vector<16x16xf32>
    %46 = math.exp %45 : vector<16x16xf32>
    %cst_14 = arith.constant dense<0.000000e+00> : vector<16xf32>
    %47 = vector.multi_reduction <add>, %46, %cst_14 [1] : vector<16x16xf32> to vector<16xf32>
    %48 = vector.shape_cast %47 : vector<16xf32> to vector<16x1xf32>
    %49 = tpu.reciprocal %48 : vector<16x1xf32> -> vector<16x1xf32>
    %50 = vector.broadcast %49 : vector<16x1xf32> to vector<16x16xf32>
    %51 = arith.mulf %46, %50 : vector<16x16xf32>
    %cst_15 = arith.constant dense<0.000000e+00> : vector<16x32xf32>
    %52 = tpu.matmul %51, %40, %cst_15 {dimension_numbers = #tpu.dot_dimension_numbers<[1], [0], [0], [1], [0, 0, 1, 1], [], []>} : vector<16x16xf32>, vector<16x32xf32>, vector<16x32xf32> -> vector<16x32xf32>
    %53 = vector.extract_strided_slice %1 {offsets = [0, 96], sizes = [16, 32], strides = [1, 1]} : vector<16x384xf32> to vector<16x32xf32>
    %cst_16 = arith.constant 0.176776692 : f32
    %54 = vector.broadcast %cst_16 : f32 to vector<16x32xf32>
    %55 = arith.mulf %53, %54 : vector<16x32xf32>
    %56 = vector.extract_strided_slice %1 {offsets = [0, 224], sizes = [16, 32], strides = [1, 1]} : vector<16x384xf32> to vector<16x32xf32>
    %57 = vector.extract_strided_slice %1 {offsets = [0, 352], sizes = [16, 32], strides = [1, 1]} : vector<16x384xf32> to vector<16x32xf32>
    %cst_17 = arith.constant dense<0.000000e+00> : vector<16x16xf32>
    %58 = tpu.matmul %55, %56, %cst_17 {dimension_numbers = #tpu.dot_dimension_numbers<[1], [1], [0], [0], [0, 0, 1, 0], [], []>} : vector<16x32xf32>, vector<16x32xf32>, vector<16x16xf32> -> vector<16x16xf32>
    %cst_18 = arith.constant dense<0xFF800000> : vector<16xf32>
    %59 = vector.multi_reduction <maximumf>, %58, %cst_18 [1] : vector<16x16xf32> to vector<16xf32>
    %60 = vector.shape_cast %59 : vector<16xf32> to vector<16x1xf32>
    %61 = vector.broadcast %60 : vector<16x1xf32> to vector<16x16xf32>
    %62 = arith.subf %58, %61 : vector<16x16xf32>
    %63 = math.exp %62 : vector<16x16xf32>
    %cst_19 = arith.constant dense<0.000000e+00> : vector<16xf32>
    %64 = vector.multi_reduction <add>, %63, %cst_19 [1] : vector<16x16xf32> to vector<16xf32>
    %65 = vector.shape_cast %64 : vector<16xf32> to vector<16x1xf32>
    %66 = tpu.reciprocal %65 : vector<16x1xf32> -> vector<16x1xf32>
    %67 = vector.broadcast %66 : vector<16x1xf32> to vector<16x16xf32>
    %68 = arith.mulf %63, %67 : vector<16x16xf32>
    %cst_20 = arith.constant dense<0.000000e+00> : vector<16x32xf32>
    %69 = tpu.matmul %68, %57, %cst_20 {dimension_numbers = #tpu.dot_dimension_numbers<[1], [0], [0], [1], [0, 0, 1, 1], [], []>} : vector<16x16xf32>, vector<16x32xf32>, vector<16x32xf32> -> vector<16x32xf32>
    %70 = tpu.concatenate %18, %35, %52, %69 in 1 : vector<16x32xf32>, vector<16x32xf32>, vector<16x32xf32>, vector<16x32xf32> -> vector<16x128xf32>
    %c0_21 = arith.constant 0 : index
    %c0_22 = arith.constant 0 : index
    %c0_23 = arith.constant 0 : index
    %71 = vector.load %arg2[%c0_21, %c0_22, %c0_23] : memref<1x16x128xf32, #tpu.memory_space<vmem>>, vector<1x16x128xf32>
    %72 = vector.shape_cast %71 : vector<1x16x128xf32> to vector<16x128xf32>
    %73 = vector.shape_cast %70 : vector<16x128xf32> to vector<1x16x128xf32>
    tpu.vector_store %arg2[%c0_21, %c0_22, %c0_23], %73 {strides = array<i32>} : memref<1x16x128xf32, #tpu.memory_space<vmem>>, vector<1x16x128xf32>,
    return
  }
  func.func @transform_0(%arg0: i32) -> (i32, i32, i32) {
    %c0_i32 = arith.constant 0 : i32
    %c0_i32_0 = arith.constant 0 : i32
    %c0_i32_1 = arith.constant 0 : i32
    return %arg0, %c0_i32, %c0_i32_0 : i32, i32, i32
  }
  func.func @transform_1(%arg0: i32) -> (i32, i32, i32) {
    %c0_i32 = arith.constant 0 : i32
    %c0_i32_0 = arith.constant 0 : i32
    %c0_i32_1 = arith.constant 0 : i32
    return %arg0, %c0_i32, %c0_i32_0 : i32, i32, i32
  }
}

module attributes {stable_mosaic.version = 11 : i64} {
  func.func @ln_mlp_residual_kernel(%arg0: i32, %arg1: i32, %arg2: memref<32x128xf32, #tpu.memory_space<vmem>>, %arg3: memref<1x128xf32, #tpu.memory_space<vmem>>, %arg4: memref<1x128xf32, #tpu.memory_space<vmem>>, %arg5: memref<128x256xf32, #tpu.memory_space<vmem>>, %arg6: memref<1x256xf32, #tpu.memory_space<vmem>>, %arg7: memref<256x128xf32, #tpu.memory_space<vmem>>, %arg8: memref<1x128xf32, #tpu.memory_space<vmem>>, %arg9: memref<32x128xf32, #tpu.memory_space<vmem>>, %arg10: memref<32x128xf32, #tpu.memory_space<vmem>>, %arg11: memref<32x128xf32, #tpu.memory_space<vmem>>) attributes {dimension_semantics = [#tpu.dimension_semantics<parallel>, #tpu.dimension_semantics<arbitrary>], iteration_bounds = array<i64: 1, 2>, scalar_prefetch = 0 : i64, scratch_operands = 2 : i64, tpu.core_type = #tpu.core_type<tc>, window_params = [{transform_indices = @transform_0, window_bounds = array<i64: 32, 128>}, {pipeline_mode = #tpu.pipeline_mode<synchronous>, transform_indices = @transform_1, window_bounds = array<i64: 1, 128>}, {pipeline_mode = #tpu.pipeline_mode<synchronous>, transform_indices = @transform_2, window_bounds = array<i64: 1, 128>}, {transform_indices = @transform_3, window_bounds = array<i64: 128, 256>}, {transform_indices = @transform_4, window_bounds = array<i64: 1, 256>}, {transform_indices = @transform_5, window_bounds = array<i64: 256, 128>}, {pipeline_mode = #tpu.pipeline_mode<synchronous>, transform_indices = @transform_6, window_bounds = array<i64: 1, 128>}, {transform_indices = @transform_7, window_bounds = array<i64: 32, 128>}]} {
    %c0_i32 = arith.constant 0 : i32
    %0 = arith.cmpi eq, %arg1, %c0_i32 : i32
    %1 = arith.extui %0 : i1 to i32
    %c0_i32_0 = arith.constant 0 : i32
    %2 = arith.cmpi ne, %1, %c0_i32_0 : i32
    scf.if %2 {
      %c0_17 = arith.constant 0 : index
      %c0_18 = arith.constant 0 : index
      %25 = vector.load %arg2[%c0_17, %c0_18] : memref<32x128xf32, #tpu.memory_space<vmem>>, vector<32x128xf32>
      %c0_19 = arith.constant 0 : index
      %c0_20 = arith.constant 0 : index
      %26 = vector.load %arg3[%c0_19, %c0_20] : memref<1x128xf32, #tpu.memory_space<vmem>>, vector<1x128xf32>
      %c0_21 = arith.constant 0 : index
      %c0_22 = arith.constant 0 : index
      %27 = vector.load %arg4[%c0_21, %c0_22] : memref<1x128xf32, #tpu.memory_space<vmem>>, vector<1x128xf32>
      %cst_23 = arith.constant dense<0.000000e+00> : vector<32xf32>
      %28 = vector.multi_reduction <add>, %25, %cst_23 [1] : vector<32x128xf32> to vector<32xf32>
      %29 = vector.shape_cast %28 : vector<32xf32> to vector<32x1xf32>
      %cst_24 = arith.constant 1.280000e+02 : f32
      %30 = vector.broadcast %cst_24 : f32 to vector<32x1xf32>
      %31 = arith.divf %29, %30 : vector<32x1xf32>
      %32 = vector.broadcast %31 : vector<32x1xf32> to vector<32x128xf32>
      %33 = arith.subf %25, %32 : vector<32x128xf32>
      %34 = arith.mulf %33, %33 : vector<32x128xf32>
      %cst_25 = arith.constant dense<0.000000e+00> : vector<32xf32>
      %35 = vector.multi_reduction <add>, %34, %cst_25 [1] : vector<32x128xf32> to vector<32xf32>
      %36 = vector.shape_cast %35 : vector<32xf32> to vector<32x1xf32>
      %cst_26 = arith.constant 1.280000e+02 : f32
      %37 = vector.broadcast %cst_26 : f32 to vector<32x1xf32>
      %38 = arith.divf %36, %37 : vector<32x1xf32>
      %cst_27 = arith.constant 9.99999974E-6 : f32
      %39 = vector.broadcast %cst_27 : f32 to vector<32x1xf32>
      %40 = arith.addf %38, %39 : vector<32x1xf32>
      %41 = math.rsqrt %40 : vector<32x1xf32>
      %42 = vector.broadcast %41 : vector<32x1xf32> to vector<32x128xf32>
      %43 = arith.mulf %33, %42 : vector<32x128xf32>
      %44 = vector.broadcast %26 : vector<1x128xf32> to vector<32x128xf32>
      %45 = arith.mulf %43, %44 : vector<32x128xf32>
      %46 = vector.broadcast %27 : vector<1x128xf32> to vector<32x128xf32>
      %47 = arith.addf %45, %46 : vector<32x128xf32>
      %c0_28 = arith.constant 0 : index
      %c0_29 = arith.constant 0 : index
      %48 = vector.load %arg10[%c0_28, %c0_29] : memref<32x128xf32, #tpu.memory_space<vmem>>, vector<32x128xf32>
      tpu.vector_store %arg10[%c0_28, %c0_29], %47 {strides = array<i32>} : memref<32x128xf32, #tpu.memory_space<vmem>>, vector<32x128xf32>,
      %cst_30 = arith.constant 0.000000e+00 : f32
      %49 = vector.broadcast %cst_30 : f32 to vector<32x128xf32>
      %c0_31 = arith.constant 0 : index
      %c0_32 = arith.constant 0 : index
      %50 = vector.load %arg11[%c0_31, %c0_32] : memref<32x128xf32, #tpu.memory_space<vmem>>, vector<32x128xf32>
      tpu.vector_store %arg11[%c0_31, %c0_32], %49 {strides = array<i32>} : memref<32x128xf32, #tpu.memory_space<vmem>>, vector<32x128xf32>,
    } else {
    }
    %c0 = arith.constant 0 : index
    %c0_1 = arith.constant 0 : index
    %3 = vector.load %arg10[%c0, %c0_1] : memref<32x128xf32, #tpu.memory_space<vmem>>, vector<32x128xf32>
    %c0_2 = arith.constant 0 : index
    %c0_3 = arith.constant 0 : index
    %4 = vector.load %arg5[%c0_2, %c0_3] : memref<128x256xf32, #tpu.memory_space<vmem>>, vector<128x256xf32>
    %cst = arith.constant dense<0.000000e+00> : vector<32x256xf32>
    %5 = tpu.matmul %3, %4, %cst {dimension_numbers = #tpu.dot_dimension_numbers<[1], [0], [0], [1], [0, 0, 1, 1], [], []>} : vector<32x128xf32>, vector<128x256xf32>, vector<32x256xf32> -> vector<32x256xf32>
    %c0_4 = arith.constant 0 : index
    %c0_5 = arith.constant 0 : index
    %6 = vector.load %arg6[%c0_4, %c0_5] : memref<1x256xf32, #tpu.memory_space<vmem>>, vector<1x256xf32>
    %7 = vector.broadcast %6 : vector<1x256xf32> to vector<32x256xf32>
    %8 = arith.addf %5, %7 : vector<32x256xf32>
    %cst_6 = arith.constant 5.000000e-01 : f32
    %9 = vector.broadcast %cst_6 : f32 to vector<32x256xf32>
    %10 = arith.mulf %9, %8 : vector<32x256xf32>
    %cst_7 = arith.constant 0.707106769 : f32
    %11 = vector.broadcast %cst_7 : f32 to vector<32x256xf32>
    %12 = arith.mulf %8, %11 : vector<32x256xf32>
    %13 = math.erf %12 : vector<32x256xf32>
    %cst_8 = arith.constant 1.000000e+00 : f32
    %14 = vector.broadcast %cst_8 : f32 to vector<32x256xf32>
    %15 = arith.addf %14, %13 : vector<32x256xf32>
    %16 = arith.mulf %10, %15 : vector<32x256xf32>
    %c0_9 = arith.constant 0 : index
    %c0_10 = arith.constant 0 : index
    %17 = vector.load %arg11[%c0_9, %c0_10] : memref<32x128xf32, #tpu.memory_space<vmem>>, vector<32x128xf32>
    %c0_11 = arith.constant 0 : index
    %c0_12 = arith.constant 0 : index
    %18 = vector.load %arg7[%c0_11, %c0_12] : memref<256x128xf32, #tpu.memory_space<vmem>>, vector<256x128xf32>
    %cst_13 = arith.constant dense<0.000000e+00> : vector<32x128xf32>
    %19 = tpu.matmul %16, %18, %cst_13 {dimension_numbers = #tpu.dot_dimension_numbers<[1], [0], [0], [1], [0, 0, 1, 1], [], []>} : vector<32x256xf32>, vector<256x128xf32>, vector<32x128xf32> -> vector<32x128xf32>
    %20 = arith.addf %17, %19 : vector<32x128xf32>
    %c0_14 = arith.constant 0 : index
    %c0_15 = arith.constant 0 : index
    %21 = vector.load %arg11[%c0_14, %c0_15] : memref<32x128xf32, #tpu.memory_space<vmem>>, vector<32x128xf32>
    tpu.vector_store %arg11[%c0_14, %c0_15], %20 {strides = array<i32>} : memref<32x128xf32, #tpu.memory_space<vmem>>, vector<32x128xf32>,
    %c1_i32 = arith.constant 1 : i32
    %22 = arith.cmpi eq, %arg1, %c1_i32 : i32
    %23 = arith.extui %22 : i1 to i32
    %c0_i32_16 = arith.constant 0 : i32
    %24 = arith.cmpi ne, %23, %c0_i32_16 : i32
    scf.if %24 {
      %c0_17 = arith.constant 0 : index
      %c0_18 = arith.constant 0 : index
      %25 = vector.load %arg11[%c0_17, %c0_18] : memref<32x128xf32, #tpu.memory_space<vmem>>, vector<32x128xf32>
      %c0_19 = arith.constant 0 : index
      %c0_20 = arith.constant 0 : index
      %26 = vector.load %arg8[%c0_19, %c0_20] : memref<1x128xf32, #tpu.memory_space<vmem>>, vector<1x128xf32>
      %27 = vector.broadcast %26 : vector<1x128xf32> to vector<32x128xf32>
      %28 = arith.addf %25, %27 : vector<32x128xf32>
      %c0_21 = arith.constant 0 : index
      %c0_22 = arith.constant 0 : index
      %29 = vector.load %arg2[%c0_21, %c0_22] : memref<32x128xf32, #tpu.memory_space<vmem>>, vector<32x128xf32>
      %30 = arith.addf %28, %29 : vector<32x128xf32>
      %c0_23 = arith.constant 0 : index
      %c0_24 = arith.constant 0 : index
      %31 = vector.load %arg9[%c0_23, %c0_24] : memref<32x128xf32, #tpu.memory_space<vmem>>, vector<32x128xf32>
      tpu.vector_store %arg9[%c0_23, %c0_24], %30 {strides = array<i32>} : memref<32x128xf32, #tpu.memory_space<vmem>>, vector<32x128xf32>,
    } else {
    }
    return
  }
  func.func @transform_0(%arg0: i32, %arg1: i32) -> (i32, i32) {
    %c0_i32 = arith.constant 0 : i32
    %c0_i32_0 = arith.constant 0 : i32
    return %arg0, %c0_i32 : i32, i32
  }
  func.func @transform_1(%arg0: i32, %arg1: i32) -> (i32, i32) {
    %c0_i32 = arith.constant 0 : i32
    %c0_i32_0 = arith.constant 0 : i32
    %c0_i32_1 = arith.constant 0 : i32
    return %c0_i32, %c0_i32_0 : i32, i32
  }
  func.func @transform_2(%arg0: i32, %arg1: i32) -> (i32, i32) {
    %c0_i32 = arith.constant 0 : i32
    %c0_i32_0 = arith.constant 0 : i32
    %c0_i32_1 = arith.constant 0 : i32
    return %c0_i32, %c0_i32_0 : i32, i32
  }
  func.func @transform_3(%arg0: i32, %arg1: i32) -> (i32, i32) {
    %c0_i32 = arith.constant 0 : i32
    %c0_i32_0 = arith.constant 0 : i32
    return %c0_i32, %arg1 : i32, i32
  }
  func.func @transform_4(%arg0: i32, %arg1: i32) -> (i32, i32) {
    %c0_i32 = arith.constant 0 : i32
    %c0_i32_0 = arith.constant 0 : i32
    return %c0_i32, %arg1 : i32, i32
  }
  func.func @transform_5(%arg0: i32, %arg1: i32) -> (i32, i32) {
    %c0_i32 = arith.constant 0 : i32
    %c0_i32_0 = arith.constant 0 : i32
    return %arg1, %c0_i32 : i32, i32
  }
  func.func @transform_6(%arg0: i32, %arg1: i32) -> (i32, i32) {
    %c0_i32 = arith.constant 0 : i32
    %c0_i32_0 = arith.constant 0 : i32
    %c0_i32_1 = arith.constant 0 : i32
    return %c0_i32, %c0_i32_0 : i32, i32
  }
  func.func @transform_7(%arg0: i32, %arg1: i32) -> (i32, i32) {
    %c0_i32 = arith.constant 0 : i32
    %c0_i32_0 = arith.constant 0 : i32
    return %arg0, %c0_i32 : i32, i32
  }
}

</mosaic_0001>

<llo_original>
// kernel: transformer_forward.6
$region0: #{transformer_forward.6}
  #allocation0 [shape = 'u32[]', space=smem, size = 0x4, offset = 0x4, fixed_abs, tag = 'smem constant byte address 0x4 - core index']
  #allocation1 [shape = 'u32[144,128]{1,0:T(1,128)}', space=vmem, size = 0x12000, scoped, tag = 'internal scratch']
  %s0 = inlined_call_operand.vmem [shape: f32[32,128], index: 0, kind: input, shape index: {}]
  %s1 = inlined_call_operand.vmem [shape: f32[128,128], index: 1, kind: input, shape index: {}]
  %s2 = inlined_call_operand.vmem [shape: f32[1,128], index: 2, kind: input, shape index: {}]
  %s3 = inlined_call_operand.vmem [shape: f32[32,128], index: 3, kind: input, shape index: {}]
  %s4 = inlined_call_operand.vmem [shape: f32[32,128], index: 4, kind: output, shape index: {}]
  %s5 = sld [smem:[#allocation0]]
  $region26: #{transformer_forward.6} parent=0
    _
  %s7 = ssub.s32 1, %s5
  %s8 = scalar_select 0, %s7, %s5
  // Predicated region
  $region2: #{transformer_forward.6} parent=0 // pred_check
    _
  $region3: #{transformer_forward.6} parent=0 // pred_check_branch
    %10 = sbr.rel (0) target = $region5
  $region4: #{transformer_forward.6} parent=0 // pred_region
    _
  $region5: #{transformer_forward.6} parent=0 // pred_fallthru
    _
  // Predicated region
  $region6: #{transformer_forward.6} parent=0 // pred_check
    _
  $region7: #{transformer_forward.6} parent=0 // pred_check_branch
    %12 = sbr.rel (0) target = $region9
  $region8: #{transformer_forward.6} parent=0 // pred_region
    _
  $region9: #{transformer_forward.6} parent=0 // pred_fallthru
    _
  // Predicated region
  $region10: #{transformer_forward.6} parent=0 // pred_check
    _
  $region11: #{transformer_forward.6} parent=0 // pred_check_branch
    %14 = sbr.rel (0) target = $region13
  $region12: #{transformer_forward.6} parent=0 // pred_region
    _
  $region13: #{transformer_forward.6} parent=0 // pred_fallthru
    _
  // Predicated region
  $region14: #{transformer_forward.6} parent=0 // pred_check
    _
  $region15: #{transformer_forward.6} parent=0 // pred_check_branch
    %16 = sbr.rel (0) target = $region17
  $region16: #{transformer_forward.6} parent=0 // pred_region
    _
  $region17: #{transformer_forward.6} parent=0 // pred_fallthru
    _
  %v17 = vld [vmem:[%s0] sm:$0xff]
  %v18 = vld [vmem:[%s0 + $0x8] sm:$0xff]
  %v19 = vld [vmem:[%s0 + $0x10] sm:$0xff]
  %v20 = vld [vmem:[%s0 + $0x18] sm:$0xff]
  %v21 = vld [vmem:[%s1] sm:$0xff]
  %v22 = vld [vmem:[%s1 + $0x8] sm:$0xff]
  %v23 = vld [vmem:[%s1 + $0x10] sm:$0xff]
  %v24 = vld [vmem:[%s1 + $0x18] sm:$0xff]
  %v25 = vld [vmem:[%s1 + $0x20] sm:$0xff]
  %v26 = vld [vmem:[%s1 + $0x28] sm:$0xff]
  %v27 = vld [vmem:[%s1 + $0x30] sm:$0xff]
  %v28 = vld [vmem:[%s1 + $0x38] sm:$0xff]
  %v29 = vld [vmem:[%s1 + $0x40] sm:$0xff]
  %v30 = vld [vmem:[%s1 + $0x48] sm:$0xff]
  %v31 = vld [vmem:[%s1 + $0x50] sm:$0xff]
  %v32 = vld [vmem:[%s1 + $0x58] sm:$0xff]
  %v33 = vld [vmem:[%s1 + $0x60] sm:$0xff]
  %v34 = vld [vmem:[%s1 + $0x68] sm:$0xff]
  %v35 = vld [vmem:[%s1 + $0x70] sm:$0xff]
  %v36 = vld [vmem:[%s1 + $0x78] sm:$0xff]
  %v37 = vld [vmem:[%s2] sm:$0x1]
  %v39 = vlaneseq
  %v40 = vshrl.u32 %v39, 7
  %v41 = vsub.s32 0, %v40
  %v42 = vrot.slane %v37, %v41
  %44 = vmatprep.subr.mxu0 0.0
  %45 = vmatpush1.msra.mxu0 %v21
  %46 = vmatprep.subr.mxu0 0.0
  %47 = vmatpush1.msra.mxu0 %v22
  %48 = vmatprep.subr.mxu0 0.0
  %49 = vmatpush1.msra.mxu0 %v23
  %50 = vmatprep.subr.mxu0 0.0
  %51 = vmatpush1.msra.mxu0 %v24
  %52 = vmatprep.subr.mxu0 0.0
  %53 = vmatpush1.msra.mxu0 %v25
  %54 = vmatprep.subr.mxu0 0.0
  %55 = vmatpush1.msra.mxu0 %v26
  %56 = vmatprep.subr.mxu0 0.0
  %57 = vmatpush1.msra.mxu0 %v27
  %58 = vmatprep.subr.mxu0 0.0
  %59 = vmatpush1.msra.mxu0 %v28
  %60 = vmatprep.subr.mxu0 0.0
  %61 = vmatpush1.msra.mxu0 %v29
  %62 = vmatprep.subr.mxu0 0.0
  %63 = vmatpush1.msra.mxu0 %v30
  %64 = vmatprep.subr.mxu0 0.0
  %65 = vmatpush1.msra.mxu0 %v31
  %66 = vmatprep.subr.mxu0 0.0
  %67 = vmatpush1.msra.mxu0 %v32
  %68 = vmatprep.subr.mxu0 0.0
  %69 = vmatpush1.msra.mxu0 %v33
  %70 = vmatprep.subr.mxu0 0.0
  %71 = vmatpush1.msra.mxu0 %v34
  %72 = vmatprep.subr.mxu0 0.0
  %73 = vmatpush1.msra.mxu0 %v35
  %74 = vmatprep.subr.mxu0 0.0
  %75 = vmatpush1.msra.mxu0 %v36
  %76 = vmatprep.subr.mxu0 0.0
  %77 = vmatpush1.msra.mxu0 0.0
  %78 = vmatprep.subr.mxu0 0.0
  %79 = vmatpush1.msra.mxu0 0.0
  %80 = vmatprep.subr.mxu0 0.0
  %81 = vmatpush1.msra.mxu0 0.0
  %82 = vmatprep.subr.mxu0 0.0
  %83 = vmatpush1.msra.mxu0 0.0
  %84 = vmatprep.subr.mxu0 0.0
  %85 = vmatpush1.msra.mxu0 0.0
  %86 = vmatprep.subr.mxu0 0.0
  %87 = vmatpush1.msra.mxu0 0.0
  %88 = vmatprep.subr.mxu0 0.0
  %89 = vmatpush1.msra.mxu0 0.0
  %90 = vmatprep.subr.mxu0 0.0
  %91 = vmatpush1.msra.mxu0 0.0
  %92 = vmatprep.subr.mxu0 0.0
  %93 = vmatpush1.msra.mxu0 0.0
  %94 = vmatprep.subr.mxu0 0.0
  %95 = vmatpush1.msra.mxu0 0.0
  %96 = vmatprep.subr.mxu0 0.0
  %97 = vmatpush1.msra.mxu0 0.0
  %98 = vmatprep.subr.mxu0 0.0
  %99 = vmatpush1.msra.mxu0 0.0
  %100 = vmatprep.subr.mxu0 0.0
  %101 = vmatpush1.msra.mxu0 0.0
  %102 = vmatprep.subr.mxu0 0.0
  %103 = vmatpush1.msra.mxu0 0.0
  %104 = vmatprep.subr.mxu0 0.0
  %105 = vmatpush1.msra.mxu0 0.0
  %106 = vmatprep.subr.mxu0 0.0
  %107 = vmatpush1.msra.mxu0 0.0
  %108 = vmatprep.mubr.f32.mxu0 0.0
  %109 = vmatmul.mubr.f32.gmra.mrb[0].mxu0 %v17
  %v110 = vpop.f32.mrb[0].mxu0
  %v111 = vadd.f32 %v42, %v110
  %v112 = vpop.f32.mrb[0].mxu0
  %113 = vmatprep.mubr.f32.mxu0 0.0
  %114 = vmatmul.mubr.f32.gmra.mrb[0].mxu0 %v18
  %v115 = vpop.f32.mrb[0].mxu0
  %v116 = vadd.f32 %v42, %v115
  %v117 = vpop.f32.mrb[0].mxu0
  %118 = vmatprep.mubr.f32.mxu0 0.0
  %119 = vmatmul.mubr.f32.gmra.mrb[0].mxu0 %v19
  %v120 = vpop.f32.mrb[0].mxu0
  %v121 = vadd.f32 %v42, %v120
  %v122 = vpop.f32.mrb[0].mxu0
  %123 = vmatprep.mubr.f32.mxu0 0.0
  %124 = vmatmul.mubr.f32.gmra.mrb[0].mxu0 %v20
  %v125 = vpop.f32.mrb[0].mxu0
  %v126 = vadd.f32 %v42, %v125
  %v127 = vpop.f32.mrb[0].mxu0
  %128 = vdwg.mxu0
  %v129 = vld [vmem:[%s3] sm:$0xff]
  %v130 = vld [vmem:[%s3 + $0x8] sm:$0xff]
  %v131 = vld [vmem:[%s3 + $0x10] sm:$0xff]
  %v132 = vld [vmem:[%s3 + $0x18] sm:$0xff]
  %v133 = vadd.f32 %v111, %v129
  %v134 = vadd.f32 %v116, %v130
  %v135 = vadd.f32 %v121, %v131
  %v136 = vadd.f32 %v126, %v132
  %137 = vst [vmem:[%s4] sm:$0xff] %v133
  %138 = vst [vmem:[%s4 + $0x8] sm:$0xff] %v134
  %139 = vst [vmem:[%s4 + $0x10] sm:$0xff] %v135
  %140 = vst [vmem:[%s4 + $0x18] sm:$0xff] %v136
  // Predicated region
  $region18: #{transformer_forward.6} parent=0 // pred_check
    _
  $region19: #{transformer_forward.6} parent=0 // pred_check_branch
    %142 = sbr.rel (0) target = $region21
  $region20: #{transformer_forward.6} parent=0 // pred_region
    _
  $region21: #{transformer_forward.6} parent=0 // pred_fallthru
    _
  // Predicated region
  $region22: #{transformer_forward.6} parent=0 // pred_check
    _
  $region23: #{transformer_forward.6} parent=0 // pred_check_branch
    %144 = sbr.rel (0) target = $region25
  $region24: #{transformer_forward.6} parent=0 // pred_region
    _
  $region25: #{transformer_forward.6} parent=0 // pred_fallthru
    _

// kernel: transformer_forward.4
$region0: #{transformer_forward.4}
  #allocation0 [shape = 'u32[]', space=smem, size = 0x4, offset = 0x4, fixed_abs, tag = 'smem constant byte address 0x4 - core index']
  #allocation1 [shape = 'u32[144,128]{1,0:T(1,128)}', space=vmem, size = 0x12000, scoped, tag = 'internal scratch']
  #allocation2 [shape = 'f32[32,128]{1,0:T(8,128)}', space=vmem, size = 0x4000, scoped, tag = 'scratch operand']
  %s0 = inlined_call_operand.hbm [shape: f32[32,128], index: 0, kind: input, shape index: {}]
  %s1 = inlined_call_operand.hbm [shape: f32[1,128], index: 1, kind: input, shape index: {}]
  %s2 = inlined_call_operand.hbm [shape: f32[1,128], index: 2, kind: input, shape index: {}]
  %s3 = inlined_call_operand.hbm [shape: f32[128,384], index: 3, kind: input, shape index: {}]
  %s4 = inlined_call_operand.vmem [shape: f32[1,384], index: 4, kind: input, shape index: {}]
  %s5 = inlined_call_operand.vmem [shape: f32[32,384], index: 5, kind: output, shape index: {}]
  %s6 = sld [smem:[#allocation0]]
  $region50: #{transformer_forward.4} parent=0
    _
  %s8 = ssub.s32 1, %s6
  %s9 = scalar_select 0, %s8, %s6
  $region1: #{transformer_forward.4} parent=0
    #allocation3 [shape = 'u8[16384]{0}', space=vmem, size = 0x4000, scoped, tag = 'input window, operand 0, single buffered']
    #allocation4 [shape = 's32[1]{0}', space=sflag, size = 0x4, scoped, tag = 'scoped memory for transformer_forward.4']
    #allocation5 [shape = 'u8[512]{0}', space=vmem, size = 0x400, scoped, tag = 'input window, operand 1, single buffered']
    #allocation6 [shape = 's32[1]{0}', space=sflag, size = 0x4, scoped, tag = 'scoped memory for transformer_forward.4']
    #allocation7 [shape = 'u8[512]{0}', space=vmem, size = 0x400, scoped, tag = 'input window, operand 2, single buffered']
    #allocation8 [shape = 'u8[196608]{0}', space=vmem, size = 0x30000, scoped, tag = 'input window, operand 3, single buffered']
    #allocation9 [shape = 's32[1]{0}', space=sflag, size = 0x4, scoped, tag = 'scoped memory for transformer_forward.4']
    %10 = vsyncpa [#allocation4], 0
    %11 = vsyncpa [#allocation6], 0
    %12 = vsyncpa [#allocation9], 0
    // Predicated region
    $region2: #{transformer_forward.4} parent=1 // pred_check
      _
    $region3: #{transformer_forward.4} parent=1 // pred_check_branch
      %14 = sbr.rel (0) target = $region5
    $region4: #{transformer_forward.4} parent=1 // pred_region
      %s16 = ssub.s32 512, 512
      %17 = vsyncadd [#allocation4], %s16
      %s18 = sshll.u32 [#allocation3], 4
      %s19 = int_to_ptr.vmem [resolvable:$true] %s18
      %24 = dma.hbm_to_vmem [thread:$0]  %s0, 512, %s19, [#allocation4], 128, 128, 8
    $region5: #{transformer_forward.4} parent=1 // pred_fallthru
      _
    // Predicated region
    $region6: #{transformer_forward.4} parent=1 // pred_check
      _
    $region7: #{transformer_forward.4} parent=1 // pred_check_branch
      %26 = sbr.rel (0) target = $region9
    $region8: #{transformer_forward.4} parent=1 // pred_region
      %s28 = ssub.s32 16, 16
      %29 = vsyncadd [#allocation6], %s28
      %s31 = sshll.u32 [#allocation5], 4
      %s32 = int_to_ptr.vmem [resolvable:$true] %s31
      %34 = dma.hbm_to_vmem [thread:$0]  %s1, 16, %s32, [#allocation6]
    $region9: #{transformer_forward.4} parent=1 // pred_fallthru
      _
    // Predicated region
    $region10: #{transformer_forward.4} parent=1 // pred_check
      _
    $region11: #{transformer_forward.4} parent=1 // pred_check_branch
      %36 = sbr.rel (0) target = $region13
    $region12: #{transformer_forward.4} parent=1 // pred_region
      %s38 = ssub.s32 16, 16
      %39 = vsyncadd [#allocation6], %s38
      %s41 = sshll.u32 [#allocation7], 4
      %s42 = int_to_ptr.vmem [resolvable:$true] %s41
      %44 = dma.hbm_to_vmem [thread:$0]  %s2, 16, %s42, [#allocation6]
    $region13: #{transformer_forward.4} parent=1 // pred_fallthru
      _
    // Predicated region
    $region14: #{transformer_forward.4} parent=1 // pred_check
      _
    $region15: #{transformer_forward.4} parent=1 // pred_check_branch
      %46 = sbr.rel (0) target = $region17
    $region16: #{transformer_forward.4} parent=1 // pred_region
      %s48 = ssub.s32 6144, 6144
      %49 = vsyncadd [#allocation9], %s48
      %s50 = sshll.u32 [#allocation8], 4
      %s51 = int_to_ptr.vmem [resolvable:$true] %s50
      %56 = dma.hbm_to_vmem [thread:$0]  %s3, 6144, %s51, [#allocation9], 384, 384, 24
    $region17: #{transformer_forward.4} parent=1 // pred_fallthru
      _
    // Predicated region
    $region18: #{transformer_forward.4} parent=1 // pred_check
      _
    $region19: #{transformer_forward.4} parent=1 // pred_check_branch
      %58 = sbr.rel (0) target = $region21
    $region20: #{transformer_forward.4} parent=1 // pred_region
      _
    $region21: #{transformer_forward.4} parent=1 // pred_fallthru
      _
    // Predicated region
    $region22: #{transformer_forward.4} parent=1 // pred_check
      _
    $region23: #{transformer_forward.4} parent=1 // pred_check_branch
      %60 = sbr.rel (0) target = $region25
    $region24: #{transformer_forward.4} parent=1 // pred_region
      %61 = dma.done [#allocation4], 512
    $region25: #{transformer_forward.4} parent=1 // pred_fallthru
      _
    // Predicated region
    $region26: #{transformer_forward.4} parent=1 // pred_check
      _
    $region27: #{transformer_forward.4} parent=1 // pred_check_branch
      %63 = sbr.rel (0) target = $region29
    $region28: #{transformer_forward.4} parent=1 // pred_region
      %64 = dma.done [#allocation6], 16
    $region29: #{transformer_forward.4} parent=1 // pred_fallthru
      _
    // Predicated region
    $region30: #{transformer_forward.4} parent=1 // pred_check
      _
    $region31: #{transformer_forward.4} parent=1 // pred_check_branch
      %66 = sbr.rel (0) target = $region33
    $region32: #{transformer_forward.4} parent=1 // pred_region
      %67 = dma.done [#allocation6], 16
    $region33: #{transformer_forward.4} parent=1 // pred_fallthru
      _
    // Predicated region
    $region34: #{transformer_forward.4} parent=1 // pred_check
      _
    $region35: #{transformer_forward.4} parent=1 // pred_check_branch
      %69 = sbr.rel (0) target = $region37
    $region36: #{transformer_forward.4} parent=1 // pred_region
      %70 = dma.done [#allocation9], 6144
    $region37: #{transformer_forward.4} parent=1 // pred_fallthru
      _
    %p71 = scmp.eq.s32.totalorder 0, 0
    // Predicated region
    $region38: #{transformer_forward.4} parent=1 // pred_check
      %p72 = pneg %p71
    $region39: #{transformer_forward.4} parent=1 // pred_check_branch
      %74 = sbr.rel (%p72) target = $region41
    $region40: #{transformer_forward.4} parent=1 // pred_region
      %v75 = vld [vmem:[#allocation3] sm:$0xff]
      %v76 = vld [vmem:[#allocation3 + $0x8] sm:$0xff]
      %v77 = vld [vmem:[#allocation3 + $0x10] sm:$0xff]
      %v78 = vld [vmem:[#allocation3 + $0x18] sm:$0xff]
      %v79 = vld [vmem:[#allocation5] sm:$0x1]
      %v80 = vld [vmem:[#allocation7] sm:$0x1]
      %81 = vadd.xlane.f32.xlu0 %v75
      %v82 = vpop.xlane.xlu0 %81
      %83 = vadd.xlane.f32.xlu0 %v76
      %v84 = vpop.xlane.xlu0 %83
      %85 = vadd.xlane.f32.xlu0 %v77
      %v86 = vpop.xlane.xlu0 %85
      %87 = vadd.xlane.f32.xlu0 %v78
      %v88 = vpop.xlane.xlu0 %87
      %v89 = vrcp.pop 128.0
      %v90 = vmul.f32 %v82, %v89
      %v91 = vmul.f32 %v84, %v89
      %v92 = vmul.f32 %v86, %v89
      %v93 = vmul.f32 %v88, %v89
      %v94 = vsub.f32 %v75, %v90
      %v95 = vsub.f32 %v76, %v91
      %v96 = vsub.f32 %v77, %v92
      %v97 = vsub.f32 %v78, %v93
      %v98 = vmul.f32 %v94, %v94
      %v99 = vmul.f32 %v95, %v95
      %v100 = vmul.f32 %v96, %v96
      %v101 = vmul.f32 %v97, %v97
      %102 = vadd.xlane.f32.xlu0 %v98
      %v103 = vpop.xlane.xlu0 %102
      %104 = vadd.xlane.f32.xlu0 %v99
      %v105 = vpop.xlane.xlu0 %104
      %106 = vadd.xlane.f32.xlu0 %v100
      %v107 = vpop.xlane.xlu0 %106
      %108 = vadd.xlane.f32.xlu0 %v101
      %v109 = vpop.xlane.xlu0 %108
      %v110 = vmul.f32 %v103, %v89
      %v111 = vmul.f32 %v105, %v89
      %v112 = vmul.f32 %v107, %v89
      %v113 = vmul.f32 %v109, %v89
      %v114 = vadd.f32 %v110, 1e-05
      %v115 = vadd.f32 %v111, 1e-05
      %v116 = vadd.f32 %v112, 1e-05
      %v117 = vadd.f32 %v113, 1e-05
      %v118 = vrsqrt.pop %v114
      %v119 = vrsqrt.pop %v115
      %v120 = vrsqrt.pop %v116
      %v121 = vrsqrt.pop %v117
      %v122 = vmul.f32 %v94, %v118
      %v123 = vmul.f32 %v95, %v119
      %v124 = vmul.f32 %v96, %v120
      %v125 = vmul.f32 %v97, %v121
      %v127 = vlaneseq
      %v128 = vshrl.u32 %v127, 7
      %v129 = vsub.s32 0, %v128
      %v130 = vrot.slane %v79, %v129
      %v132 = vmul.f32 %v122, %v130
      %v133 = vmul.f32 %v123, %v130
      %v134 = vmul.f32 %v124, %v130
      %v135 = vmul.f32 %v125, %v130
      %v137 = vlaneseq
      %v138 = vshrl.u32 %v137, 7
      %v139 = vsub.s32 0, %v138
      %v140 = vrot.slane %v80, %v139
      %v142 = vadd.f32 %v132, %v140
      %v143 = vadd.f32 %v133, %v140
      %v144 = vadd.f32 %v134, %v140
      %v145 = vadd.f32 %v135, %v140
      %146 = vst [vmem:[#allocation2] sm:$0xff] %v142
      %147 = vst [vmem:[#allocation2 + $0x8] sm:$0xff] %v143
      %148 = vst [vmem:[#allocation2 + $0x10] sm:$0xff] %v144
      %149 = vst [vmem:[#allocation2 + $0x18] sm:$0xff] %v145
    $region41: #{transformer_forward.4} parent=1 // pred_fallthru
      _
    %v150 = vld [vmem:[#allocation2] sm:$0xff]
    %v151 = vld [vmem:[#allocation2 + $0x8] sm:$0xff]
    %v152 = vld [vmem:[#allocation2 + $0x10] sm:$0xff]
    %v153 = vld [vmem:[#allocation2 + $0x18] sm:$0xff]
    %v154 = vld [vmem:[#allocation8] sm:$0xff]
    %v155 = vld [vmem:[#allocation8 + $0x8] sm:$0xff]
    %v156 = vld [vmem:[#allocation8 + $0x10] sm:$0xff]
    %v157 = vld [vmem:[#allocation8 + $0x18] sm:$0xff]
    %v158 = vld [vmem:[#allocation8 + $0x20] sm:$0xff]
    %v159 = vld [vmem:[#allocation8 + $0x28] sm:$0xff]
    %v160 = vld [vmem:[#allocation8 + $0x30] sm:$0xff]
    %v161 = vld [vmem:[#allocation8 + $0x38] sm:$0xff]
    %v162 = vld [vmem:[#allocation8 + $0x40] sm:$0xff]
    %v163 = vld [vmem:[#allocation8 + $0x48] sm:$0xff]
    %v164 = vld [vmem:[#allocation8 + $0x50] sm:$0xff]
    %v165 = vld [vmem:[#allocation8 + $0x58] sm:$0xff]
    %v166 = vld [vmem:[#allocation8 + $0x60] sm:$0xff]
    %v167 = vld [vmem:[#allocation8 + $0x68] sm:$0xff]
    %v168 = vld [vmem:[#allocation8 + $0x70] sm:$0xff]
    %v169 = vld [vmem:[#allocation8 + $0x78] sm:$0xff]
    %v170 = vld [vmem:[#allocation8 + $0x80] sm:$0xff]
    %v171 = vld [vmem:[#allocation8 + $0x88] sm:$0xff]
    %v172 = vld [vmem:[#allocation8 + $0x90] sm:$0xff]
    %v173 = vld [vmem:[#allocation8 + $0x98] sm:$0xff]
    %v174 = vld [vmem:[#allocation8 + $0xa0] sm:$0xff]
    %v175 = vld [vmem:[#allocation8 + $0xa8] sm:$0xff]
    %v176 = vld [vmem:[#allocation8 + $0xb0] sm:$0xff]
    %v177 = vld [vmem:[#allocation8 + $0xb8] sm:$0xff]
    %v178 = vld [vmem:[#allocation8 + $0xc0] sm:$0xff]
    %v179 = vld [vmem:[#allocation8 + $0xc8] sm:$0xff]
    %v180 = vld [vmem:[#allocation8 + $0xd0] sm:$0xff]
    %v181 = vld [vmem:[#allocation8 + $0xd8] sm:$0xff]
    %v182 = vld [vmem:[#allocation8 + $0xe0] sm:$0xff]
    %v183 = vld [vmem:[#allocation8 + $0xe8] sm:$0xff]
    %v184 = vld [vmem:[#allocation8 + $0xf0] sm:$0xff]
    %v185 = vld [vmem:[#allocation8 + $0xf8] sm:$0xff]
    %v186 = vld [vmem:[#allocation8 + $0x100] sm:$0xff]
    %v187 = vld [vmem:[#allocation8 + $0x108] sm:$0xff]
    %v188 = vld [vmem:[#allocation8 + $0x110] sm:$0xff]
    %v189 = vld [vmem:[#allocation8 + $0x118] sm:$0xff]
    %v190 = vld [vmem:[#allocation8 + $0x120] sm:$0xff]
    %v191 = vld [vmem:[#allocation8 + $0x128] sm:$0xff]
    %v192 = vld [vmem:[#allocation8 + $0x130] sm:$0xff]
    %v193 = vld [vmem:[#allocation8 + $0x138] sm:$0xff]
    %v194 = vld [vmem:[#allocation8 + $0x140] sm:$0xff]
    %v195 = vld [vmem:[#allocation8 + $0x148] sm:$0xff]
    %v196 = vld [vmem:[#allocation8 + $0x150] sm:$0xff]
    %v197 = vld [vmem:[#allocation8 + $0x158] sm:$0xff]
    %v198 = vld [vmem:[#allocation8 + $0x160] sm:$0xff]
    %v199 = vld [vmem:[#allocation8 + $0x168] sm:$0xff]
    %v200 = vld [vmem:[#allocation8 + $0x170] sm:$0xff]
    %v201 = vld [vmem:[#allocation8 + $0x178] sm:$0xff]
    %v202 = vld [vmem:[%s4] sm:$0x7]
    %v204 = vlaneseq
    %v205 = vshrl.u32 %v204, 7
    %v206 = vsub.s32 0, %v205
    %v207 = vrot.slane %v202, %v206
    %v208 = vlaneseq
    %v209 = vshrl.u32 %v208, 7
    %v210 = vsub.s32 1, %v209
    %v211 = vrot.slane %v202, %v210
    %v212 = vlaneseq
    %v213 = vshrl.u32 %v212, 7
    %v214 = vsub.s32 2, %v213
    %v215 = vrot.slane %v202, %v214
    %219 = vmatprep.subr.mxu0 %v155
    %220 = vmatpush1.msra.mxu0 %v154
    %221 = vmatprep.subr.mxu0 %v158
    %222 = vmatpush1.msra.mxu0 %v157
    %223 = vmatprep.subr.mxu0 %v161
    %224 = vmatpush1.msra.mxu0 %v160
    %225 = vmatprep.subr.mxu0 %v164
    %226 = vmatpush1.msra.mxu0 %v163
    %227 = vmatprep.subr.mxu0 %v167
    %228 = vmatpush1.msra.mxu0 %v166
    %229 = vmatprep.subr.mxu0 %v170
    %230 = vmatpush1.msra.mxu0 %v169
    %231 = vmatprep.subr.mxu0 %v173
    %232 = vmatpush1.msra.mxu0 %v172
    %233 = vmatprep.subr.mxu0 %v176
    %234 = vmatpush1.msra.mxu0 %v175
    %235 = vmatprep.subr.mxu0 %v179
    %236 = vmatpush1.msra.mxu0 %v178
    %237 = vmatprep.subr.mxu0 %v182
    %238 = vmatpush1.msra.mxu0 %v181
    %239 = vmatprep.subr.mxu0 %v185
    %240 = vmatpush1.msra.mxu0 %v184
    %241 = vmatprep.subr.mxu0 %v188
    %242 = vmatpush1.msra.mxu0 %v187
    %243 = vmatprep.subr.mxu0 %v191
    %244 = vmatpush1.msra.mxu0 %v190
    %245 = vmatprep.subr.mxu0 %v194
    %246 = vmatpush1.msra.mxu0 %v193
    %247 = vmatprep.subr.mxu0 %v197
    %248 = vmatpush1.msra.mxu0 %v196
    %249 = vmatprep.subr.mxu0 %v200
    %250 = vmatpush1.msra.mxu0 %v199
    %251 = vmatprep.subr.mxu0 0.0
    %252 = vmatpush1.msra.mxu0 0.0
    %253 = vmatprep.subr.mxu0 0.0
    %254 = vmatpush1.msra.mxu0 0.0
    %255 = vmatprep.subr.mxu0 0.0
    %256 = vmatpush1.msra.mxu0 0.0
    %257 = vmatprep.subr.mxu0 0.0
    %258 = vmatpush1.msra.mxu0 0.0
    %259 = vmatprep.subr.mxu0 0.0
    %260 = vmatpush1.msra.mxu0 0.0
    %261 = vmatprep.subr.mxu0 0.0
    %262 = vmatpush1.msra.mxu0 0.0
    %263 = vmatprep.subr.mxu0 0.0
    %264 = vmatpush1.msra.mxu0 0.0
    %265 = vmatprep.subr.mxu0 0.0
    %266 = vmatpush1.msra.mxu0 0.0
    %267 = vmatprep.subr.mxu0 0.0
    %268 = vmatpush1.msra.mxu0 0.0
    %269 = vmatprep.subr.mxu0 0.0
    %270 = vmatpush1.msra.mxu0 0.0
    %271 = vmatprep.subr.mxu0 0.0
    %272 = vmatpush1.msra.mxu0 0.0
    %273 = vmatprep.subr.mxu0 0.0
    %274 = vmatpush1.msra.mxu0 0.0
    %275 = vmatprep.subr.mxu0 0.0
    %276 = vmatpush1.msra.mxu0 0.0
    %277 = vmatprep.subr.mxu0 0.0
    %278 = vmatpush1.msra.mxu0 0.0
    %279 = vmatprep.subr.mxu0 0.0
    %280 = vmatpush1.msra.mxu0 0.0
    %281 = vmatprep.subr.mxu0 0.0
    %282 = vmatpush1.msra.mxu0 0.0
    %283 = vmatprep.mubr.f32.mxu0 0.0
    %284 = vmatmul.mubr.f32.gmra.mrb[0].mxu0 %v150
    %v285 = vpop.f32.mrb[0].mxu0
    %v286 = vadd.f32 %v207, %v285
    %v287 = vpop.f32.mrb[0].mxu0
    %v288 = vadd.f32 %v211, %v287
    %289 = vmatprep.mubr.f32.mxu0 0.0
    %290 = vmatmul.mubr.f32.gmra.mrb[0].mxu0 %v151
    %v291 = vpop.f32.mrb[0].mxu0
    %v292 = vadd.f32 %v207, %v291
    %v293 = vpop.f32.mrb[0].mxu0
    %v294 = vadd.f32 %v211, %v293
    %295 = vmatprep.mubr.f32.mxu0 0.0
    %296 = vmatmul.mubr.f32.gmra.mrb[0].mxu0 %v152
    %v297 = vpop.f32.mrb[0].mxu0
    %v298 = vadd.f32 %v207, %v297
    %v299 = vpop.f32.mrb[0].mxu0
    %v300 = vadd.f32 %v211, %v299
    %301 = vmatprep.mubr.f32.mxu0 0.0
    %302 = vmatmul.mubr.f32.gmra.mrb[0].mxu0 %v153
    %v303 = vpop.f32.mrb[0].mxu0
    %v304 = vadd.f32 %v207, %v303
    %v305 = vpop.f32.mrb[0].mxu0
    %v306 = vadd.f32 %v211, %v305
    %307 = vdwg.mxu0
    %308 = vmatprep.subr.mxu0 0.0
    %309 = vmatpush1.msra.mxu0 %v156
    %310 = vmatprep.subr.mxu0 0.0
    %311 = vmatpush1.msra.mxu0 %v159
    %312 = vmatprep.subr.mxu0 0.0
    %313 = vmatpush1.msra.mxu0 %v162
    %314 = vmatprep.subr.mxu0 0.0
    %315 = vmatpush1.msra.mxu0 %v165
    %316 = vmatprep.subr.mxu0 0.0
    %317 = vmatpush1.msra.mxu0 %v168
    %318 = vmatprep.subr.mxu0 0.0
    %319 = vmatpush1.msra.mxu0 %v171
    %320 = vmatprep.subr.mxu0 0.0
    %321 = vmatpush1.msra.mxu0 %v174
    %322 = vmatprep.subr.mxu0 0.0
    %323 = vmatpush1.msra.mxu0 %v177
    %324 = vmatprep.subr.mxu0 0.0
    %325 = vmatpush1.msra.mxu0 %v180
    %326 = vmatprep.subr.mxu0 0.0
    %327 = vmatpush1.msra.mxu0 %v183
    %328 = vmatprep.subr.mxu0 0.0
    %329 = vmatpush1.msra.mxu0 %v186
    %330 = vmatprep.subr.mxu0 0.0
    %331 = vmatpush1.msra.mxu0 %v189
    %332 = vmatprep.subr.mxu0 0.0
    %333 = vmatpush1.msra.mxu0 %v192
    %334 = vmatprep.subr.mxu0 0.0
    %335 = vmatpush1.msra.mxu0 %v195
    %336 = vmatprep.subr.mxu0 0.0
    %337 = vmatpush1.msra.mxu0 %v198
    %338 = vmatprep.subr.mxu0 0.0
    %339 = vmatpush1.msra.mxu0 %v201
    %340 = vmatprep.subr.mxu0 0.0
    %341 = vmatpush1.msra.mxu0 0.0
    %342 = vmatprep.subr.mxu0 0.0
    %343 = vmatpush1.msra.mxu0 0.0
    %344 = vmatprep.subr.mxu0 0.0
    %345 = vmatpush1.msra.mxu0 0.0
    %346 = vmatprep.subr.mxu0 0.0
    %347 = vmatpush1.msra.mxu0 0.0
    %348 = vmatprep.subr.mxu0 0.0
    %349 = vmatpush1.msra.mxu0 0.0
    %350 = vmatprep.subr.mxu0 0.0
    %351 = vmatpush1.msra.mxu0 0.0
    %352 = vmatprep.subr.mxu0 0.0
    %353 = vmatpush1.msra.mxu0 0.0
    %354 = vmatprep.subr.mxu0 0.0
    %355 = vmatpush1.msra.mxu0 0.0
    %356 = vmatprep.subr.mxu0 0.0
    %357 = vmatpush1.msra.mxu0 0.0
    %358 = vmatprep.subr.mxu0 0.0
    %359 = vmatpush1.msra.mxu0 0.0
    %360 = vmatprep.subr.mxu0 0.0
    %361 = vmatpush1.msra.mxu0 0.0
    %362 = vmatprep.subr.mxu0 0.0
    %363 = vmatpush1.msra.mxu0 0.0
    %364 = vmatprep.subr.mxu0 0.0
    %365 = vmatpush1.msra.mxu0 0.0
    %366 = vmatprep.subr.mxu0 0.0
    %367 = vmatpush1.msra.mxu0 0.0
    %368 = vmatprep.subr.mxu0 0.0
    %369 = vmatpush1.msra.mxu0 0.0
    %370 = vmatprep.subr.mxu0 0.0
    %371 = vmatpush1.msra.mxu0 0.0
    %372 = vmatprep.mubr.f32.mxu0 0.0
    %373 = vmatmul.mubr.f32.gmra.mrb[0].mxu0 %v150
    %v374 = vpop.f32.mrb[0].mxu0
    %v375 = vadd.f32 %v215, %v374
    %v376 = vpop.f32.mrb[0].mxu0
    %377 = vmatprep.mubr.f32.mxu0 0.0
    %378 = vmatmul.mubr.f32.gmra.mrb[0].mxu0 %v151
    %v379 = vpop.f32.mrb[0].mxu0
    %v380 = vadd.f32 %v215, %v379
    %v381 = vpop.f32.mrb[0].mxu0
    %382 = vmatprep.mubr.f32.mxu0 0.0
    %383 = vmatmul.mubr.f32.gmra.mrb[0].mxu0 %v152
    %v384 = vpop.f32.mrb[0].mxu0
    %v385 = vadd.f32 %v215, %v384
    %v386 = vpop.f32.mrb[0].mxu0
    %387 = vmatprep.mubr.f32.mxu0 0.0
    %388 = vmatmul.mubr.f32.gmra.mrb[0].mxu0 %v153
    %v389 = vpop.f32.mrb[0].mxu0
    %v390 = vadd.f32 %v215, %v389
    %v391 = vpop.f32.mrb[0].mxu0
    %392 = vdwg.mxu0
    %393 = vst [vmem:[%s5] sm:$0xff] %v286
    %394 = vst [vmem:[%s5 + $0x8] sm:$0xff] %v288
    %395 = vst [vmem:[%s5 + $0x10] sm:$0xff] %v375
    %396 = vst [vmem:[%s5 + $0x18] sm:$0xff] %v292
    %397 = vst [vmem:[%s5 + $0x20] sm:$0xff] %v294
    %398 = vst [vmem:[%s5 + $0x28] sm:$0xff] %v380
    %399 = vst [vmem:[%s5 + $0x30] sm:$0xff] %v298
    %400 = vst [vmem:[%s5 + $0x38] sm:$0xff] %v300
    %401 = vst [vmem:[%s5 + $0x40] sm:$0xff] %v385
    %402 = vst [vmem:[%s5 + $0x48] sm:$0xff] %v304
    %403 = vst [vmem:[%s5 + $0x50] sm:$0xff] %v306
    %404 = vst [vmem:[%s5 + $0x58] sm:$0xff] %v390
    // Predicated region
    $region42: #{transformer_forward.4} parent=1 // pred_check
      _
    $region43: #{transformer_forward.4} parent=1 // pred_check_branch
      %406 = sbr.rel (0) target = $region45
    $region44: #{transformer_forward.4} parent=1 // pred_region
      _
    $region45: #{transformer_forward.4} parent=1 // pred_fallthru
      _
    // Predicated region
    $region46: #{transformer_forward.4} parent=1 // pred_check
      _
    $region47: #{transformer_forward.4} parent=1 // pred_check_branch
      %408 = sbr.rel (0) target = $region49
    $region48: #{transformer_forward.4} parent=1 // pred_region
      _
    $region49: #{transformer_forward.4} parent=1 // pred_fallthru
      _
    %409 = vsyncpa [#allocation4], 1
    %410 = vsyncpa [#allocation6], 1
    %411 = vsyncpa [#allocation9], 1

// kernel: transformer_forward.5
$region0: #{transformer_forward.5}
  #allocation0 [shape = 'u32[]', space=smem, size = 0x4, offset = 0x4, fixed_abs, tag = 'smem constant byte address 0x4 - core index']
  #allocation1 [shape = 'u32[144,128]{1,0:T(1,128)}', space=vmem, size = 0x12000, scoped, tag = 'internal scratch']
  %s0 = inlined_call_operand.vmem [shape: f32[2,16,384], index: 0, kind: input, shape index: {}]
  %s1 = inlined_call_operand.vmem [shape: f32[2,16,128], index: 1, kind: output, shape index: {}]
  %s2 = sld [smem:[#allocation0]]
  $region37: #{transformer_forward.5} parent=0
    _
  %s4 = ssub.s32 1, %s2
  %s5 = scalar_select 0, %s4, %s2
  loop: start=0, step=1, limit=4
  $region2: #{transformer_forward.5} parent=0 // loop_pre_header
    _
  $region3: #{transformer_forward.5} parent=0 // loop_header
    %s7 = sphi 0, %s11
    %p8 = scmp.ge.s32.totalorder %s7, 4
    %s17 = sphi 0, %s19
    %s20 = sphi 0, %s17
    %s21 = sphi 0, %s20
    %s37 = sphi 0, %s21
    %s43 = sphi 0, %s45
    %s46 = sphi 0, %s43
    %s47 = sphi 0, %s46
    %s63 = sphi 0, %s47
  $region4: #{transformer_forward.5} parent=0 // loop_header_branch
    %10 = sbr.rel (%p8) target = $region8
  $region5: #{transformer_forward.5} parent=0 // loop_body
    %s12 = ssub.s32 %s7, 1
    %s13 = ssub.s32 %s7, 2
    %s14 = sadd.s32 %s7, 1
    %s15 = ssub.s32 %s7, %s14
    %p16 = scmp.eq.s32.totalorder %s15, 0
    %s18 = sadd.s32 %s17, 1
    %s19 = scalar_select %p16, %s17, %s18
    %p22 = pneg %p16
    %p23 = scmp.eq.s32.totalorder %s7, 1
    %p24 = por %p22, %p23
    %p25 = scmp.ne.s32.totalorder %s17, %s20
    %p26 = scmp.eq.s32.totalorder %s7, 0
    %p27 = por %p25, %p26
    %p28 = scmp.ne.s32.totalorder %s17, %s20
    %p29 = scmp.eq.s32.totalorder %s12, 1
    %p30 = por %p28, %p29
    %p31 = scmp.ne.s32.totalorder %s20, %s21
    %p32 = scmp.eq.s32.totalorder %s12, 0
    %p33 = por %p31, %p32
    %p34 = scmp.ne.s32.totalorder %s20, %s21
    %p35 = scmp.eq.s32.totalorder %s13, 1
    %p36 = por %p34, %p35
    %p38 = scmp.ne.s32.totalorder %s21, %s37
    %p39 = scmp.eq.s32.totalorder %s13, 0
    %p40 = por %p38, %p39
    %s41 = ssub.s32 %s7, %s14
    %p42 = scmp.eq.s32.totalorder %s41, 0
    %s44 = sadd.s32 %s43, 1
    %s45 = scalar_select %p42, %s43, %s44
    %p48 = pneg %p42
    %p49 = scmp.eq.s32.totalorder %s7, 1
    %p50 = por %p48, %p49
    %p51 = scmp.ne.s32.totalorder %s43, %s46
    %p52 = scmp.eq.s32.totalorder %s7, 0
    %p53 = por %p51, %p52
    %p54 = scmp.ne.s32.totalorder %s43, %s46
    %p55 = scmp.eq.s32.totalorder %s12, 1
    %p56 = por %p54, %p55
    %p57 = scmp.ne.s32.totalorder %s46, %s47
    %p58 = scmp.eq.s32.totalorder %s12, 0
    %p59 = por %p57, %p58
    %p60 = scmp.ne.s32.totalorder %s46, %s47
    %p61 = scmp.eq.s32.totalorder %s13, 1
    %p62 = por %p60, %p61
    %p64 = scmp.ne.s32.totalorder %s47, %s63
    %p65 = scmp.eq.s32.totalorder %s13, 0
    %p66 = por %p64, %p65
    %p67 = scmp.le.s32.totalorder 1, %s7
    %p68 = scmp.lt.s32.totalorder %s7, 3
    %p69 = pnand %p67, %p68
    %p70 = pneg %p69
    // Predicated region
    $region9: #{transformer_forward.5} parent=5 // pred_check
      _
    $region10: #{transformer_forward.5} parent=5 // pred_check_branch
      %72 = sbr.rel (%p69) target = $region12
    $region11: #{transformer_forward.5} parent=5 // pred_region
      %s73 = ssub.s32 %s7, 1
    $region12: #{transformer_forward.5} parent=5 // pred_fallthru
      _
    %p74 = scmp.lt.s32.totalorder %s7, 2
    // Predicated region
    $region13: #{transformer_forward.5} parent=5 // pred_check
      %p75 = pneg %p74
    $region14: #{transformer_forward.5} parent=5 // pred_check_branch
      %77 = sbr.rel (%p75) target = $region16
    $region15: #{transformer_forward.5} parent=5 // pred_region
      // Predicated region
      $region17: #{transformer_forward.5} parent=15 // pred_check
        %p78 = pneg %p27
      $region18: #{transformer_forward.5} parent=15 // pred_check_branch
        %80 = sbr.rel (%p78) target = $region20
      $region19: #{transformer_forward.5} parent=15 // pred_region
        %p81 = scmp.lt.s32.totalorder %s7, 1
        %s82 = scalar_select %p81, %s7, 1
        %s83 = smul.addr %s82, 6
        %s84 = smul.addr %s83, 8
        %s85 = scalar_lea.vmem %s0, %s84
      $region20: #{transformer_forward.5} parent=15 // pred_fallthru
        _
    $region16: #{transformer_forward.5} parent=5 // pred_fallthru
      _
    %p86 = scmp.le.s32.totalorder 1, %s7
    %p87 = scmp.lt.s32.totalorder %s7, 3
    %p88 = pnand %p86, %p87
    %p89 = pneg %p88
    // Predicated region
    $region21: #{transformer_forward.5} parent=5 // pred_check
      _
    $region22: #{transformer_forward.5} parent=5 // pred_check_branch
      %91 = sbr.rel (%p88) target = $region24
    $region23: #{transformer_forward.5} parent=5 // pred_region
      %s92 = ssub.s32 %s7, 1
      %p93 = scmp.lt.s32.totalorder %s12, 1
      %s94 = scalar_select %p93, %s12, 1
      %s95 = smul.addr %s94, 6
      %s96 = smul.addr %s95, 8
      %s97 = scalar_lea.vmem %s0, %s96
      %p98 = pneg %p33
      %p99 = pneg %p30
      %p100 = pneg %p59
      %p101 = pneg %p56
      %p102 = scmp.lt.s32.totalorder %s12, 1
      %s103 = scalar_select %p102, %s12, 1
      %s104 = smul.addr %s103, 2
      %s105 = smul.addr %s104, 8
      %s106 = scalar_lea.vmem %s1, %s105
      %p107 = scmp.lt.s32.totalorder %s12, 1
      %s108 = scalar_select %p107, %s12, 1
      %s109 = smul.addr %s108, 6
      %s110 = smul.addr %s109, 8
      %s111 = scalar_lea.vmem %s0, %s110
      %p112 = scmp.lt.s32.totalorder %s12, 1
      %s113 = scalar_select %p112, %s12, 1
      %s114 = smul.addr %s113, 2
      %s115 = smul.addr %s114, 8
      %s116 = scalar_lea.vmem %s1, %s115
      %v117 = vld [vmem:[%s111] sm:$0xff]
      %v118 = vld [vmem:[%s111 + $0x8] sm:$0xff]
      %v119 = vld [vmem:[%s111 + $0x10] sm:$0xff]
      %v120 = vld [vmem:[%s111 + $0x18] sm:$0xff]
      %v121 = vld [vmem:[%s111 + $0x20] sm:$0xff]
      %v122 = vld [vmem:[%s111 + $0x28] sm:$0xff]
      %v123 = vmul.f32 %v117, 0.17677669
      %v124 = vmul.f32 %v120, 0.17677669
      %vm125 = vcmask 261120
      %v127 = vsel %vm125, %v123, 0
      %v130 = vsel %vm125, %v124, 0
      %v133 = vsel %vm125, %v118, 0
      %v136 = vsel %vm125, %v121, 0
      %138 = vmatprep.subr.mxu0 0.0
      %139 = vmatpush1.xpose.msra.mxu0 %v133
      %140 = vmatprep.subr.mxu0 0.0
      %141 = vmatpush1.xpose.msra.mxu0 %v136
      %142 = vmatprep.subr.mxu0 0.0
      %143 = vmatpush1.xpose.msra.mxu0 0.0
      %144 = vmatprep.subr.mxu0 0.0
      %145 = vmatpush1.xpose.msra.mxu0 0.0
      %146 = vmatprep.subr.mxu0 0.0
      %147 = vmatpush1.xpose.msra.mxu0 0.0
      %148 = vmatprep.subr.mxu0 0.0
      %149 = vmatpush1.xpose.msra.mxu0 0.0
      %150 = vmatprep.subr.mxu0 0.0
      %151 = vmatpush1.xpose.msra.mxu0 0.0
      %152 = vmatprep.subr.mxu0 0.0
      %153 = vmatpush1.xpose.msra.mxu0 0.0
      %154 = vmatprep.subr.mxu0 0.0
      %155 = vmatpush1.xpose.msra.mxu0 0.0
      %156 = vmatprep.subr.mxu0 0.0
      %157 = vmatpush1.xpose.msra.mxu0 0.0
      %158 = vmatprep.subr.mxu0 0.0
      %159 = vmatpush1.xpose.msra.mxu0 0.0
      %160 = vmatprep.subr.mxu0 0.0
      %161 = vmatpush1.xpose.msra.mxu0 0.0
      %162 = vmatprep.subr.mxu0 0.0
      %163 = vmatpush1.xpose.msra.mxu0 0.0
      %164 = vmatprep.subr.mxu0 0.0
      %165 = vmatpush1.xpose.msra.mxu0 0.0
      %166 = vmatprep.subr.mxu0 0.0
      %167 = vmatpush1.xpose.msra.mxu0 0.0
      %168 = vmatprep.subr.mxu0 0.0
      %169 = vmatpush1.xpose.msra.mxu0 0.0
      %170 = vmatprep.subr.mxu0 0.0
      %171 = vmatpush1.xpose.msra.mxu0 0.0
      %172 = vmatprep.subr.mxu0 0.0
      %173 = vmatpush1.xpose.msra.mxu0 0.0
      %174 = vmatprep.subr.mxu0 0.0
      %175 = vmatpush1.xpose.msra.mxu0 0.0
      %176 = vmatprep.subr.mxu0 0.0
      %177 = vmatpush1.xpose.msra.mxu0 0.0
      %178 = vmatprep.subr.mxu0 0.0
      %179 = vmatpush1.xpose.msra.mxu0 0.0
      %180 = vmatprep.subr.mxu0 0.0
      %181 = vmatpush1.xpose.msra.mxu0 0.0
      %182 = vmatprep.subr.mxu0 0.0
      %183 = vmatpush1.xpose.msra.mxu0 0.0
      %184 = vmatprep.subr.mxu0 0.0
      %185 = vmatpush1.xpose.msra.mxu0 0.0
      %186 = vmatprep.subr.mxu0 0.0
      %187 = vmatpush1.xpose.msra.mxu0 0.0
      %188 = vmatprep.subr.mxu0 0.0
      %189 = vmatpush1.xpose.msra.mxu0 0.0
      %190 = vmatprep.subr.mxu0 0.0
      %191 = vmatpush1.xpose.msra.mxu0 0.0
      %192 = vmatprep.subr.mxu0 0.0
      %193 = vmatpush1.xpose.msra.mxu0 0.0
      %194 = vmatprep.subr.mxu0 0.0
      %195 = vmatpush1.xpose.msra.mxu0 0.0
      %196 = vmatprep.subr.mxu0 0.0
      %197 = vmatpush1.xpose.msra.mxu0 0.0
      %198 = vmatprep.subr.mxu0 0.0
      %199 = vmatpush1.xpose.msra.mxu0 0.0
      %200 = vmatprep.subr.mxu0 0.0
      %201 = vmatpush1.xpose.msra.mxu0 0.0
      %202 = vmatprep.mubr.f32.mxu0 0.0
      %203 = vmatmul.mubr.f32.gmra.mrb[0].mxu0 %v127
      %v204 = vpop.f32.mrb[0].mxu0
      %v205 = vadd.f32 0.0, %v204
      %v206 = vpop.f32.mrb[0].mxu0
      %207 = vmatprep.mubr.f32.mxu0 0.0
      %208 = vmatmul.mubr.f32.gmra.mrb[0].mxu0 %v130
      %v209 = vpop.f32.mrb[0].mxu0
      %v210 = vadd.f32 0.0, %v209
      %v211 = vpop.f32.mrb[0].mxu0
      %212 = vdwg.mxu0
      %vm213 = vcmask 130048
      %v214 = vsel %vm213, %v205, -inf
      %215 = vmax.xlane.f32.xlu0 %v214
      %v216 = vpop.xlane.xlu0 %215
      %v217 = vsel %vm213, %v210, -inf
      %218 = vmax.xlane.f32.xlu0 %v217
      %v219 = vpop.xlane.xlu0 %218
      %v220 = vsub.f32 %v205, %v216
      %v221 = vsub.f32 %v210, %v219
      %v222 = vmul.f32 %v220, 1.442695
      %v223 = vpow.pop %v222
      %v224 = vmul.f32 %v221, 1.442695
      %v225 = vpow.pop %v224
      %v226 = vsel %vm213, %v223, 0.0
      %227 = vadd.xlane.f32.xlu0 %v226
      %v228 = vpop.xlane.xlu0 %227
      %v229 = vsel %vm213, %v225, 0.0
      %230 = vadd.xlane.f32.xlu0 %v229
      %v231 = vpop.xlane.xlu0 %230
      %v232 = vrcp.pop %v228
      %v233 = vrcp.pop %v231
      %v234 = vmul.f32 %v223, %v232
      %v235 = vmul.f32 %v225, %v233
      %v237 = vsel %vm213, %v234, 0
      %v240 = vsel %vm213, %v235, 0
      %242 = vmatprep.subr.mxu0 0.0
      %243 = vmatpush1.msra.mxu0 %v119
      %244 = vmatprep.subr.mxu0 0.0
      %245 = vmatpush1.msra.mxu0 %v122
      %246 = vmatprep.subr.mxu0 0.0
      %247 = vmatpush1.msra.mxu0 0.0
      %248 = vmatprep.subr.mxu0 0.0
      %249 = vmatpush1.msra.mxu0 0.0
      %250 = vmatprep.subr.mxu0 0.0
      %251 = vmatpush1.msra.mxu0 0.0
      %252 = vmatprep.subr.mxu0 0.0
      %253 = vmatpush1.msra.mxu0 0.0
      %254 = vmatprep.subr.mxu0 0.0
      %255 = vmatpush1.msra.mxu0 0.0
      %256 = vmatprep.subr.mxu0 0.0
      %257 = vmatpush1.msra.mxu0 0.0
      %258 = vmatprep.subr.mxu0 0.0
      %259 = vmatpush1.msra.mxu0 0.0
      %260 = vmatprep.subr.mxu0 0.0
      %261 = vmatpush1.msra.mxu0 0.0
      %262 = vmatprep.subr.mxu0 0.0
      %263 = vmatpush1.msra.mxu0 0.0
      %264 = vmatprep.subr.mxu0 0.0
      %265 = vmatpush1.msra.mxu0 0.0
      %266 = vmatprep.subr.mxu0 0.0
      %267 = vmatpush1.msra.mxu0 0.0
      %268 = vmatprep.subr.mxu0 0.0
      %269 = vmatpush1.msra.mxu0 0.0
      %270 = vmatprep.subr.mxu0 0.0
      %271 = vmatpush1.msra.mxu0 0.0
      %272 = vmatprep.subr.mxu0 0.0
      %273 = vmatpush1.msra.mxu0 0.0
      %274 = vmatprep.subr.mxu0 0.0
      %275 = vmatpush1.msra.mxu0 0.0
      %276 = vmatprep.subr.mxu0 0.0
      %277 = vmatpush1.msra.mxu0 0.0
      %278 = vmatprep.subr.mxu0 0.0
      %279 = vmatpush1.msra.mxu0 0.0
      %280 = vmatprep.subr.mxu0 0.0
      %281 = vmatpush1.msra.mxu0 0.0
      %282 = vmatprep.subr.mxu0 0.0
      %283 = vmatpush1.msra.mxu0 0.0
      %284 = vmatprep.subr.mxu0 0.0
      %285 = vmatpush1.msra.mxu0 0.0
      %286 = vmatprep.subr.mxu0 0.0
      %287 = vmatpush1.msra.mxu0 0.0
      %288 = vmatprep.subr.mxu0 0.0
      %289 = vmatpush1.msra.mxu0 0.0
      %290 = vmatprep.subr.mxu0 0.0
      %291 = vmatpush1.msra.mxu0 0.0
      %292 = vmatprep.subr.mxu0 0.0
      %293 = vmatpush1.msra.mxu0 0.0
      %294 = vmatprep.subr.mxu0 0.0
      %295 = vmatpush1.msra.mxu0 0.0
      %296 = vmatprep.subr.mxu0 0.0
      %297 = vmatpush1.msra.mxu0 0.0
      %298 = vmatprep.subr.mxu0 0.0
      %299 = vmatpush1.msra.mxu0 0.0
      %300 = vmatprep.subr.mxu0 0.0
      %301 = vmatpush1.msra.mxu0 0.0
      %302 = vmatprep.subr.mxu0 0.0
      %303 = vmatpush1.msra.mxu0 0.0
      %304 = vmatprep.subr.mxu0 0.0
      %305 = vmatpush1.msra.mxu0 0.0
      %306 = vmatprep.mubr.f32.mxu0 0.0
      %307 = vmatmul.mubr.f32.gmra.mrb[0].mxu0 %v237
      %v308 = vpop.f32.mrb[0].mxu0
      %v309 = vadd.f32 0.0, %v308
      %v310 = vpop.f32.mrb[0].mxu0
      %311 = vmatprep.mubr.f32.mxu0 0.0
      %312 = vmatmul.mubr.f32.gmra.mrb[0].mxu0 %v240
      %v313 = vpop.f32.mrb[0].mxu0
      %v314 = vadd.f32 0.0, %v313
      %v315 = vpop.f32.mrb[0].mxu0
      %316 = vdwg.mxu0
      %317 = vrot.lane.b32.xlu0 %v123, 96
      %v318 = vpop.permute.xlu0 %317
      %319 = vrot.lane.b32.xlu0 %v124, 96
      %v320 = vpop.permute.xlu0 %319
      %321 = vrot.lane.b32.xlu0 %v118, 96
      %v322 = vpop.permute.xlu0 %321
      %323 = vrot.lane.b32.xlu0 %v121, 96
      %v324 = vpop.permute.xlu0 %323
      %v325 = vsel %vm125, %v318, 0
      %v327 = vsel %vm125, %v320, 0
      %v329 = vsel %vm125, %v322, 0
      %v331 = vsel %vm125, %v324, 0
      %333 = vmatprep.subr.mxu0 0.0
      %334 = vmatpush1.xpose.msra.mxu0 %v329
      %335 = vmatprep.subr.mxu0 0.0
      %336 = vmatpush1.xpose.msra.mxu0 %v331
      %337 = vmatprep.subr.mxu0 0.0
      %338 = vmatpush1.xpose.msra.mxu0 0.0
      %339 = vmatprep.subr.mxu0 0.0
      %340 = vmatpush1.xpose.msra.mxu0 0.0
      %341 = vmatprep.subr.mxu0 0.0
      %342 = vmatpush1.xpose.msra.mxu0 0.0
      %343 = vmatprep.subr.mxu0 0.0
      %344 = vmatpush1.xpose.msra.mxu0 0.0
      %345 = vmatprep.subr.mxu0 0.0
      %346 = vmatpush1.xpose.msra.mxu0 0.0
      %347 = vmatprep.subr.mxu0 0.0
      %348 = vmatpush1.xpose.msra.mxu0 0.0
      %349 = vmatprep.subr.mxu0 0.0
      %350 = vmatpush1.xpose.msra.mxu0 0.0
      %351 = vmatprep.subr.mxu0 0.0
      %352 = vmatpush1.xpose.msra.mxu0 0.0
      %353 = vmatprep.subr.mxu0 0.0
      %354 = vmatpush1.xpose.msra.mxu0 0.0
      %355 = vmatprep.subr.mxu0 0.0
      %356 = vmatpush1.xpose.msra.mxu0 0.0
      %357 = vmatprep.subr.mxu0 0.0
      %358 = vmatpush1.xpose.msra.mxu0 0.0
      %359 = vmatprep.subr.mxu0 0.0
      %360 = vmatpush1.xpose.msra.mxu0 0.0
      %361 = vmatprep.subr.mxu0 0.0
      %362 = vmatpush1.xpose.msra.mxu0 0.0
      %363 = vmatprep.subr.mxu0 0.0
      %364 = vmatpush1.xpose.msra.mxu0 0.0
      %365 = vmatprep.subr.mxu0 0.0
      %366 = vmatpush1.xpose.msra.mxu0 0.0
      %367 = vmatprep.subr.mxu0 0.0
      %368 = vmatpush1.xpose.msra.mxu0 0.0
      %369 = vmatprep.subr.mxu0 0.0
      %370 = vmatpush1.xpose.msra.mxu0 0.0
      %371 = vmatprep.subr.mxu0 0.0
      %372 = vmatpush1.xpose.msra.mxu0 0.0
      %373 = vmatprep.subr.mxu0 0.0
      %374 = vmatpush1.xpose.msra.mxu0 0.0
      %375 = vmatprep.subr.mxu0 0.0
      %376 = vmatpush1.xpose.msra.mxu0 0.0
      %377 = vmatprep.subr.mxu0 0.0
      %378 = vmatpush1.xpose.msra.mxu0 0.0
      %379 = vmatprep.subr.mxu0 0.0
      %380 = vmatpush1.xpose.msra.mxu0 0.0
      %381 = vmatprep.subr.mxu0 0.0
      %382 = vmatpush1.xpose.msra.mxu0 0.0
      %383 = vmatprep.subr.mxu0 0.0
      %384 = vmatpush1.xpose.msra.mxu0 0.0
      %385 = vmatprep.subr.mxu0 0.0
      %386 = vmatpush1.xpose.msra.mxu0 0.0
      %387 = vmatprep.subr.mxu0 0.0
      %388 = vmatpush1.xpose.msra.mxu0 0.0
      %389 = vmatprep.subr.mxu0 0.0
      %390 = vmatpush1.xpose.msra.mxu0 0.0
      %391 = vmatprep.subr.mxu0 0.0
      %392 = vmatpush1.xpose.msra.mxu0 0.0
      %393 = vmatprep.subr.mxu0 0.0
      %394 = vmatpush1.xpose.msra.mxu0 0.0
      %395 = vmatprep.subr.mxu0 0.0
      %396 = vmatpush1.xpose.msra.mxu0 0.0
      %397 = vmatprep.mubr.f32.mxu0 0.0
      %398 = vmatmul.mubr.f32.gmra.mrb[0].mxu0 %v325
      %v399 = vpop.f32.mrb[0].mxu0
      %v400 = vadd.f32 0.0, %v399
      %v401 = vpop.f32.mrb[0].mxu0
      %402 = vmatprep.mubr.f32.mxu0 0.0
      %403 = vmatmul.mubr.f32.gmra.mrb[0].mxu0 %v327
      %v404 = vpop.f32.mrb[0].mxu0
      %v405 = vadd.f32 0.0, %v404
      %v406 = vpop.f32.mrb[0].mxu0
      %407 = vdwg.mxu0
      %v408 = vsel %vm213, %v400, -inf
      %409 = vmax.xlane.f32.xlu0 %v408
      %v410 = vpop.xlane.xlu0 %409
      %v411 = vsel %vm213, %v405, -inf
      %412 = vmax.xlane.f32.xlu0 %v411
      %v413 = vpop.xlane.xlu0 %412
      %v414 = vsub.f32 %v400, %v410
      %v415 = vsub.f32 %v405, %v413
      %v416 = vmul.f32 %v414, 1.442695
      %v417 = vpow.pop %v416
      %v418 = vmul.f32 %v415, 1.442695
      %v419 = vpow.pop %v418
      %v420 = vsel %vm213, %v417, 0.0
      %421 = vadd.xlane.f32.xlu0 %v420
      %v422 = vpop.xlane.xlu0 %421
      %v423 = vsel %vm213, %v419, 0.0
      %424 = vadd.xlane.f32.xlu0 %v423
      %v425 = vpop.xlane.xlu0 %424
      %v426 = vrcp.pop %v422
      %v427 = vrcp.pop %v425
      %v428 = vmul.f32 %v417, %v426
      %v429 = vmul.f32 %v419, %v427
      %432 = vrot.lane.b32.xlu0 %v119, 96
      %v433 = vpop.permute.xlu0 %432
      %434 = vrot.lane.b32.xlu0 %v122, 96
      %v435 = vpop.permute.xlu0 %434
      %v439 = vsel %vm213, %v428, 0
      %v442 = vsel %vm213, %v429, 0
      %444 = vmatprep.subr.mxu0 0.0
      %445 = vmatpush1.msra.mxu0 %v433
      %446 = vmatprep.subr.mxu0 0.0
      %447 = vmatpush1.msra.mxu0 %v435
      %448 = vmatprep.subr.mxu0 0.0
      %449 = vmatpush1.msra.mxu0 0.0
      %450 = vmatprep.subr.mxu0 0.0
      %451 = vmatpush1.msra.mxu0 0.0
      %452 = vmatprep.subr.mxu0 0.0
      %453 = vmatpush1.msra.mxu0 0.0
      %454 = vmatprep.subr.mxu0 0.0
      %455 = vmatpush1.msra.mxu0 0.0
      %456 = vmatprep.subr.mxu0 0.0
      %457 = vmatpush1.msra.mxu0 0.0
      %458 = vmatprep.subr.mxu0 0.0
      %459 = vmatpush1.msra.mxu0 0.0
      %460 = vmatprep.subr.mxu0 0.0
      %461 = vmatpush1.msra.mxu0 0.0
      %462 = vmatprep.subr.mxu0 0.0
      %463 = vmatpush1.msra.mxu0 0.0
      %464 = vmatprep.subr.mxu0 0.0
      %465 = vmatpush1.msra.mxu0 0.0
      %466 = vmatprep.subr.mxu0 0.0
      %467 = vmatpush1.msra.mxu0 0.0
      %468 = vmatprep.subr.mxu0 0.0
      %469 = vmatpush1.msra.mxu0 0.0
      %470 = vmatprep.subr.mxu0 0.0
      %471 = vmatpush1.msra.mxu0 0.0
      %472 = vmatprep.subr.mxu0 0.0
      %473 = vmatpush1.msra.mxu0 0.0
      %474 = vmatprep.subr.mxu0 0.0
      %475 = vmatpush1.msra.mxu0 0.0
      %476 = vmatprep.subr.mxu0 0.0
      %477 = vmatpush1.msra.mxu0 0.0
      %478 = vmatprep.subr.mxu0 0.0
      %479 = vmatpush1.msra.mxu0 0.0
      %480 = vmatprep.subr.mxu0 0.0
      %481 = vmatpush1.msra.mxu0 0.0
      %482 = vmatprep.subr.mxu0 0.0
      %483 = vmatpush1.msra.mxu0 0.0
      %484 = vmatprep.subr.mxu0 0.0
      %485 = vmatpush1.msra.mxu0 0.0
      %486 = vmatprep.subr.mxu0 0.0
      %487 = vmatpush1.msra.mxu0 0.0
      %488 = vmatprep.subr.mxu0 0.0
      %489 = vmatpush1.msra.mxu0 0.0
      %490 = vmatprep.subr.mxu0 0.0
      %491 = vmatpush1.msra.mxu0 0.0
      %492 = vmatprep.subr.mxu0 0.0
      %493 = vmatpush1.msra.mxu0 0.0
      %494 = vmatprep.subr.mxu0 0.0
      %495 = vmatpush1.msra.mxu0 0.0
      %496 = vmatprep.subr.mxu0 0.0
      %497 = vmatpush1.msra.mxu0 0.0
      %498 = vmatprep.subr.mxu0 0.0
      %499 = vmatpush1.msra.mxu0 0.0
      %500 = vmatprep.subr.mxu0 0.0
      %501 = vmatpush1.msra.mxu0 0.0
      %502 = vmatprep.subr.mxu0 0.0
      %503 = vmatpush1.msra.mxu0 0.0
      %504 = vmatprep.subr.mxu0 0.0
      %505 = vmatpush1.msra.mxu0 0.0
      %506 = vmatprep.subr.mxu0 0.0
      %507 = vmatpush1.msra.mxu0 0.0
      %508 = vmatprep.mubr.f32.mxu0 0.0
      %509 = vmatmul.mubr.f32.gmra.mrb[0].mxu0 %v439
      %v510 = vpop.f32.mrb[0].mxu0
      %v511 = vadd.f32 0.0, %v510
      %v512 = vpop.f32.mrb[0].mxu0
      %513 = vmatprep.mubr.f32.mxu0 0.0
      %514 = vmatmul.mubr.f32.gmra.mrb[0].mxu0 %v442
      %v515 = vpop.f32.mrb[0].mxu0
      %v516 = vadd.f32 0.0, %v515
      %v517 = vpop.f32.mrb[0].mxu0
      %518 = vdwg.mxu0
      %519 = vrot.lane.b32.xlu0 %v123, 64
      %v520 = vpop.permute.xlu0 %519
      %521 = vrot.lane.b32.xlu0 %v124, 64
      %v522 = vpop.permute.xlu0 %521
      %523 = vrot.lane.b32.xlu0 %v118, 64
      %v524 = vpop.permute.xlu0 %523
      %525 = vrot.lane.b32.xlu0 %v121, 64
      %v526 = vpop.permute.xlu0 %525
      %v527 = vsel %vm125, %v520, 0
      %v529 = vsel %vm125, %v522, 0
      %v531 = vsel %vm125, %v524, 0
      %v533 = vsel %vm125, %v526, 0
      %535 = vmatprep.subr.mxu0 0.0
      %536 = vmatpush1.xpose.msra.mxu0 %v531
      %537 = vmatprep.subr.mxu0 0.0
      %538 = vmatpush1.xpose.msra.mxu0 %v533
      %539 = vmatprep.subr.mxu0 0.0
      %540 = vmatpush1.xpose.msra.mxu0 0.0
      %541 = vmatprep.subr.mxu0 0.0
      %542 = vmatpush1.xpose.msra.mxu0 0.0
      %543 = vmatprep.subr.mxu0 0.0
      %544 = vmatpush1.xpose.msra.mxu0 0.0
      %545 = vmatprep.subr.mxu0 0.0
      %546 = vmatpush1.xpose.msra.mxu0 0.0
      %547 = vmatprep.subr.mxu0 0.0
      %548 = vmatpush1.xpose.msra.mxu0 0.0
      %549 = vmatprep.subr.mxu0 0.0
      %550 = vmatpush1.xpose.msra.mxu0 0.0
      %551 = vmatprep.subr.mxu0 0.0
      %552 = vmatpush1.xpose.msra.mxu0 0.0
      %553 = vmatprep.subr.mxu0 0.0
      %554 = vmatpush1.xpose.msra.mxu0 0.0
      %555 = vmatprep.subr.mxu0 0.0
      %556 = vmatpush1.xpose.msra.mxu0 0.0
      %557 = vmatprep.subr.mxu0 0.0
      %558 = vmatpush1.xpose.msra.mxu0 0.0
      %559 = vmatprep.subr.mxu0 0.0
      %560 = vmatpush1.xpose.msra.mxu0 0.0
      %561 = vmatprep.subr.mxu0 0.0
      %562 = vmatpush1.xpose.msra.mxu0 0.0
      %563 = vmatprep.subr.mxu0 0.0
      %564 = vmatpush1.xpose.msra.mxu0 0.0
      %565 = vmatprep.subr.mxu0 0.0
      %566 = vmatpush1.xpose.msra.mxu0 0.0
      %567 = vmatprep.subr.mxu0 0.0
      %568 = vmatpush1.xpose.msra.mxu0 0.0
      %569 = vmatprep.subr.mxu0 0.0
      %570 = vmatpush1.xpose.msra.mxu0 0.0
      %571 = vmatprep.subr.mxu0 0.0
      %572 = vmatpush1.xpose.msra.mxu0 0.0
      %573 = vmatprep.subr.mxu0 0.0
      %574 = vmatpush1.xpose.msra.mxu0 0.0
      %575 = vmatprep.subr.mxu0 0.0
      %576 = vmatpush1.xpose.msra.mxu0 0.0
      %577 = vmatprep.subr.mxu0 0.0
      %578 = vmatpush1.xpose.msra.mxu0 0.0
      %579 = vmatprep.subr.mxu0 0.0
      %580 = vmatpush1.xpose.msra.mxu0 0.0
      %581 = vmatprep.subr.mxu0 0.0
      %582 = vmatpush1.xpose.msra.mxu0 0.0
      %583 = vmatprep.subr.mxu0 0.0
      %584 = vmatpush1.xpose.msra.mxu0 0.0
      %585 = vmatprep.subr.mxu0 0.0
      %586 = vmatpush1.xpose.msra.mxu0 0.0
      %587 = vmatprep.subr.mxu0 0.0
      %588 = vmatpush1.xpose.msra.mxu0 0.0
      %589 = vmatprep.subr.mxu0 0.0
      %590 = vmatpush1.xpose.msra.mxu0 0.0
      %591 = vmatprep.subr.mxu0 0.0
      %592 = vmatpush1.xpose.msra.mxu0 0.0
      %593 = vmatprep.subr.mxu0 0.0
      %594 = vmatpush1.xpose.msra.mxu0 0.0
      %595 = vmatprep.subr.mxu0 0.0
      %596 = vmatpush1.xpose.msra.mxu0 0.0
      %597 = vmatprep.subr.mxu0 0.0
      %598 = vmatpush1.xpose.msra.mxu0 0.0
      %599 = vmatprep.mubr.f32.mxu0 0.0
      %600 = vmatmul.mubr.f32.gmra.mrb[0].mxu0 %v527
      %v601 = vpop.f32.mrb[0].mxu0
      %v602 = vadd.f32 0.0, %v601
      %v603 = vpop.f32.mrb[0].mxu0
      %604 = vmatprep.mubr.f32.mxu0 0.0
      %605 = vmatmul.mubr.f32.gmra.mrb[0].mxu0 %v529
      %v606 = vpop.f32.mrb[0].mxu0
      %v607 = vadd.f32 0.0, %v606
      %v608 = vpop.f32.mrb[0].mxu0
      %609 = vdwg.mxu0
      %v610 = vsel %vm213, %v602, -inf
      %611 = vmax.xlane.f32.xlu0 %v610
      %v612 = vpop.xlane.xlu0 %611
      %v613 = vsel %vm213, %v607, -inf
      %614 = vmax.xlane.f32.xlu0 %v613
      %v615 = vpop.xlane.xlu0 %614
      %v616 = vsub.f32 %v602, %v612
      %v617 = vsub.f32 %v607, %v615
      %v618 = vmul.f32 %v616, 1.442695
      %v619 = vpow.pop %v618
      %v620 = vmul.f32 %v617, 1.442695
      %v621 = vpow.pop %v620
      %v622 = vsel %vm213, %v619, 0.0
      %623 = vadd.xlane.f32.xlu0 %v622
      %v624 = vpop.xlane.xlu0 %623
      %v625 = vsel %vm213, %v621, 0.0
      %626 = vadd.xlane.f32.xlu0 %v625
      %v627 = vpop.xlane.xlu0 %626
      %v628 = vrcp.pop %v624
      %v629 = vrcp.pop %v627
      %v630 = vmul.f32 %v619, %v628
      %v631 = vmul.f32 %v621, %v629
      %632 = vrot.lane.b32.xlu0 %v119, 64
      %v633 = vpop.permute.xlu0 %632
      %634 = vrot.lane.b32.xlu0 %v122, 64
      %v635 = vpop.permute.xlu0 %634
      %v639 = vsel %vm213, %v630, 0
      %v642 = vsel %vm213, %v631, 0
      %644 = vmatprep.subr.mxu0 0.0
      %645 = vmatpush1.msra.mxu0 %v633
      %646 = vmatprep.subr.mxu0 0.0
      %647 = vmatpush1.msra.mxu0 %v635
      %648 = vmatprep.subr.mxu0 0.0
      %649 = vmatpush1.msra.mxu0 0.0
      %650 = vmatprep.subr.mxu0 0.0
      %651 = vmatpush1.msra.mxu0 0.0
      %652 = vmatprep.subr.mxu0 0.0
      %653 = vmatpush1.msra.mxu0 0.0
      %654 = vmatprep.subr.mxu0 0.0
      %655 = vmatpush1.msra.mxu0 0.0
      %656 = vmatprep.subr.mxu0 0.0
      %657 = vmatpush1.msra.mxu0 0.0
      %658 = vmatprep.subr.mxu0 0.0
      %659 = vmatpush1.msra.mxu0 0.0
      %660 = vmatprep.subr.mxu0 0.0
      %661 = vmatpush1.msra.mxu0 0.0
      %662 = vmatprep.subr.mxu0 0.0
      %663 = vmatpush1.msra.mxu0 0.0
      %664 = vmatprep.subr.mxu0 0.0
      %665 = vmatpush1.msra.mxu0 0.0
      %666 = vmatprep.subr.mxu0 0.0
      %667 = vmatpush1.msra.mxu0 0.0
      %668 = vmatprep.subr.mxu0 0.0
      %669 = vmatpush1.msra.mxu0 0.0
      %670 = vmatprep.subr.mxu0 0.0
      %671 = vmatpush1.msra.mxu0 0.0
      %672 = vmatprep.subr.mxu0 0.0
      %673 = vmatpush1.msra.mxu0 0.0
      %674 = vmatprep.subr.mxu0 0.0
      %675 = vmatpush1.msra.mxu0 0.0
      %676 = vmatprep.subr.mxu0 0.0
      %677 = vmatpush1.msra.mxu0 0.0
      %678 = vmatprep.subr.mxu0 0.0
      %679 = vmatpush1.msra.mxu0 0.0
      %680 = vmatprep.subr.mxu0 0.0
      %681 = vmatpush1.msra.mxu0 0.0
      %682 = vmatprep.subr.mxu0 0.0
      %683 = vmatpush1.msra.mxu0 0.0
      %684 = vmatprep.subr.mxu0 0.0
      %685 = vmatpush1.msra.mxu0 0.0
      %686 = vmatprep.subr.mxu0 0.0
      %687 = vmatpush1.msra.mxu0 0.0
      %688 = vmatprep.subr.mxu0 0.0
      %689 = vmatpush1.msra.mxu0 0.0
      %690 = vmatprep.subr.mxu0 0.0
      %691 = vmatpush1.msra.mxu0 0.0
      %692 = vmatprep.subr.mxu0 0.0
      %693 = vmatpush1.msra.mxu0 0.0
      %694 = vmatprep.subr.mxu0 0.0
      %695 = vmatpush1.msra.mxu0 0.0
      %696 = vmatprep.subr.mxu0 0.0
      %697 = vmatpush1.msra.mxu0 0.0
      %698 = vmatprep.subr.mxu0 0.0
      %699 = vmatpush1.msra.mxu0 0.0
      %700 = vmatprep.subr.mxu0 0.0
      %701 = vmatpush1.msra.mxu0 0.0
      %702 = vmatprep.subr.mxu0 0.0
      %703 = vmatpush1.msra.mxu0 0.0
      %704 = vmatprep.subr.mxu0 0.0
      %705 = vmatpush1.msra.mxu0 0.0
      %706 = vmatprep.subr.mxu0 0.0
      %707 = vmatpush1.msra.mxu0 0.0
      %708 = vmatprep.mubr.f32.mxu0 0.0
      %709 = vmatmul.mubr.f32.gmra.mrb[0].mxu0 %v639
      %v710 = vpop.f32.mrb[0].mxu0
      %v711 = vadd.f32 0.0, %v710
      %v712 = vpop.f32.mrb[0].mxu0
      %713 = vmatprep.mubr.f32.mxu0 0.0
      %714 = vmatmul.mubr.f32.gmra.mrb[0].mxu0 %v642
      %v715 = vpop.f32.mrb[0].mxu0
      %v716 = vadd.f32 0.0, %v715
      %v717 = vpop.f32.mrb[0].mxu0
      %718 = vdwg.mxu0
      %719 = vrot.lane.b32.xlu0 %v123, 32
      %v720 = vpop.permute.xlu0 %719
      %721 = vrot.lane.b32.xlu0 %v124, 32
      %v722 = vpop.permute.xlu0 %721
      %723 = vrot.lane.b32.xlu0 %v118, 32
      %v724 = vpop.permute.xlu0 %723
      %725 = vrot.lane.b32.xlu0 %v121, 32
      %v726 = vpop.permute.xlu0 %725
      %v727 = vsel %vm125, %v720, 0
      %v729 = vsel %vm125, %v722, 0
      %v731 = vsel %vm125, %v724, 0
      %v733 = vsel %vm125, %v726, 0
      %735 = vmatprep.subr.mxu0 0.0
      %736 = vmatpush1.xpose.msra.mxu0 %v731
      %737 = vmatprep.subr.mxu0 0.0
      %738 = vmatpush1.xpose.msra.mxu0 %v733
      %739 = vmatprep.subr.mxu0 0.0
      %740 = vmatpush1.xpose.msra.mxu0 0.0
      %741 = vmatprep.subr.mxu0 0.0
      %742 = vmatpush1.xpose.msra.mxu0 0.0
      %743 = vmatprep.subr.mxu0 0.0
      %744 = vmatpush1.xpose.msra.mxu0 0.0
      %745 = vmatprep.subr.mxu0 0.0
      %746 = vmatpush1.xpose.msra.mxu0 0.0
      %747 = vmatprep.subr.mxu0 0.0
      %748 = vmatpush1.xpose.msra.mxu0 0.0
      %749 = vmatprep.subr.mxu0 0.0
      %750 = vmatpush1.xpose.msra.mxu0 0.0
      %751 = vmatprep.subr.mxu0 0.0
      %752 = vmatpush1.xpose.msra.mxu0 0.0
      %753 = vmatprep.subr.mxu0 0.0
      %754 = vmatpush1.xpose.msra.mxu0 0.0
      %755 = vmatprep.subr.mxu0 0.0
      %756 = vmatpush1.xpose.msra.mxu0 0.0
      %757 = vmatprep.subr.mxu0 0.0
      %758 = vmatpush1.xpose.msra.mxu0 0.0
      %759 = vmatprep.subr.mxu0 0.0
      %760 = vmatpush1.xpose.msra.mxu0 0.0
      %761 = vmatprep.subr.mxu0 0.0
      %762 = vmatpush1.xpose.msra.mxu0 0.0
      %763 = vmatprep.subr.mxu0 0.0
      %764 = vmatpush1.xpose.msra.mxu0 0.0
      %765 = vmatprep.subr.mxu0 0.0
      %766 = vmatpush1.xpose.msra.mxu0 0.0
      %767 = vmatprep.subr.mxu0 0.0
      %768 = vmatpush1.xpose.msra.mxu0 0.0
      %769 = vmatprep.subr.mxu0 0.0
      %770 = vmatpush1.xpose.msra.mxu0 0.0
      %771 = vmatprep.subr.mxu0 0.0
      %772 = vmatpush1.xpose.msra.mxu0 0.0
      %773 = vmatprep.subr.mxu0 0.0
      %774 = vmatpush1.xpose.msra.mxu0 0.0
      %775 = vmatprep.subr.mxu0 0.0
      %776 = vmatpush1.xpose.msra.mxu0 0.0
      %777 = vmatprep.subr.mxu0 0.0
      %778 = vmatpush1.xpose.msra.mxu0 0.0
      %779 = vmatprep.subr.mxu0 0.0
      %780 = vmatpush1.xpose.msra.mxu0 0.0
      %781 = vmatprep.subr.mxu0 0.0
      %782 = vmatpush1.xpose.msra.mxu0 0.0
      %783 = vmatprep.subr.mxu0 0.0
      %784 = vmatpush1.xpose.msra.mxu0 0.0
      %785 = vmatprep.subr.mxu0 0.0
      %786 = vmatpush1.xpose.msra.mxu0 0.0
      %787 = vmatprep.subr.mxu0 0.0
      %788 = vmatpush1.xpose.msra.mxu0 0.0
      %789 = vmatprep.subr.mxu0 0.0
      %790 = vmatpush1.xpose.msra.mxu0 0.0
      %791 = vmatprep.subr.mxu0 0.0
      %792 = vmatpush1.xpose.msra.mxu0 0.0
      %793 = vmatprep.subr.mxu0 0.0
      %794 = vmatpush1.xpose.msra.mxu0 0.0
      %795 = vmatprep.subr.mxu0 0.0
      %796 = vmatpush1.xpose.msra.mxu0 0.0
      %797 = vmatprep.subr.mxu0 0.0
      %798 = vmatpush1.xpose.msra.mxu0 0.0
      %799 = vmatprep.mubr.f32.mxu0 0.0
      %800 = vmatmul.mubr.f32.gmra.mrb[0].mxu0 %v727
      %v801 = vpop.f32.mrb[0].mxu0
      %v802 = vadd.f32 0.0, %v801
      %v803 = vpop.f32.mrb[0].mxu0
      %804 = vmatprep.mubr.f32.mxu0 0.0
      %805 = vmatmul.mubr.f32.gmra.mrb[0].mxu0 %v729
      %v806 = vpop.f32.mrb[0].mxu0
      %v807 = vadd.f32 0.0, %v806
      %v808 = vpop.f32.mrb[0].mxu0
      %809 = vdwg.mxu0
      %v810 = vsel %vm213, %v802, -inf
      %811 = vmax.xlane.f32.xlu0 %v810
      %v812 = vpop.xlane.xlu0 %811
      %v813 = vsel %vm213, %v807, -inf
      %814 = vmax.xlane.f32.xlu0 %v813
      %v815 = vpop.xlane.xlu0 %814
      %v816 = vsub.f32 %v802, %v812
      %v817 = vsub.f32 %v807, %v815
      %v818 = vmul.f32 %v816, 1.442695
      %v819 = vpow.pop %v818
      %v820 = vmul.f32 %v817, 1.442695
      %v821 = vpow.pop %v820
      %v822 = vsel %vm213, %v819, 0.0
      %823 = vadd.xlane.f32.xlu0 %v822
      %v824 = vpop.xlane.xlu0 %823
      %v825 = vsel %vm213, %v821, 0.0
      %826 = vadd.xlane.f32.xlu0 %v825
      %v827 = vpop.xlane.xlu0 %826
      %v828 = vrcp.pop %v824
      %v829 = vrcp.pop %v827
      %v830 = vmul.f32 %v819, %v828
      %v831 = vmul.f32 %v821, %v829
      %832 = vrot.lane.b32.xlu0 %v119, 32
      %v833 = vpop.permute.xlu0 %832
      %834 = vrot.lane.b32.xlu0 %v122, 32
      %v835 = vpop.permute.xlu0 %834
      %v839 = vsel %vm213, %v830, 0
      %v842 = vsel %vm213, %v831, 0
      %844 = vmatprep.subr.mxu0 0.0
      %845 = vmatpush1.msra.mxu0 %v833
      %846 = vmatprep.subr.mxu0 0.0
      %847 = vmatpush1.msra.mxu0 %v835
      %848 = vmatprep.subr.mxu0 0.0
      %849 = vmatpush1.msra.mxu0 0.0
      %850 = vmatprep.subr.mxu0 0.0
      %851 = vmatpush1.msra.mxu0 0.0
      %852 = vmatprep.subr.mxu0 0.0
      %853 = vmatpush1.msra.mxu0 0.0
      %854 = vmatprep.subr.mxu0 0.0
      %855 = vmatpush1.msra.mxu0 0.0
      %856 = vmatprep.subr.mxu0 0.0
      %857 = vmatpush1.msra.mxu0 0.0
      %858 = vmatprep.subr.mxu0 0.0
      %859 = vmatpush1.msra.mxu0 0.0
      %860 = vmatprep.subr.mxu0 0.0
      %861 = vmatpush1.msra.mxu0 0.0
      %862 = vmatprep.subr.mxu0 0.0
      %863 = vmatpush1.msra.mxu0 0.0
      %864 = vmatprep.subr.mxu0 0.0
      %865 = vmatpush1.msra.mxu0 0.0
      %866 = vmatprep.subr.mxu0 0.0
      %867 = vmatpush1.msra.mxu0 0.0
      %868 = vmatprep.subr.mxu0 0.0
      %869 = vmatpush1.msra.mxu0 0.0
      %870 = vmatprep.subr.mxu0 0.0
      %871 = vmatpush1.msra.mxu0 0.0
      %872 = vmatprep.subr.mxu0 0.0
      %873 = vmatpush1.msra.mxu0 0.0
      %874 = vmatprep.subr.mxu0 0.0
      %875 = vmatpush1.msra.mxu0 0.0
      %876 = vmatprep.subr.mxu0 0.0
      %877 = vmatpush1.msra.mxu0 0.0
      %878 = vmatprep.subr.mxu0 0.0
      %879 = vmatpush1.msra.mxu0 0.0
      %880 = vmatprep.subr.mxu0 0.0
      %881 = vmatpush1.msra.mxu0 0.0
      %882 = vmatprep.subr.mxu0 0.0
      %883 = vmatpush1.msra.mxu0 0.0
      %884 = vmatprep.subr.mxu0 0.0
      %885 = vmatpush1.msra.mxu0 0.0
      %886 = vmatprep.subr.mxu0 0.0
      %887 = vmatpush1.msra.mxu0 0.0
      %888 = vmatprep.subr.mxu0 0.0
      %889 = vmatpush1.msra.mxu0 0.0
      %890 = vmatprep.subr.mxu0 0.0
      %891 = vmatpush1.msra.mxu0 0.0
      %892 = vmatprep.subr.mxu0 0.0
      %893 = vmatpush1.msra.mxu0 0.0
      %894 = vmatprep.subr.mxu0 0.0
      %895 = vmatpush1.msra.mxu0 0.0
      %896 = vmatprep.subr.mxu0 0.0
      %897 = vmatpush1.msra.mxu0 0.0
      %898 = vmatprep.subr.mxu0 0.0
      %899 = vmatpush1.msra.mxu0 0.0
      %900 = vmatprep.subr.mxu0 0.0
      %901 = vmatpush1.msra.mxu0 0.0
      %902 = vmatprep.subr.mxu0 0.0
      %903 = vmatpush1.msra.mxu0 0.0
      %904 = vmatprep.subr.mxu0 0.0
      %905 = vmatpush1.msra.mxu0 0.0
      %906 = vmatprep.subr.mxu0 0.0
      %907 = vmatpush1.msra.mxu0 0.0
      %908 = vmatprep.mubr.f32.mxu0 0.0
      %909 = vmatmul.mubr.f32.gmra.mrb[0].mxu0 %v839
      %v910 = vpop.f32.mrb[0].mxu0
      %v911 = vadd.f32 0.0, %v910
      %v912 = vpop.f32.mrb[0].mxu0
      %913 = vmatprep.mubr.f32.mxu0 0.0
      %914 = vmatmul.mubr.f32.gmra.mrb[0].mxu0 %v842
      %v915 = vpop.f32.mrb[0].mxu0
      %v916 = vadd.f32 0.0, %v915
      %v917 = vpop.f32.mrb[0].mxu0
      %918 = vdwg.mxu0
      %921 = vrot.lane.b32.xlu0 %v511, 32
      %v922 = vpop.permute.xlu0 %921
      %923 = vrot.lane.b32.xlu0 %v516, 32
      %v924 = vpop.permute.xlu0 %923
      %929 = vrot.lane.b32.xlu0 %v711, 64
      %v930 = vpop.permute.xlu0 %929
      %931 = vrot.lane.b32.xlu0 %v716, 64
      %v932 = vpop.permute.xlu0 %931
      %937 = vrot.lane.b32.xlu0 %v911, 96
      %v938 = vpop.permute.xlu0 %937
      %939 = vrot.lane.b32.xlu0 %v916, 96
      %v940 = vpop.permute.xlu0 %939
      %v943 = vsel %vm125, %v309, %v922
      %v944 = vsel %vm125, %v314, %v924
      %vm945 = vcmask 523264
      %v946 = vsel %vm945, %v943, %v930
      %v947 = vsel %vm945, %v944, %v932
      %vm948 = vcmask 785408
      %v949 = vsel %vm948, %v946, %v938
      %v950 = vsel %vm948, %v947, %v940
      %951 = vst [vmem:[%s116] sm:$0xff] %v949
      %952 = vst [vmem:[%s116 + $0x8] sm:$0xff] %v950
      %p953 = scmp.lt.s32.totalorder %s12, 1
      %s954 = scalar_select %p953, %s12, 1
      %s955 = smul.addr %s954, 2
      %s956 = smul.addr %s955, 8
      %s957 = scalar_lea.vmem %s1, %s956
      // Predicated region
      $region25: #{transformer_forward.5} parent=23 // pred_check
        %p958 = pneg %p56
      $region26: #{transformer_forward.5} parent=23 // pred_check_branch
        %960 = sbr.rel (%p958) target = $region28
      $region27: #{transformer_forward.5} parent=23 // pred_region
        _
      $region28: #{transformer_forward.5} parent=23 // pred_fallthru
        _
    $region24: #{transformer_forward.5} parent=5 // pred_fallthru
      _
    %p961 = scmp.le.s32.totalorder 2, %s7
    // Predicated region
    $region29: #{transformer_forward.5} parent=5 // pred_check
      %p962 = pneg %p961
    $region30: #{transformer_forward.5} parent=5 // pred_check_branch
      %964 = sbr.rel (%p962) target = $region32
    $region31: #{transformer_forward.5} parent=5 // pred_region
      %s965 = ssub.s32 %s7, 2
      // Predicated region
      $region33: #{transformer_forward.5} parent=31 // pred_check
        %p966 = pneg %p62
      $region34: #{transformer_forward.5} parent=31 // pred_check_branch
        %968 = sbr.rel (%p966) target = $region36
      $region35: #{transformer_forward.5} parent=31 // pred_region
        %p969 = scmp.lt.s32.totalorder %s13, 1
        %s970 = scalar_select %p969, %s13, 1
        %s971 = smul.addr %s970, 2
        %s972 = smul.addr %s971, 8
        %s973 = scalar_lea.vmem %s1, %s972
      $region36: #{transformer_forward.5} parent=31 // pred_fallthru
        _
    $region32: #{transformer_forward.5} parent=5 // pred_fallthru
      _
  $region6: #{transformer_forward.5} parent=0 // loop_footer
    %s11 = sadd.s32 1, %s7
  $region7: #{transformer_forward.5} parent=0 // loop_footer_branch
    %6 = sbr.rel target = $region3
  $region8: #{transformer_forward.5} parent=0 // loop_exit
    _

// kernel: transformer_forward.7
$region0: #{transformer_forward.7}
  #allocation0 [shape = 'u32[]', space=smem, size = 0x4, offset = 0x4, fixed_abs, tag = 'smem constant byte address 0x4 - core index']
  #allocation1 [shape = 'u32[144,128]{1,0:T(1,128)}', space=vmem, size = 0x12000, scoped, tag = 'internal scratch']
  #allocation2 [shape = 'f32[32,128]{1,0:T(8,128)}', space=vmem, size = 0x4000, scoped, tag = 'scratch operand']
  #allocation3 [shape = 'f32[32,128]{1,0:T(8,128)}', space=vmem, size = 0x4000, scoped, tag = 'scratch operand']
  %s0 = inlined_call_operand.vmem [shape: f32[32,128], index: 0, kind: input, shape index: {}]
  %s1 = inlined_call_operand.vmem [shape: f32[1,128], index: 1, kind: input, shape index: {}]
  %s2 = inlined_call_operand.vmem [shape: f32[1,128], index: 2, kind: input, shape index: {}]
  %s3 = inlined_call_operand.vmem [shape: f32[128,512], index: 3, kind: input, shape index: {}]
  %s4 = inlined_call_operand.vmem [shape: f32[1,512], index: 4, kind: input, shape index: {}]
  %s5 = inlined_call_operand.hbm [shape: f32[512,128], index: 5, kind: input, shape index: {}]
  %s6 = inlined_call_operand.vmem [shape: f32[1,128], index: 6, kind: input, shape index: {}]
  %s7 = inlined_call_operand.hbm [shape: f32[32,128], index: 7, kind: output, shape index: {}]
  %s8 = sld [smem:[#allocation0]]
  $region96: #{transformer_forward.7} parent=0
    _
  %s10 = ssub.s32 1, %s8
  %s11 = scalar_select 0, %s10, %s8
  $region1: #{transformer_forward.7} parent=0
    #allocation4 [shape = 'u8[262144]{0}', space=vmem, size = 0x40000, scoped, tag = 'input window, operand 3']
    #allocation5 [shape = 'u8[262144]{0}', space=vmem, size = 0x40000, scoped, tag = 'input window, operand 5']
    #allocation6 [shape = 's32[2]{0}', space=sflag, size = 0x8, scoped, tag = 'scoped memory for transformer_forward.7']
    #allocation7 [shape = 's32[2]{0}', space=sflag, size = 0x8, scoped, tag = 'scoped memory for transformer_forward.7']
    #allocation8 [shape = 'u8[16384]{0}', space=vmem, size = 0x4000, scoped, tag = 'output window, operand 0, single buffered']
    %12 = vsyncpa [#allocation6], 0
    %s13 = scalar_lea.sflag [#allocation6], 1
    %14 = vsyncpa %s13, 0
    %15 = vsyncpa [#allocation7], 0
    loop: start=0, step=1, limit=4
    $region2: #{transformer_forward.7} parent=1 // loop_pre_header
      _
    $region3: #{transformer_forward.7} parent=1 // loop_header
      %s17 = sphi 0, %s21
      %p18 = scmp.ge.s32.totalorder %s17, 4
      %s24 = sphi 0, %s36
      %s25 = sphi 0, %s32
      %s26 = sphi 0, %s24
      %s27 = sphi 0, %s25
      %s28 = sphi 0, %s26
      %s29 = sphi 0, %s27
      %s39 = sphi 0, %s41
      %s42 = sphi 0, %s39
      %s43 = sphi 0, %s42
      %s59 = sphi 0, %s43
      %s63 = sphi 0, %s63
      %s65 = sphi 0, %s63
      %s66 = sphi 0, %s65
      %s80 = sphi 0, %s66
      %s84 = sphi 0, %s84
      %s86 = sphi 0, %s84
      %s87 = sphi 0, %s86
      %s101 = sphi 0, %s87
      %s107 = sphi 0, %s109
      %s110 = sphi 0, %s107
      %s111 = sphi 0, %s110
      %s127 = sphi 0, %s111
      %s133 = sphi 0, %s135
      %s136 = sphi 0, %s133
      %s137 = sphi 0, %s136
      %s153 = sphi 0, %s137
      %s159 = sphi 0, %s161
      %s162 = sphi 0, %s159
      %s163 = sphi 0, %s162
      %s179 = sphi 0, %s163
      %s183 = sphi 0, %s183
      %s185 = sphi 0, %s183
      %s186 = sphi 0, %s185
      %s200 = sphi 0, %s186
      %s206 = sphi 0, %s208
      %s209 = sphi 0, %s206
      %s210 = sphi 0, %s209
      %s226 = sphi 0, %s210
    $region4: #{transformer_forward.7} parent=1 // loop_header_branch
      %20 = sbr.rel (%p18) target = $region8
    $region5: #{transformer_forward.7} parent=1 // loop_body
      %s22 = ssub.s32 %s17, 1
      %s23 = ssub.s32 %s17, 2
      %s30 = sadd.s32 1, %s25
      %p31 = scmp.ge.s32.totalorder %s30, 2
      %s32 = scalar_select %p31, 0, %s30
      %s33 = sadd.s32 1, %s24
      %s34 = scalar_select %p31, %s33, %s24
      %p35 = scmp.ge.s32.totalorder %s34, 1
      %s36 = scalar_select %p35, 0, %s34
      %s37 = ssub.s32 %s24, %s36
      %p38 = scmp.eq.s32.totalorder %s37, 0
      %s40 = sadd.s32 %s39, 1
      %s41 = scalar_select %p38, %s39, %s40
      %p44 = pneg %p38
      %p45 = scmp.eq.s32.totalorder %s17, 1
      %p46 = por %p44, %p45
      %p47 = scmp.ne.s32.totalorder %s39, %s42
      %p48 = scmp.eq.s32.totalorder %s17, 0
      %p49 = por %p47, %p48
      %p50 = scmp.ne.s32.totalorder %s39, %s42
      %p51 = scmp.eq.s32.totalorder %s22, 1
      %p52 = por %p50, %p51
      %p53 = scmp.ne.s32.totalorder %s42, %s43
      %p54 = scmp.eq.s32.totalorder %s22, 0
      %p55 = por %p53, %p54
      %p56 = scmp.ne.s32.totalorder %s42, %s43
      %p57 = scmp.eq.s32.totalorder %s23, 1
      %p58 = por %p56, %p57
      %p60 = scmp.ne.s32.totalorder %s43, %s59
      %p61 = scmp.eq.s32.totalorder %s23, 0
      %p62 = por %p60, %p61
      %s64 = sadd.s32 %s63, 1
      %p67 = scmp.eq.s32.totalorder %s17, 1
      %p68 = scmp.ne.s32.totalorder %s63, %s65
      %p69 = scmp.eq.s32.totalorder %s17, 0
      %p70 = por %p68, %p69
      %p71 = scmp.ne.s32.totalorder %s63, %s65
      %p72 = scmp.eq.s32.totalorder %s22, 1
      %p73 = por %p71, %p72
      %p74 = scmp.ne.s32.totalorder %s65, %s66
      %p75 = scmp.eq.s32.totalorder %s22, 0
      %p76 = por %p74, %p75
      %p77 = scmp.ne.s32.totalorder %s65, %s66
      %p78 = scmp.eq.s32.totalorder %s23, 1
      %p79 = por %p77, %p78
      %p81 = scmp.ne.s32.totalorder %s66, %s80
      %p82 = scmp.eq.s32.totalorder %s23, 0
      %p83 = por %p81, %p82
      %s85 = sadd.s32 %s84, 1
      %p88 = scmp.eq.s32.totalorder %s17, 1
      %p89 = scmp.ne.s32.totalorder %s84, %s86
      %p90 = scmp.eq.s32.totalorder %s17, 0
      %p91 = por %p89, %p90
      %p92 = scmp.ne.s32.totalorder %s84, %s86
      %p93 = scmp.eq.s32.totalorder %s22, 1
      %p94 = por %p92, %p93
      %p95 = scmp.ne.s32.totalorder %s86, %s87
      %p96 = scmp.eq.s32.totalorder %s22, 0
      %p97 = por %p95, %p96
      %p98 = scmp.ne.s32.totalorder %s86, %s87
      %p99 = scmp.eq.s32.totalorder %s23, 1
      %p100 = por %p98, %p99
      %p102 = scmp.ne.s32.totalorder %s87, %s101
      %p103 = scmp.eq.s32.totalorder %s23, 0
      %p104 = por %p102, %p103
      %s105 = ssub.s32 %s25, %s32
      %p106 = scmp.eq.s32.totalorder %s105, 0
      %s108 = sadd.s32 %s107, 1
      %s109 = scalar_select %p106, %s107, %s108
      %p112 = pneg %p106
      %p113 = scmp.eq.s32.totalorder %s17, 1
      %p114 = por %p112, %p113
      %p115 = scmp.ne.s32.totalorder %s107, %s110
      %p116 = scmp.eq.s32.totalorder %s17, 0
      %p117 = por %p115, %p116
      %p118 = scmp.ne.s32.totalorder %s107, %s110
      %p119 = scmp.eq.s32.totalorder %s22, 1
      %p120 = por %p118, %p119
      %p121 = scmp.ne.s32.totalorder %s110, %s111
      %p122 = scmp.eq.s32.totalorder %s22, 0
      %p123 = por %p121, %p122
      %p124 = scmp.ne.s32.totalorder %s110, %s111
      %p125 = scmp.eq.s32.totalorder %s23, 1
      %p126 = por %p124, %p125
      %p128 = scmp.ne.s32.totalorder %s111, %s127
      %p129 = scmp.eq.s32.totalorder %s23, 0
      %p130 = por %p128, %p129
      %s131 = ssub.s32 %s25, %s32
      %p132 = scmp.eq.s32.totalorder %s131, 0
      %s134 = sadd.s32 %s133, 1
      %s135 = scalar_select %p132, %s133, %s134
      %p138 = pneg %p132
      %p139 = scmp.eq.s32.totalorder %s17, 1
      %p140 = por %p138, %p139
      %p141 = scmp.ne.s32.totalorder %s133, %s136
      %p142 = scmp.eq.s32.totalorder %s17, 0
      %p143 = por %p141, %p142
      %p144 = scmp.ne.s32.totalorder %s133, %s136
      %p145 = scmp.eq.s32.totalorder %s22, 1
      %p146 = por %p144, %p145
      %p147 = scmp.ne.s32.totalorder %s136, %s137
      %p148 = scmp.eq.s32.totalorder %s22, 0
      %p149 = por %p147, %p148
      %p150 = scmp.ne.s32.totalorder %s136, %s137
      %p151 = scmp.eq.s32.totalorder %s23, 1
      %p152 = por %p150, %p151
      %p154 = scmp.ne.s32.totalorder %s137, %s153
      %p155 = scmp.eq.s32.totalorder %s23, 0
      %p156 = por %p154, %p155
      %s157 = ssub.s32 %s25, %s32
      %p158 = scmp.eq.s32.totalorder %s157, 0
      %s160 = sadd.s32 %s159, 1
      %s161 = scalar_select %p158, %s159, %s160
      %p164 = pneg %p158
      %p165 = scmp.eq.s32.totalorder %s17, 1
      %p166 = por %p164, %p165
      %p167 = scmp.ne.s32.totalorder %s159, %s162
      %p168 = scmp.eq.s32.totalorder %s17, 0
      %p169 = por %p167, %p168
      %p170 = scmp.ne.s32.totalorder %s159, %s162
      %p171 = scmp.eq.s32.totalorder %s22, 1
      %p172 = por %p170, %p171
      %p173 = scmp.ne.s32.totalorder %s162, %s163
      %p174 = scmp.eq.s32.totalorder %s22, 0
      %p175 = por %p173, %p174
      %p176 = scmp.ne.s32.totalorder %s162, %s163
      %p177 = scmp.eq.s32.totalorder %s23, 1
      %p178 = por %p176, %p177
      %p180 = scmp.ne.s32.totalorder %s163, %s179
      %p181 = scmp.eq.s32.totalorder %s23, 0
      %p182 = por %p180, %p181
      %s184 = sadd.s32 %s183, 1
      %p187 = scmp.eq.s32.totalorder %s17, 1
      %p188 = scmp.ne.s32.totalorder %s183, %s185
      %p189 = scmp.eq.s32.totalorder %s17, 0
      %p190 = por %p188, %p189
      %p191 = scmp.ne.s32.totalorder %s183, %s185
      %p192 = scmp.eq.s32.totalorder %s22, 1
      %p193 = por %p191, %p192
      %p194 = scmp.ne.s32.totalorder %s185, %s186
      %p195 = scmp.eq.s32.totalorder %s22, 0
      %p196 = por %p194, %p195
      %p197 = scmp.ne.s32.totalorder %s185, %s186
      %p198 = scmp.eq.s32.totalorder %s23, 1
      %p199 = por %p197, %p198
      %p201 = scmp.ne.s32.totalorder %s186, %s200
      %p202 = scmp.eq.s32.totalorder %s23, 0
      %p203 = por %p201, %p202
      %s204 = ssub.s32 %s24, %s36
      %p205 = scmp.eq.s32.totalorder %s204, 0
      %s207 = sadd.s32 %s206, 1
      %s208 = scalar_select %p205, %s206, %s207
      %p211 = pneg %p205
      %p212 = scmp.eq.s32.totalorder %s17, 1
      %p213 = por %p211, %p212
      %p214 = scmp.ne.s32.totalorder %s206, %s209
      %p215 = scmp.eq.s32.totalorder %s17, 0
      %p216 = por %p214, %p215
      %p217 = scmp.ne.s32.totalorder %s206, %s209
      %p218 = scmp.eq.s32.totalorder %s22, 1
      %p219 = por %p217, %p218
      %p220 = scmp.ne.s32.totalorder %s209, %s210
      %p221 = scmp.eq.s32.totalorder %s22, 0
      %p222 = por %p220, %p221
      %p223 = scmp.ne.s32.totalorder %s209, %s210
      %p224 = scmp.eq.s32.totalorder %s23, 1
      %p225 = por %p223, %p224
      %p227 = scmp.ne.s32.totalorder %s210, %s226
      %p228 = scmp.eq.s32.totalorder %s23, 0
      %p229 = por %p227, %p228
      %p230 = scmp.le.s32.totalorder 1, %s17
      %p231 = scmp.lt.s32.totalorder %s17, 3
      %p232 = pnand %p230, %p231
      %p233 = pneg %p232
      // Predicated region
      $region9: #{transformer_forward.7} parent=5 // pred_check
        _
      $region10: #{transformer_forward.7} parent=5 // pred_check_branch
        %235 = sbr.rel (%p232) target = $region12
      $region11: #{transformer_forward.7} parent=5 // pred_region
        %s236 = ssub.s32 %s17, 1
        // Predicated region
        $region13: #{transformer_forward.7} parent=11 // pred_check
          %p237 = pneg %p55
        $region14: #{transformer_forward.7} parent=11 // pred_check_branch
          %239 = sbr.rel (%p237) target = $region16
        $region15: #{transformer_forward.7} parent=11 // pred_region
          %s240 = smul.u32 4, %s26
          %p241 = scmp.lt.s32.totalorder %s240, 3
          %s242 = scalar_select %p241, %s240, 3
          %s243 = smul.addr %s242, 8
          %s244 = scalar_lea.vmem %s0, %s243
          %s245 = smul.u32 4, %s26
        $region16: #{transformer_forward.7} parent=11 // pred_fallthru
          _
        // Predicated region
        $region17: #{transformer_forward.7} parent=11 // pred_check
          %p246 = pneg %p76
        $region18: #{transformer_forward.7} parent=11 // pred_check_branch
          %248 = sbr.rel (%p246) target = $region20
        $region19: #{transformer_forward.7} parent=11 // pred_region
          _
        $region20: #{transformer_forward.7} parent=11 // pred_fallthru
          _
        // Predicated region
        $region21: #{transformer_forward.7} parent=11 // pred_check
          %p249 = pneg %p97
        $region22: #{transformer_forward.7} parent=11 // pred_check_branch
          %251 = sbr.rel (%p249) target = $region24
        $region23: #{transformer_forward.7} parent=11 // pred_region
          _
        $region24: #{transformer_forward.7} parent=11 // pred_fallthru
          _
        // Predicated region
        $region25: #{transformer_forward.7} parent=11 // pred_check
          %p252 = pneg %p196
        $region26: #{transformer_forward.7} parent=11 // pred_check_branch
          %254 = sbr.rel (%p252) target = $region28
        $region27: #{transformer_forward.7} parent=11 // pred_region
          _
        $region28: #{transformer_forward.7} parent=11 // pred_fallthru
          _
      $region12: #{transformer_forward.7} parent=5 // pred_fallthru
        _
      %p255 = scmp.lt.s32.totalorder %s17, 2
      // Predicated region
      $region29: #{transformer_forward.7} parent=5 // pred_check
        %p256 = pneg %p255
      $region30: #{transformer_forward.7} parent=5 // pred_check_branch
        %258 = sbr.rel (%p256) target = $region32
      $region31: #{transformer_forward.7} parent=5 // pred_region
        // Predicated region
        $region33: #{transformer_forward.7} parent=31 // pred_check
          %p259 = pneg %p117
        $region34: #{transformer_forward.7} parent=31 // pred_check_branch
          %261 = sbr.rel (%p259) target = $region36
        $region35: #{transformer_forward.7} parent=31 // pred_region
          %s262 = sand.u32 %s107, 1
          %s263 = sand.u32 %s107, 1
          %s264 = smul.addr %s263, 256
          %s265 = scalar_lea.vmem [#allocation4], %s264
          %s266 = smul.u32 2, %s25
          %s267 = smul.addr %s266, 8
          %s268 = scalar_lea.vmem %s3, %s267
          // Predicated region
          $region37: #{transformer_forward.7} parent=35 // pred_check
            _
          $region38: #{transformer_forward.7} parent=35 // pred_check_branch
            %270 = sbr.rel (0) target = $region40
          $region39: #{transformer_forward.7} parent=35 // pred_region
            // Predicated region
            $region41: #{transformer_forward.7} parent=39 // pred_check
              _
            $region42: #{transformer_forward.7} parent=39 // pred_check_branch
              %272 = sbr.rel (0) target = $region44
            $region43: #{transformer_forward.7} parent=39 // pred_region
              loop: start=0, step=1, limit=1
              $region45: #{transformer_forward.7} parent=43 // loop_pre_header
                _
              $region46: #{transformer_forward.7} parent=43 // loop_header
                %s274 = sphi 0, %s278
                %p275 = scmp.ge.s32.totalorder %s274, 1
                %s279 = sphi %s268, %s268
                %s280 = sphi %s265, %s265
              $region47: #{transformer_forward.7} parent=43 // loop_header_branch
                %277 = sbr.rel (%p275) target = $region51
              $region48: #{transformer_forward.7} parent=43 // loop_body
                %v281 = vld [vmem:[%s279] sm:$0xff]
                %282 = vst [vmem:[%s280] sm:$0xff] %v281
                %v283 = vld [vmem:[%s279 + $0x8] sm:$0xff]
                %284 = vst [vmem:[%s280 + $0x8] sm:$0xff] %v283
                %v285 = vld [vmem:[%s279 + $0x20] sm:$0xff]
                %286 = vst [vmem:[%s280 + $0x10] sm:$0xff] %v285
                %v287 = vld [vmem:[%s279 + $0x28] sm:$0xff]
                %288 = vst [vmem:[%s280 + $0x18] sm:$0xff] %v287
                %v289 = vld [vmem:[%s279 + $0x40] sm:$0xff]
                %290 = vst [vmem:[%s280 + $0x20] sm:$0xff] %v289
                %v291 = vld [vmem:[%s279 + $0x48] sm:$0xff]
                %292 = vst [vmem:[%s280 + $0x28] sm:$0xff] %v291
                %v293 = vld [vmem:[%s279 + $0x60] sm:$0xff]
                %294 = vst [vmem:[%s280 + $0x30] sm:$0xff] %v293
                %v295 = vld [vmem:[%s279 + $0x68] sm:$0xff]
                %296 = vst [vmem:[%s280 + $0x38] sm:$0xff] %v295
                %v297 = vld [vmem:[%s279 + $0x80] sm:$0xff]
                %298 = vst [vmem:[%s280 + $0x40] sm:$0xff] %v297
                %v299 = vld [vmem:[%s279 + $0x88] sm:$0xff]
                %300 = vst [vmem:[%s280 + $0x48] sm:$0xff] %v299
                %v301 = vld [vmem:[%s279 + $0xa0] sm:$0xff]
                %302 = vst [vmem:[%s280 + $0x50] sm:$0xff] %v301
                %v303 = vld [vmem:[%s279 + $0xa8] sm:$0xff]
                %304 = vst [vmem:[%s280 + $0x58] sm:$0xff] %v303
                %v305 = vld [vmem:[%s279 + $0xc0] sm:$0xff]
                %306 = vst [vmem:[%s280 + $0x60] sm:$0xff] %v305
                %v307 = vld [vmem:[%s279 + $0xc8] sm:$0xff]
                %308 = vst [vmem:[%s280 + $0x68] sm:$0xff] %v307
                %v309 = vld [vmem:[%s279 + $0xe0] sm:$0xff]
                %310 = vst [vmem:[%s280 + $0x70] sm:$0xff] %v309
                %v311 = vld [vmem:[%s279 + $0xe8] sm:$0xff]
                %312 = vst [vmem:[%s280 + $0x78] sm:$0xff] %v311
                %v313 = vld [vmem:[%s279 + $0x100] sm:$0xff]
                %314 = vst [vmem:[%s280 + $0x80] sm:$0xff] %v313
                %v315 = vld [vmem:[%s279 + $0x108] sm:$0xff]
                %316 = vst [vmem:[%s280 + $0x88] sm:$0xff] %v315
                %v317 = vld [vmem:[%s279 + $0x120] sm:$0xff]
                %318 = vst [vmem:[%s280 + $0x90] sm:$0xff] %v317
                %v319 = vld [vmem:[%s279 + $0x128] sm:$0xff]
                %320 = vst [vmem:[%s280 + $0x98] sm:$0xff] %v319
                %v321 = vld [vmem:[%s279 + $0x140] sm:$0xff]
                %322 = vst [vmem:[%s280 + $0xa0] sm:$0xff] %v321
                %v323 = vld [vmem:[%s279 + $0x148] sm:$0xff]
                %324 = vst [vmem:[%s280 + $0xa8] sm:$0xff] %v323
                %v325 = vld [vmem:[%s279 + $0x160] sm:$0xff]
                %326 = vst [vmem:[%s280 + $0xb0] sm:$0xff] %v325
                %v327 = vld [vmem:[%s279 + $0x168] sm:$0xff]
                %328 = vst [vmem:[%s280 + $0xb8] sm:$0xff] %v327
                %v329 = vld [vmem:[%s279 + $0x180] sm:$0xff]
                %330 = vst [vmem:[%s280 + $0xc0] sm:$0xff] %v329
                %v331 = vld [vmem:[%s279 + $0x188] sm:$0xff]
                %332 = vst [vmem:[%s280 + $0xc8] sm:$0xff] %v331
                %v333 = vld [vmem:[%s279 + $0x1a0] sm:$0xff]
                %334 = vst [vmem:[%s280 + $0xd0] sm:$0xff] %v333
                %v335 = vld [vmem:[%s279 + $0x1a8] sm:$0xff]
                %336 = vst [vmem:[%s280 + $0xd8] sm:$0xff] %v335
                %v337 = vld [vmem:[%s279 + $0x1c0] sm:$0xff]
                %338 = vst [vmem:[%s280 + $0xe0] sm:$0xff] %v337
                %v339 = vld [vmem:[%s279 + $0x1c8] sm:$0xff]
                %340 = vst [vmem:[%s280 + $0xe8] sm:$0xff] %v339
                %v341 = vld [vmem:[%s279 + $0x1e0] sm:$0xff]
                %342 = vst [vmem:[%s280 + $0xf0] sm:$0xff] %v341
                %v343 = vld [vmem:[%s279 + $0x1e8] sm:$0xff]
                %344 = vst [vmem:[%s280 + $0xf8] sm:$0xff] %v343
              $region49: #{transformer_forward.7} parent=43 // loop_footer
                %s278 = sadd.s32 1, %s274
              $region50: #{transformer_forward.7} parent=43 // loop_footer_branch
                %273 = sbr.rel target = $region46
              $region51: #{transformer_forward.7} parent=43 // loop_exit
                _
            $region44: #{transformer_forward.7} parent=39 // pred_fallthru
              _
            // Predicated region
            $region52: #{transformer_forward.7} parent=39 // pred_check
              _
            $region53: #{transformer_forward.7} parent=39 // pred_check_branch
              %346 = sbr.rel target = $region55
            $region54: #{transformer_forward.7} parent=39 // pred_region
              _
            $region55: #{transformer_forward.7} parent=39 // pred_fallthru
              _
          $region40: #{transformer_forward.7} parent=35 // pred_fallthru
            _
          %347 = vnop
        $region36: #{transformer_forward.7} parent=31 // pred_fallthru
          _
        // Predicated region
        $region56: #{transformer_forward.7} parent=31 // pred_check
          %p348 = pneg %p143
        $region57: #{transformer_forward.7} parent=31 // pred_check_branch
          %350 = sbr.rel (%p348) target = $region59
        $region58: #{transformer_forward.7} parent=31 // pred_region
          %s351 = smul.u32 2, %s25
          %p352 = scmp.lt.s32.totalorder %s351, 3
          %s353 = scalar_select %p352, %s351, 3
          %s354 = scalar_lea.vmem %s4, %s353
          %s355 = smul.u32 2, %s25
        $region59: #{transformer_forward.7} parent=31 // pred_fallthru
          _
        // Predicated region
        $region60: #{transformer_forward.7} parent=31 // pred_check
          %p356 = pneg %p169
        $region61: #{transformer_forward.7} parent=31 // pred_check_branch
          %358 = sbr.rel (%p356) target = $region63
        $region62: #{transformer_forward.7} parent=31 // pred_region
          %s359 = sand.u32 %s159, 1
          %s360 = scalar_lea.sflag [#allocation6], %s359
          %s361 = sand.u32 %s159, 1
          %s362 = smul.addr %s361, 256
          %s363 = scalar_lea.vmem [#allocation5], %s362
          %s364 = smul.u32 32, %s25
          %s366 = ssub.s32 4096, 4096
          %367 = vsyncadd %s360, %s366
          %s368 = smul.addr %s364, 128
          %s369 = scalar_lea.hbm %s5, %s368
          %s370 = sshll.u32 %s363, 4
          %s371 = int_to_ptr.vmem [resolvable:$true] %s370
          %376 = dma.hbm_to_vmem [thread:$0]  %s369, 4096, %s371, %s360, 128, 128, 8
        $region63: #{transformer_forward.7} parent=31 // pred_fallthru
          _
      $region32: #{transformer_forward.7} parent=5 // pred_fallthru
        _
      %p377 = scmp.le.s32.totalorder 1, %s17
      %p378 = scmp.lt.s32.totalorder %s17, 3
      %p379 = pnand %p377, %p378
      %p380 = pneg %p379
      // Predicated region
      $region64: #{transformer_forward.7} parent=5 // pred_check
        _
      $region65: #{transformer_forward.7} parent=5 // pred_check_branch
        %382 = sbr.rel (%p379) target = $region67
      $region66: #{transformer_forward.7} parent=5 // pred_region
        %s383 = ssub.s32 %s17, 1
        %s384 = sand.u32 %s110, 1
        %s385 = sand.u32 %s110, 1
        %s386 = smul.addr %s385, 256
        %s387 = scalar_lea.vmem [#allocation4], %s386
        // Predicated region
        $region68: #{transformer_forward.7} parent=66 // pred_check
          %p388 = pneg %p123
        $region69: #{transformer_forward.7} parent=66 // pred_check_branch
          %390 = sbr.rel (%p388) target = $region71
        $region70: #{transformer_forward.7} parent=66 // pred_region
          _
        $region71: #{transformer_forward.7} parent=66 // pred_fallthru
          _
        %s391 = sand.u32 %s162, 1
        %s392 = scalar_lea.sflag [#allocation6], %s391
        %s393 = sand.u32 %s162, 1
        %s394 = smul.addr %s393, 256
        %s395 = scalar_lea.vmem [#allocation5], %s394
        // Predicated region
        $region72: #{transformer_forward.7} parent=66 // pred_check
          %p396 = pneg %p175
        $region73: #{transformer_forward.7} parent=66 // pred_check_branch
          %398 = sbr.rel (%p396) target = $region75
        $region74: #{transformer_forward.7} parent=66 // pred_region
          %399 = dma.done %s392, 4096
        $region75: #{transformer_forward.7} parent=66 // pred_fallthru
          _
        %s400 = smul.u32 4, %s26
        %p401 = scmp.lt.s32.totalorder %s400, 3
        %s402 = scalar_select %p401, %s400, 3
        %s403 = smul.addr %s402, 8
        %s404 = scalar_lea.vmem %s0, %s403
        %p405 = pneg %p55
        %p406 = pneg %p52
        %p407 = pneg %p76
        %p408 = pneg %p73
        %p409 = pneg %p97
        %p410 = pneg %p94
        %s411 = sand.u32 %s110, 1
        %s412 = sand.u32 %s110, 1
        %s413 = smul.addr %s412, 256
        %s414 = scalar_lea.vmem [#allocation4], %s413
        %p415 = pneg %p123
        %p416 = pneg %p120
        %s417 = smul.u32 2, %s27
        %p418 = scmp.lt.s32.totalorder %s417, 3
        %s419 = scalar_select %p418, %s417, 3
        %s420 = scalar_lea.vmem %s4, %s419
        %p421 = pneg %p149
        %p422 = pneg %p146
        %s423 = sand.u32 %s162, 1
        %s424 = scalar_lea.sflag [#allocation6], %s423
        %s425 = sand.u32 %s162, 1
        %s426 = smul.addr %s425, 256
        %s427 = scalar_lea.vmem [#allocation5], %s426
        %p428 = pneg %p175
        %p429 = pneg %p172
        %p430 = pneg %p196
        %p431 = pneg %p193
        %p432 = pneg %p222
        %p433 = pneg %p219
        %s434 = smul.u32 4, %s26
        %p435 = scmp.lt.s32.totalorder %s434, 3
        %s436 = scalar_select %p435, %s434, 3
        %s437 = smul.addr %s436, 8
        %s438 = scalar_lea.vmem %s0, %s437
        %s439 = smul.u32 4, %s26
        %s440 = smul.u32 2, %s27
        %s441 = smul.u32 2, %s27
        %p442 = scmp.lt.s32.totalorder %s441, 3
        %s443 = scalar_select %p442, %s441, 3
        %s444 = scalar_lea.vmem %s4, %s443
        %s445 = smul.u32 2, %s27
        %s446 = smul.u32 32, %s27
        %s447 = smul.u32 4, %s26
        %p448 = scmp.eq.s32.totalorder %s27, 0
        // Predicated region
        $region76: #{transformer_forward.7} parent=66 // pred_check
          %p449 = pneg %p448
        $region77: #{transformer_forward.7} parent=66 // pred_check_branch
          %451 = sbr.rel (%p449) target = $region79
        $region78: #{transformer_forward.7} parent=66 // pred_region
          %v452 = vld [vmem:[%s438] sm:$0xff]
          %v453 = vld [vmem:[%s438 + $0x8] sm:$0xff]
          %v454 = vld [vmem:[%s438 + $0x10] sm:$0xff]
          %v455 = vld [vmem:[%s438 + $0x18] sm:$0xff]
          %v456 = vld [vmem:[%s1] sm:$0x1]
          %v457 = vld [vmem:[%s2] sm:$0x1]
          %458 = vadd.xlane.f32.xlu0 %v452
          %v459 = vpop.xlane.xlu0 %458
          %460 = vadd.xlane.f32.xlu0 %v453
          %v461 = vpop.xlane.xlu0 %460
          %462 = vadd.xlane.f32.xlu0 %v454
          %v463 = vpop.xlane.xlu0 %462
          %464 = vadd.xlane.f32.xlu0 %v455
          %v465 = vpop.xlane.xlu0 %464
          %v466 = vrcp.pop 128.0
          %v467 = vmul.f32 %v459, %v466
          %v468 = vmul.f32 %v461, %v466
          %v469 = vmul.f32 %v463, %v466
          %v470 = vmul.f32 %v465, %v466
          %v471 = vsub.f32 %v452, %v467
          %v472 = vsub.f32 %v453, %v468
          %v473 = vsub.f32 %v454, %v469
          %v474 = vsub.f32 %v455, %v470
          %v475 = vmul.f32 %v471, %v471
          %v476 = vmul.f32 %v472, %v472
          %v477 = vmul.f32 %v473, %v473
          %v478 = vmul.f32 %v474, %v474
          %479 = vadd.xlane.f32.xlu0 %v475
          %v480 = vpop.xlane.xlu0 %479
          %481 = vadd.xlane.f32.xlu0 %v476
          %v482 = vpop.xlane.xlu0 %481
          %483 = vadd.xlane.f32.xlu0 %v477
          %v484 = vpop.xlane.xlu0 %483
          %485 = vadd.xlane.f32.xlu0 %v478
          %v486 = vpop.xlane.xlu0 %485
          %v487 = vmul.f32 %v480, %v466
          %v488 = vmul.f32 %v482, %v466
          %v489 = vmul.f32 %v484, %v466
          %v490 = vmul.f32 %v486, %v466
          %v491 = vadd.f32 %v487, 1e-05
          %v492 = vadd.f32 %v488, 1e-05
          %v493 = vadd.f32 %v489, 1e-05
          %v494 = vadd.f32 %v490, 1e-05
          %v495 = vrsqrt.pop %v491
          %v496 = vrsqrt.pop %v492
          %v497 = vrsqrt.pop %v493
          %v498 = vrsqrt.pop %v494
          %v499 = vmul.f32 %v471, %v495
          %v500 = vmul.f32 %v472, %v496
          %v501 = vmul.f32 %v473, %v497
          %v502 = vmul.f32 %v474, %v498
          %v504 = vlaneseq
          %v505 = vshrl.u32 %v504, 7
          %v506 = vsub.s32 0, %v505
          %v507 = vrot.slane %v456, %v506
          %v509 = vmul.f32 %v499, %v507
          %v510 = vmul.f32 %v500, %v507
          %v511 = vmul.f32 %v501, %v507
          %v512 = vmul.f32 %v502, %v507
          %v514 = vlaneseq
          %v515 = vshrl.u32 %v514, 7
          %v516 = vsub.s32 0, %v515
          %v517 = vrot.slane %v457, %v516
          %v519 = vadd.f32 %v509, %v517
          %v520 = vadd.f32 %v510, %v517
          %v521 = vadd.f32 %v511, %v517
          %v522 = vadd.f32 %v512, %v517
          %523 = vst [vmem:[#allocation2] sm:$0xff] %v519
          %524 = vst [vmem:[#allocation2 + $0x8] sm:$0xff] %v520
          %525 = vst [vmem:[#allocation2 + $0x10] sm:$0xff] %v521
          %526 = vst [vmem:[#allocation2 + $0x18] sm:$0xff] %v522
          %527 = vst [vmem:[#allocation3] sm:$0xff] 0.0
          %528 = vst [vmem:[#allocation3 + $0x8] sm:$0xff] 0.0
          %529 = vst [vmem:[#allocation3 + $0x10] sm:$0xff] 0.0
          %530 = vst [vmem:[#allocation3 + $0x18] sm:$0xff] 0.0
        $region79: #{transformer_forward.7} parent=66 // pred_fallthru
          _
        %v531 = vld [vmem:[#allocation2] sm:$0xff]
        %v532 = vld [vmem:[#allocation2 + $0x8] sm:$0xff]
        %v533 = vld [vmem:[#allocation2 + $0x10] sm:$0xff]
        %v534 = vld [vmem:[#allocation2 + $0x18] sm:$0xff]
        %v535 = vld [vmem:[%s387] sm:$0xff]
        %v536 = vld [vmem:[%s387 + $0x8] sm:$0xff]
        %v537 = vld [vmem:[%s387 + $0x10] sm:$0xff]
        %v538 = vld [vmem:[%s387 + $0x18] sm:$0xff]
        %v539 = vld [vmem:[%s387 + $0x20] sm:$0xff]
        %v540 = vld [vmem:[%s387 + $0x28] sm:$0xff]
        %v541 = vld [vmem:[%s387 + $0x30] sm:$0xff]
        %v542 = vld [vmem:[%s387 + $0x38] sm:$0xff]
        %v543 = vld [vmem:[%s387 + $0x40] sm:$0xff]
        %v544 = vld [vmem:[%s387 + $0x48] sm:$0xff]
        %v545 = vld [vmem:[%s387 + $0x50] sm:$0xff]
        %v546 = vld [vmem:[%s387 + $0x58] sm:$0xff]
        %v547 = vld [vmem:[%s387 + $0x60] sm:$0xff]
        %v548 = vld [vmem:[%s387 + $0x68] sm:$0xff]
        %v549 = vld [vmem:[%s387 + $0x70] sm:$0xff]
        %v550 = vld [vmem:[%s387 + $0x78] sm:$0xff]
        %v551 = vld [vmem:[%s387 + $0x80] sm:$0xff]
        %v552 = vld [vmem:[%s387 + $0x88] sm:$0xff]
        %v553 = vld [vmem:[%s387 + $0x90] sm:$0xff]
        %v554 = vld [vmem:[%s387 + $0x98] sm:$0xff]
        %v555 = vld [vmem:[%s387 + $0xa0] sm:$0xff]
        %v556 = vld [vmem:[%s387 + $0xa8] sm:$0xff]
        %v557 = vld [vmem:[%s387 + $0xb0] sm:$0xff]
        %v558 = vld [vmem:[%s387 + $0xb8] sm:$0xff]
        %v559 = vld [vmem:[%s387 + $0xc0] sm:$0xff]
        %v560 = vld [vmem:[%s387 + $0xc8] sm:$0xff]
        %v561 = vld [vmem:[%s387 + $0xd0] sm:$0xff]
        %v562 = vld [vmem:[%s387 + $0xd8] sm:$0xff]
        %v563 = vld [vmem:[%s387 + $0xe0] sm:$0xff]
        %v564 = vld [vmem:[%s387 + $0xe8] sm:$0xff]
        %v565 = vld [vmem:[%s387 + $0xf0] sm:$0xff]
        %v566 = vld [vmem:[%s387 + $0xf8] sm:$0xff]
        %v567 = vld [vmem:[%s444] sm:$0x3]
        %v569 = vlaneseq
        %v570 = vshrl.u32 %v569, 7
        %v571 = vsub.s32 0, %v570
        %v572 = vrot.slane %v567, %v571
        %v573 = vlaneseq
        %v574 = vshrl.u32 %v573, 7
        %v575 = vsub.s32 1, %v574
        %v576 = vrot.slane %v567, %v575
        %579 = vmatprep.subr.mxu0 %v536
        %580 = vmatpush1.msra.mxu0 %v535
        %581 = vmatprep.subr.mxu0 %v538
        %582 = vmatpush1.msra.mxu0 %v537
        %583 = vmatprep.subr.mxu0 %v540
        %584 = vmatpush1.msra.mxu0 %v539
        %585 = vmatprep.subr.mxu0 %v542
        %586 = vmatpush1.msra.mxu0 %v541
        %587 = vmatprep.subr.mxu0 %v544
        %588 = vmatpush1.msra.mxu0 %v543
        %589 = vmatprep.subr.mxu0 %v546
        %590 = vmatpush1.msra.mxu0 %v545
        %591 = vmatprep.subr.mxu0 %v548
        %592 = vmatpush1.msra.mxu0 %v547
        %593 = vmatprep.subr.mxu0 %v550
        %594 = vmatpush1.msra.mxu0 %v549
        %595 = vmatprep.subr.mxu0 %v552
        %596 = vmatpush1.msra.mxu0 %v551
        %597 = vmatprep.subr.mxu0 %v554
        %598 = vmatpush1.msra.mxu0 %v553
        %599 = vmatprep.subr.mxu0 %v556
        %600 = vmatpush1.msra.mxu0 %v555
        %601 = vmatprep.subr.mxu0 %v558
        %602 = vmatpush1.msra.mxu0 %v557
        %603 = vmatprep.subr.mxu0 %v560
        %604 = vmatpush1.msra.mxu0 %v559
        %605 = vmatprep.subr.mxu0 %v562
        %606 = vmatpush1.msra.mxu0 %v561
        %607 = vmatprep.subr.mxu0 %v564
        %608 = vmatpush1.msra.mxu0 %v563
        %609 = vmatprep.subr.mxu0 %v566
        %610 = vmatpush1.msra.mxu0 %v565
        %611 = vmatprep.subr.mxu0 0.0
        %612 = vmatpush1.msra.mxu0 0.0
        %613 = vmatprep.subr.mxu0 0.0
        %614 = vmatpush1.msra.mxu0 0.0
        %615 = vmatprep.subr.mxu0 0.0
        %616 = vmatpush1.msra.mxu0 0.0
        %617 = vmatprep.subr.mxu0 0.0
        %618 = vmatpush1.msra.mxu0 0.0
        %619 = vmatprep.subr.mxu0 0.0
        %620 = vmatpush1.msra.mxu0 0.0
        %621 = vmatprep.subr.mxu0 0.0
        %622 = vmatpush1.msra.mxu0 0.0
        %623 = vmatprep.subr.mxu0 0.0
        %624 = vmatpush1.msra.mxu0 0.0
        %625 = vmatprep.subr.mxu0 0.0
        %626 = vmatpush1.msra.mxu0 0.0
        %627 = vmatprep.subr.mxu0 0.0
        %628 = vmatpush1.msra.mxu0 0.0
        %629 = vmatprep.subr.mxu0 0.0
        %630 = vmatpush1.msra.mxu0 0.0
        %631 = vmatprep.subr.mxu0 0.0
        %632 = vmatpush1.msra.mxu0 0.0
        %633 = vmatprep.subr.mxu0 0.0
        %634 = vmatpush1.msra.mxu0 0.0
        %635 = vmatprep.subr.mxu0 0.0
        %636 = vmatpush1.msra.mxu0 0.0
        %637 = vmatprep.subr.mxu0 0.0
        %638 = vmatpush1.msra.mxu0 0.0
        %639 = vmatprep.subr.mxu0 0.0
        %640 = vmatpush1.msra.mxu0 0.0
        %641 = vmatprep.subr.mxu0 0.0
        %642 = vmatpush1.msra.mxu0 0.0
        %643 = vmatprep.mubr.f32.mxu0 0.0
        %644 = vmatmul.mubr.f32.gmra.mrb[0].mxu0 %v531
        %v645 = vpop.f32.mrb[0].mxu0
        %v646 = vadd.f32 %v572, %v645
        %v647 = vpop.f32.mrb[0].mxu0
        %v648 = vadd.f32 %v576, %v647
        %649 = vmatprep.mubr.f32.mxu0 0.0
        %650 = vmatmul.mubr.f32.gmra.mrb[0].mxu0 %v532
        %v651 = vpop.f32.mrb[0].mxu0
        %v652 = vadd.f32 %v572, %v651
        %v653 = vpop.f32.mrb[0].mxu0
        %v654 = vadd.f32 %v576, %v653
        %655 = vmatprep.mubr.f32.mxu0 0.0
        %656 = vmatmul.mubr.f32.gmra.mrb[0].mxu0 %v533
        %v657 = vpop.f32.mrb[0].mxu0
        %v658 = vadd.f32 %v572, %v657
        %v659 = vpop.f32.mrb[0].mxu0
        %v660 = vadd.f32 %v576, %v659
        %661 = vmatprep.mubr.f32.mxu0 0.0
        %662 = vmatmul.mubr.f32.gmra.mrb[0].mxu0 %v534
        %v663 = vpop.f32.mrb[0].mxu0
        %v664 = vadd.f32 %v572, %v663
        %v665 = vpop.f32.mrb[0].mxu0
        %v666 = vadd.f32 %v576, %v665
        %667 = vdwg.mxu0
        %v668 = vmul.f32 %v646, 0.5
        %v669 = vmul.f32 %v648, 0.5
        %v670 = vmul.f32 %v652, 0.5
        %v671 = vmul.f32 %v654, 0.5
        %v672 = vmul.f32 %v658, 0.5
        %v673 = vmul.f32 %v660, 0.5
        %v674 = vmul.f32 %v664, 0.5
        %v675 = vmul.f32 %v666, 0.5
        %v676 = vmul.f32 %v646, 0.70710677
        %v677 = vmul.f32 %v648, 0.70710677
        %v678 = vmul.f32 %v652, 0.70710677
        %v679 = vmul.f32 %v654, 0.70710677
        %v680 = vmul.f32 %v658, 0.70710677
        %v681 = vmul.f32 %v660, 0.70710677
        %v682 = vmul.f32 %v664, 0.70710677
        %v683 = vmul.f32 %v666, 0.70710677
        %v684 = verf.f32.pop %v676
        %v685 = verf.f32.pop %v677
        %v686 = verf.f32.pop %v678
        %v687 = verf.f32.pop %v679
        %v688 = verf.f32.pop %v680
        %v689 = verf.f32.pop %v681
        %v690 = verf.f32.pop %v682
        %v691 = verf.f32.pop %v683
        %v692 = vadd.f32 %v684, 1.0
        %v693 = vadd.f32 %v685, 1.0
        %v694 = vadd.f32 %v686, 1.0
        %v695 = vadd.f32 %v687, 1.0
        %v696 = vadd.f32 %v688, 1.0
        %v697 = vadd.f32 %v689, 1.0
        %v698 = vadd.f32 %v690, 1.0
        %v699 = vadd.f32 %v691, 1.0
        %v700 = vmul.f32 %v668, %v692
        %v701 = vmul.f32 %v669, %v693
        %v702 = vmul.f32 %v670, %v694
        %v703 = vmul.f32 %v671, %v695
        %v704 = vmul.f32 %v672, %v696
        %v705 = vmul.f32 %v673, %v697
        %v706 = vmul.f32 %v674, %v698
        %v707 = vmul.f32 %v675, %v699
        %v708 = vld [vmem:[#allocation3] sm:$0xff]
        %v709 = vld [vmem:[#allocation3 + $0x8] sm:$0xff]
        %v710 = vld [vmem:[#allocation3 + $0x10] sm:$0xff]
        %v711 = vld [vmem:[#allocation3 + $0x18] sm:$0xff]
        %v712 = vld [vmem:[%s395] sm:$0xff]
        %v713 = vld [vmem:[%s395 + $0x8] sm:$0xff]
        %v714 = vld [vmem:[%s395 + $0x10] sm:$0xff]
        %v715 = vld [vmem:[%s395 + $0x18] sm:$0xff]
        %v716 = vld [vmem:[%s395 + $0x20] sm:$0xff]
        %v717 = vld [vmem:[%s395 + $0x28] sm:$0xff]
        %v718 = vld [vmem:[%s395 + $0x30] sm:$0xff]
        %v719 = vld [vmem:[%s395 + $0x38] sm:$0xff]
        %v720 = vld [vmem:[%s395 + $0x40] sm:$0xff]
        %v721 = vld [vmem:[%s395 + $0x48] sm:$0xff]
        %v722 = vld [vmem:[%s395 + $0x50] sm:$0xff]
        %v723 = vld [vmem:[%s395 + $0x58] sm:$0xff]
        %v724 = vld [vmem:[%s395 + $0x60] sm:$0xff]
        %v725 = vld [vmem:[%s395 + $0x68] sm:$0xff]
        %v726 = vld [vmem:[%s395 + $0x70] sm:$0xff]
        %v727 = vld [vmem:[%s395 + $0x78] sm:$0xff]
        %v728 = vld [vmem:[%s395 + $0x80] sm:$0xff]
        %v729 = vld [vmem:[%s395 + $0x88] sm:$0xff]
        %v730 = vld [vmem:[%s395 + $0x90] sm:$0xff]
        %v731 = vld [vmem:[%s395 + $0x98] sm:$0xff]
        %v732 = vld [vmem:[%s395 + $0xa0] sm:$0xff]
        %v733 = vld [vmem:[%s395 + $0xa8] sm:$0xff]
        %v734 = vld [vmem:[%s395 + $0xb0] sm:$0xff]
        %v735 = vld [vmem:[%s395 + $0xb8] sm:$0xff]
        %v736 = vld [vmem:[%s395 + $0xc0] sm:$0xff]
        %v737 = vld [vmem:[%s395 + $0xc8] sm:$0xff]
        %v738 = vld [vmem:[%s395 + $0xd0] sm:$0xff]
        %v739 = vld [vmem:[%s395 + $0xd8] sm:$0xff]
        %v740 = vld [vmem:[%s395 + $0xe0] sm:$0xff]
        %v741 = vld [vmem:[%s395 + $0xe8] sm:$0xff]
        %v742 = vld [vmem:[%s395 + $0xf0] sm:$0xff]
        %v743 = vld [vmem:[%s395 + $0xf8] sm:$0xff]
        %744 = vmatprep.subr.mxu0 0.0
        %745 = vmatpush1.msra.mxu0 %v712
        %746 = vmatprep.subr.mxu0 0.0
        %747 = vmatpush1.msra.mxu0 %v713
        %748 = vmatprep.subr.mxu0 0.0
        %749 = vmatpush1.msra.mxu0 %v714
        %750 = vmatprep.subr.mxu0 0.0
        %751 = vmatpush1.msra.mxu0 %v715
        %752 = vmatprep.subr.mxu0 0.0
        %753 = vmatpush1.msra.mxu0 %v716
        %754 = vmatprep.subr.mxu0 0.0
        %755 = vmatpush1.msra.mxu0 %v717
        %756 = vmatprep.subr.mxu0 0.0
        %757 = vmatpush1.msra.mxu0 %v718
        %758 = vmatprep.subr.mxu0 0.0
        %759 = vmatpush1.msra.mxu0 %v719
        %760 = vmatprep.subr.mxu0 0.0
        %761 = vmatpush1.msra.mxu0 %v720
        %762 = vmatprep.subr.mxu0 0.0
        %763 = vmatpush1.msra.mxu0 %v721
        %764 = vmatprep.subr.mxu0 0.0
        %765 = vmatpush1.msra.mxu0 %v722
        %766 = vmatprep.subr.mxu0 0.0
        %767 = vmatpush1.msra.mxu0 %v723
        %768 = vmatprep.subr.mxu0 0.0
        %769 = vmatpush1.msra.mxu0 %v724
        %770 = vmatprep.subr.mxu0 0.0
        %771 = vmatpush1.msra.mxu0 %v725
        %772 = vmatprep.subr.mxu0 0.0
        %773 = vmatpush1.msra.mxu0 %v726
        %774 = vmatprep.subr.mxu0 0.0
        %775 = vmatpush1.msra.mxu0 %v727
        %776 = vmatprep.subr.mxu0 0.0
        %777 = vmatpush1.msra.mxu0 %v728
        %778 = vmatprep.subr.mxu0 0.0
        %779 = vmatpush1.msra.mxu0 %v729
        %780 = vmatprep.subr.mxu0 0.0
        %781 = vmatpush1.msra.mxu0 %v730
        %782 = vmatprep.subr.mxu0 0.0
        %783 = vmatpush1.msra.mxu0 %v731
        %784 = vmatprep.subr.mxu0 0.0
        %785 = vmatpush1.msra.mxu0 %v732
        %786 = vmatprep.subr.mxu0 0.0
        %787 = vmatpush1.msra.mxu0 %v733
        %788 = vmatprep.subr.mxu0 0.0
        %789 = vmatpush1.msra.mxu0 %v734
        %790 = vmatprep.subr.mxu0 0.0
        %791 = vmatpush1.msra.mxu0 %v735
        %792 = vmatprep.subr.mxu0 0.0
        %793 = vmatpush1.msra.mxu0 %v736
        %794 = vmatprep.subr.mxu0 0.0
        %795 = vmatpush1.msra.mxu0 %v737
        %796 = vmatprep.subr.mxu0 0.0
        %797 = vmatpush1.msra.mxu0 %v738
        %798 = vmatprep.subr.mxu0 0.0
        %799 = vmatpush1.msra.mxu0 %v739
        %800 = vmatprep.subr.mxu0 0.0
        %801 = vmatpush1.msra.mxu0 %v740
        %802 = vmatprep.subr.mxu0 0.0
        %803 = vmatpush1.msra.mxu0 %v741
        %804 = vmatprep.subr.mxu0 0.0
        %805 = vmatpush1.msra.mxu0 %v742
        %806 = vmatprep.subr.mxu0 0.0
        %807 = vmatpush1.msra.mxu0 %v743
        %808 = vmatprep.mubr.f32.mxu0 %v701
        %809 = vmatmul.mubr.f32.gmra.mrb[0].mxu0 %v700
        %v810 = vpop.f32.mrb[0].mxu0
        %v811 = vadd.f32 0.0, %v810
        %v812 = vpop.f32.mrb[0].mxu0
        %813 = vmatprep.mubr.f32.mxu0 %v703
        %814 = vmatmul.mubr.f32.gmra.mrb[0].mxu0 %v702
        %v815 = vpop.f32.mrb[0].mxu0
        %v816 = vadd.f32 0.0, %v815
        %v817 = vpop.f32.mrb[0].mxu0
        %818 = vmatprep.mubr.f32.mxu0 %v705
        %819 = vmatmul.mubr.f32.gmra.mrb[0].mxu0 %v704
        %v820 = vpop.f32.mrb[0].mxu0
        %v821 = vadd.f32 0.0, %v820
        %v822 = vpop.f32.mrb[0].mxu0
        %823 = vmatprep.mubr.f32.mxu0 %v707
        %824 = vmatmul.mubr.f32.gmra.mrb[0].mxu0 %v706
        %v825 = vpop.f32.mrb[0].mxu0
        %v826 = vadd.f32 0.0, %v825
        %v827 = vpop.f32.mrb[0].mxu0
        %828 = vdwg.mxu0
        %v829 = vadd.f32 %v708, %v811
        %v830 = vadd.f32 %v709, %v816
        %v831 = vadd.f32 %v710, %v821
        %v832 = vadd.f32 %v711, %v826
        %833 = vst [vmem:[#allocation3] sm:$0xff] %v829
        %834 = vst [vmem:[#allocation3 + $0x8] sm:$0xff] %v830
        %835 = vst [vmem:[#allocation3 + $0x10] sm:$0xff] %v831
        %836 = vst [vmem:[#allocation3 + $0x18] sm:$0xff] %v832
        %p837 = scmp.eq.s32.totalorder %s27, 1
        // Predicated region
        $region80: #{transformer_forward.7} parent=66 // pred_check
          %p838 = pneg %p837
        $region81: #{transformer_forward.7} parent=66 // pred_check_branch
          %840 = sbr.rel (%p838) target = $region83
        $region82: #{transformer_forward.7} parent=66 // pred_region
          %v841 = vld [vmem:[#allocation3] sm:$0xff]
          %v842 = vld [vmem:[#allocation3 + $0x8] sm:$0xff]
          %v843 = vld [vmem:[#allocation3 + $0x10] sm:$0xff]
          %v844 = vld [vmem:[#allocation3 + $0x18] sm:$0xff]
          %v845 = vld [vmem:[%s6] sm:$0x1]
          %v847 = vlaneseq
          %v848 = vshrl.u32 %v847, 7
          %v849 = vsub.s32 0, %v848
          %v850 = vrot.slane %v845, %v849
          %v852 = vadd.f32 %v841, %v850
          %v853 = vadd.f32 %v842, %v850
          %v854 = vadd.f32 %v843, %v850
          %v855 = vadd.f32 %v844, %v850
          %v856 = vld [vmem:[%s438] sm:$0xff]
          %v857 = vld [vmem:[%s438 + $0x8] sm:$0xff]
          %v858 = vld [vmem:[%s438 + $0x10] sm:$0xff]
          %v859 = vld [vmem:[%s438 + $0x18] sm:$0xff]
          %v860 = vadd.f32 %v852, %v856
          %v861 = vadd.f32 %v853, %v857
          %v862 = vadd.f32 %v854, %v858
          %v863 = vadd.f32 %v855, %v859
          %864 = vst [vmem:[#allocation8] sm:$0xff] %v860
          %865 = vst [vmem:[#allocation8 + $0x8] sm:$0xff] %v861
          %866 = vst [vmem:[#allocation8 + $0x10] sm:$0xff] %v862
          %867 = vst [vmem:[#allocation8 + $0x18] sm:$0xff] %v863
        $region83: #{transformer_forward.7} parent=66 // pred_fallthru
          _
        // Predicated region
        $region84: #{transformer_forward.7} parent=66 // pred_check
          %p868 = pneg %p219
        $region85: #{transformer_forward.7} parent=66 // pred_check_branch
          %870 = sbr.rel (%p868) target = $region87
        $region86: #{transformer_forward.7} parent=66 // pred_region
          %s871 = smul.u32 4, %s26
          %s873 = ssub.s32 512, 512
          %874 = vsyncadd [#allocation7], %s873
          %s875 = smul.addr %s871, 128
          %s876 = scalar_lea.hbm %s7, %s875
          %s877 = sshll.u32 [#allocation8], 4
          %s878 = int_to_ptr.vmem [resolvable:$true] %s877
          %883 = dma.vmem_to_hbm [thread:$0]  %s878, 512, %s876, [#allocation7], 128, 128, 8
        $region87: #{transformer_forward.7} parent=66 // pred_fallthru
          _
        // Predicated region
        $region88: #{transformer_forward.7} parent=66 // pred_check
          %p884 = pneg %p219
        $region89: #{transformer_forward.7} parent=66 // pred_check_branch
          %886 = sbr.rel (%p884) target = $region91
        $region90: #{transformer_forward.7} parent=66 // pred_region
          %887 = dma.done [#allocation7], 512
        $region91: #{transformer_forward.7} parent=66 // pred_fallthru
          _
      $region67: #{transformer_forward.7} parent=5 // pred_fallthru
        _
      %p888 = scmp.le.s32.totalorder 2, %s17
      // Predicated region
      $region92: #{transformer_forward.7} parent=5 // pred_check
        %p889 = pneg %p888
      $region93: #{transformer_forward.7} parent=5 // pred_check_branch
        %891 = sbr.rel (%p889) target = $region95
      $region94: #{transformer_forward.7} parent=5 // pred_region
        %s892 = ssub.s32 %s17, 2
      $region95: #{transformer_forward.7} parent=5 // pred_fallthru
        _
    $region6: #{transformer_forward.7} parent=1 // loop_footer
      %s21 = sadd.s32 1, %s17
    $region7: #{transformer_forward.7} parent=1 // loop_footer_branch
      %16 = sbr.rel target = $region3
    $region8: #{transformer_forward.7} parent=1 // loop_exit
      _
    %893 = vsyncpa [#allocation6], 1
    %s894 = scalar_lea.sflag [#allocation6], 1
    %895 = vsyncpa %s894, 1
    %896 = vsyncpa [#allocation7], 1
    %s897 = scalar_lea.sflag [#allocation7], 1
    %898 = vsyncpa %s897, 1

</llo_original>
